<compile_context>
chip_gen: v7x
topology: tpu7x:2x2x1
jax: 0.10.0
libtpu: 0.0.40
codegen_flags: <defaults>
</compile_context>

<pallas_src>
import functools

import jax
import jax.numpy as jnp
from jax import lax
from jax.experimental import pallas as pl
from jax.experimental.pallas import tpu as pltpu


def _vq_kernel(z_ref, cbt_ref, e2_ref, cb_ref, zq_ref, idx_ref, sse_ref,
               *, n_valid):
    # z_ref  : (TN, D)     tile of flattened latents
    # cbt_ref: (D, Kp)     pre-transposed zero-padded codebook (resident)
    # e2_ref : (1, Kp)     ||e_k||^2, padded entries = f32 max (resident)
    # cb_ref : (Kp, D)     zero-padded codebook (resident)
    # zq_ref : (TN, D)     quantized output tile
    # idx_ref: (1, 1, TN)  lane-dense int32 code indices for this tile
    # sse_ref: (1, 1, 128) per-tile partial sum of squared error (broadcast)
    z = z_ref[...].astype(jnp.float32)                      # (TN, D)
    cbt = cbt_ref[...]                                      # (D, Kp)
    e2 = e2_ref[...]                                        # (1, Kp)
    cb = cb_ref[...]                                        # (Kp, D)
    tn = z.shape[0]
    kp = cbt.shape[1]

    # argmin_k ||z - e_k||^2 == argmin_k (||e_k||^2 - 2 z.e_k); the row-constant
    # ||z||^2 term is dropped (argmin-invariant).
    cross = jnp.dot(z, cbt, preferred_element_type=jnp.float32)     # (TN, Kp)
    d2 = e2 - 2.0 * cross                                           # (TN, Kp)

    # First-occurrence argmin along the codebook axis (matches torch argmin).
    min_d = jnp.min(d2, axis=-1, keepdims=True)                     # (TN, 1)
    iota = lax.broadcasted_iota(jnp.int32, d2.shape, 1)             # (TN, Kp)
    idx_col = jnp.min(jnp.where(d2 <= min_d, iota, kp),
                      axis=-1, keepdims=True)                       # (TN, 1)

    # Codebook gather via one-hot matmul (MXU-friendly; padded rows are zero).
    enc = (iota == idx_col).astype(jnp.float32)                     # (TN, Kp)
    z_q = jnp.dot(enc, cb, preferred_element_type=jnp.float32)      # (TN, D)
    zq_ref[...] = z_q.astype(zq_ref.dtype)

    # Lane-dense index row: idx[n] = sum_k k * enc[n, k], produced directly in
    # (1, TN) orientation via one small MXU contraction (no XLU transpose, no
    # masked (TN,1) column store).  Exact since enc is one-hot and k < 256.
    iota_row = lax.broadcasted_iota(jnp.int32, (1, kp), 1).astype(jnp.float32)
    idx_row = lax.dot_general(iota_row, enc, (((1,), (1,)), ((), ())),
                              preferred_element_type=jnp.float32)   # (1, TN)
    idx_ref[...] = (idx_row + 0.5).reshape(1, 1, tn).astype(jnp.int32)

    # Per-tile partial SSE (padded rows masked out).  Emitting per-tile
    # partials keeps the grid axis free of carried state -> "parallel".
    rows = (lax.broadcasted_iota(jnp.int32, (tn, z.shape[1]), 0)
            + pl.program_id(0) * tn)
    err = jnp.where(rows < n_valid, z_q - z, 0.0)
    sse_ref[...] = jnp.broadcast_to(jnp.sum(err * err), sse_ref.shape)


def vq_ema_forward(z, codebook, tile_n=1024):
    """Eval-mode forward of VectorQuantizerEMA.

    Returns (z_q, idxs, diff) matching the PyTorch module's forward values:
      z_q  : quantized latents, same shape as z (straight-through value)
      idxs : int32 code indices, shape z.shape[:-1]
      diff : scalar = 2 * mean((z_q - z)**2)
    """
    K, D = codebook.shape
    orig_shape = z.shape
    assert orig_shape[-1] == D
    flat_z = z.reshape(-1, D)
    N = flat_z.shape[0]

    # Effective tile: multiple of 8, no larger than the 8-rounded N; pad N up
    # to a tile multiple (padded rows are masked out of the SSE in-kernel).
    tn = min(int(tile_n), ((N + 7) // 8) * 8)
    tn = max(8, (tn // 8) * 8)
    n_tiles = pl.cdiv(N, tn)
    n_pad = n_tiles * tn
    if n_pad != N:
        flat_z = jnp.pad(flat_z, ((0, n_pad - N), (0, 0)))

    # Codebook-side precompute, hoisted out of the grid loop.  Pad K up to a
    # lane-dense Kp (>=128, multiple of 128); padded rows are zero and their
    # ||e||^2 is f32 max so they never win the argmin.
    kp = max(128, ((K + 127) // 128) * 128)
    cb32 = codebook.astype(jnp.float32)
    cb_pad = jnp.zeros((kp, D), jnp.float32).at[:K, :].set(cb32)
    e2 = jnp.full((1, kp), jnp.finfo(jnp.float32).max, jnp.float32)
    e2 = e2.at[0, :K].set(jnp.sum(cb32 * cb32, axis=-1))
    cb_t = cb_pad.T                                         # (D, Kp)

    kernel = functools.partial(_vq_kernel, n_valid=N)

    zq_flat, idx_rows, sse_rows = pl.pallas_call(
        kernel,
        out_shape=(
            jax.ShapeDtypeStruct((n_pad, D), z.dtype),
            jax.ShapeDtypeStruct((n_tiles, 1, tn), jnp.int32),
            jax.ShapeDtypeStruct((n_tiles, 1, 128), jnp.float32),
        ),
        grid_spec=pltpu.PrefetchScalarGridSpec(
            num_scalar_prefetch=0,
            grid=(n_tiles,),
            in_specs=[
                pl.BlockSpec((tn, D), lambda i: (i, 0)),      # z tile
                pl.BlockSpec((D, kp), lambda i: (0, 0)),      # codebook^T (resident)
                pl.BlockSpec((1, kp), lambda i: (0, 0)),      # ||e||^2    (resident)
                pl.BlockSpec((kp, D), lambda i: (0, 0)),      # codebook   (resident)
            ],
            out_specs=[
                pl.BlockSpec((tn, D), lambda i: (i, 0)),      # z_q tile
                pl.BlockSpec((1, 1, tn), lambda i: (i, 0, 0)),   # idx row (lane-dense)
                pl.BlockSpec((1, 1, 128), lambda i: (i, 0, 0)),  # sse partial
            ],
        ),
        compiler_params=pltpu.CompilerParams(
            dimension_semantics=("parallel",)),
    )(flat_z, cb_t, e2, cb_pad)

    # diff = mean((z_q.detach()-z)^2) + mean((z_q-z.detach())^2) = 2*mean((z_q-z)^2)
    sse = jnp.sum(sse_rows[:, 0, 0])
    diff = 2.0 * sse / jnp.float32(N * D)
    z_q = zq_flat[:N].reshape(orig_shape)
    idxs = idx_rows.reshape(-1)[:N].reshape(orig_shape[:-1])
    return z_q, idxs, diff


def _reference_forward(z, codebook):
    D = codebook.shape[1]
    flat_z = z.reshape(-1, D)
    d = jnp.sum((flat_z[:, None, :] - codebook[None, :, :]) ** 2, axis=-1)
    idx = jnp.argmin(d, axis=-1).astype(jnp.int32)
    z_q = codebook[idx].reshape(z.shape)
    diff = 2.0 * jnp.mean((z_q - z) ** 2)
    return z_q, idx.reshape(z.shape[:-1]), diff


if __name__ == "__main__":
    codebook_size, embedding_dim = 32, 8
    B, H, W = 2, 16, 16  # N = B*H*W = 512 flattened latent vectors

    key = jax.random.PRNGKey(0)
    k_cb, k_z = jax.random.split(key)
    # nn.init.uniform_(embedding.weight, -1/codebook_size, 1/codebook_size)
    codebook = jax.random.uniform(
        k_cb, (codebook_size, embedding_dim),
        minval=-1.0 / codebook_size, maxval=1.0 / codebook_size,
        dtype=jnp.float32)
    z = jax.random.normal(k_z, (B, H, W, embedding_dim), dtype=jnp.float32)

    z_q, idxs, diff = jax.jit(vq_ema_forward)(z, codebook)
    jax.block_until_ready((z_q, idxs, diff))

    # Sanity check against a plain-JAX reference.
    z_q_ref, idx_ref, diff_ref = _reference_forward(z, codebook)
    assert jnp.array_equal(idxs, idx_ref)
    assert jnp.allclose(z_q, z_q_ref, atol=1e-5, rtol=1e-5)
    assert jnp.allclose(diff, diff_ref, atol=1e-5, rtol=1e-5)

    print("KERNEL_OK")
</pallas_src>

<mosaic_0001>
module attributes {stable_mosaic.version = 11 : i64} {
  func.func @_vq_kernel(%arg0: i32, %arg1: memref<512x8xf32, #tpu.memory_space<vmem>>, %arg2: memref<8x128xf32, #tpu.memory_space<vmem>>, %arg3: memref<1x128xf32, #tpu.memory_space<vmem>>, %arg4: memref<128x8xf32, #tpu.memory_space<vmem>>, %arg5: memref<512x8xf32, #tpu.memory_space<vmem>>, %arg6: memref<1x1x512xi32, #tpu.memory_space<vmem>>, %arg7: memref<1x1x128xf32, #tpu.memory_space<vmem>>) attributes {dimension_semantics = [#tpu.dimension_semantics<parallel>], iteration_bounds = array<i64: 1>, scalar_prefetch = 0 : i64, scratch_operands = 0 : i64, tpu.core_type = #tpu.core_type<tc>, window_params = [{transform_indices = @transform_0, window_bounds = array<i64: 512, 8>}, {pipeline_mode = #tpu.pipeline_mode<synchronous>, transform_indices = @transform_1, window_bounds = array<i64: 8, 128>}, {pipeline_mode = #tpu.pipeline_mode<synchronous>, transform_indices = @transform_2, window_bounds = array<i64: 1, 128>}, {pipeline_mode = #tpu.pipeline_mode<synchronous>, transform_indices = @transform_3, window_bounds = array<i64: 128, 8>}, {transform_indices = @transform_4, window_bounds = array<i64: 512, 8>}, {transform_indices = @transform_5, window_bounds = array<i64: 1, 1, 512>}, {transform_indices = @transform_6, window_bounds = array<i64: 1, 1, 128>}]} {
    %c0 = arith.constant 0 : index
    %c0_0 = arith.constant 0 : index
    %0 = vector.load %arg1[%c0, %c0_0] : memref<512x8xf32, #tpu.memory_space<vmem>>, vector<512x8xf32>
    %c0_1 = arith.constant 0 : index
    %c0_2 = arith.constant 0 : index
    %1 = vector.load %arg2[%c0_1, %c0_2] : memref<8x128xf32, #tpu.memory_space<vmem>>, vector<8x128xf32>
    %c0_3 = arith.constant 0 : index
    %c0_4 = arith.constant 0 : index
    %2 = vector.load %arg3[%c0_3, %c0_4] : memref<1x128xf32, #tpu.memory_space<vmem>>, vector<1x128xf32>
    %c0_5 = arith.constant 0 : index
    %c0_6 = arith.constant 0 : index
    %3 = vector.load %arg4[%c0_5, %c0_6] : memref<128x8xf32, #tpu.memory_space<vmem>>, vector<128x8xf32>
    %cst = arith.constant dense<0.000000e+00> : vector<512x128xf32>
    %4 = tpu.matmul %0, %1, %cst {dimension_numbers = #tpu.dot_dimension_numbers<[1], [0], [0], [1], [0, 0, 1, 1], [], []>} : vector<512x8xf32>, vector<8x128xf32>, vector<512x128xf32> -> vector<512x128xf32>
    %cst_7 = arith.constant 2.000000e+00 : f32
    %5 = vector.broadcast %cst_7 : f32 to vector<512x128xf32>
    %6 = arith.mulf %5, %4 : vector<512x128xf32>
    %7 = vector.broadcast %2 : vector<1x128xf32> to vector<512x128xf32>
    %8 = arith.subf %7, %6 : vector<512x128xf32>
    %cst_8 = arith.constant dense<0x7F800000> : vector<512xf32>
    %9 = vector.multi_reduction <minimumf>, %8, %cst_8 [1] : vector<512x128xf32> to vector<512xf32>
    %10 = vector.shape_cast %9 : vector<512xf32> to vector<512x1xf32>
    %11 = tpu.iota {dimensions = array<i32: 1>} : vector<512x128xi32>
    %12 = vector.broadcast %10 : vector<512x1xf32> to vector<512x128xf32>
    %13 = arith.cmpf ole, %8, %12 : vector<512x128xf32>
    %c128_i32 = arith.constant 128 : i32
    %14 = vector.broadcast %c128_i32 : i32 to vector<512x128xi32>
    %15 = arith.select %13, %11, %14 : vector<512x128xi1>, vector<512x128xi32>
    %cst_9 = arith.constant dense<2147483647> : vector<512xi32>
    %16 = vector.multi_reduction <minsi>, %15, %cst_9 [1] : vector<512x128xi32> to vector<512xi32>
    %17 = vector.shape_cast %16 : vector<512xi32> to vector<512x1xi32>
    %18 = vector.broadcast %17 : vector<512x1xi32> to vector<512x128xi32>
    %19 = arith.cmpi eq, %11, %18 : vector<512x128xi32>
    %20 = arith.extui %19 : vector<512x128xi1> to vector<512x128xi32>
    %21 = arith.sitofp %20 : vector<512x128xi32> to vector<512x128xf32>
    %cst_10 = arith.constant dense<0.000000e+00> : vector<512x8xf32>
    %22 = tpu.matmul %21, %3, %cst_10 {dimension_numbers = #tpu.dot_dimension_numbers<[1], [0], [0], [1], [0, 0, 1, 1], [], []>} : vector<512x128xf32>, vector<128x8xf32>, vector<512x8xf32> -> vector<512x8xf32>
    %c0_11 = arith.constant 0 : index
    %c0_12 = arith.constant 0 : index
    %23 = vector.load %arg5[%c0_11, %c0_12] : memref<512x8xf32, #tpu.memory_space<vmem>>, vector<512x8xf32>
    tpu.vector_store %arg5[%c0_11, %c0_12], %22 {strides = array<i32>} : memref<512x8xf32, #tpu.memory_space<vmem>>, vector<512x8xf32>,
    %24 = tpu.iota {dimensions = array<i32: 1>} : vector<1x128xi32>
    %25 = arith.sitofp %24 : vector<1x128xi32> to vector<1x128xf32>
    %cst_13 = arith.constant dense<0.000000e+00> : vector<1x512xf32>
    %26 = tpu.matmul %25, %21, %cst_13 {dimension_numbers = #tpu.dot_dimension_numbers<[1], [1], [0], [0], [0, 0, 1, 0], [], []>} : vector<1x128xf32>, vector<512x128xf32>, vector<1x512xf32> -> vector<1x512xf32>
    %cst_14 = arith.constant 5.000000e-01 : f32
    %27 = vector.broadcast %cst_14 : f32 to vector<1x512xf32>
    %28 = arith.addf %26, %27 : vector<1x512xf32>
    %29 = vector.shape_cast %28 : vector<1x512xf32> to vector<1x1x512xf32>
    %30 = arith.fptosi %29 : vector<1x1x512xf32> to vector<1x1x512xi32>
    %c0_15 = arith.constant 0 : index
    %c0_16 = arith.constant 0 : index
    %c0_17 = arith.constant 0 : index
    %31 = vector.load %arg6[%c0_15, %c0_16, %c0_17] : memref<1x1x512xi32, #tpu.memory_space<vmem>>, vector<1x1x512xi32>
    tpu.vector_store %arg6[%c0_15, %c0_16, %c0_17], %30 {strides = array<i32>} : memref<1x1x512xi32, #tpu.memory_space<vmem>>, vector<1x1x512xi32>,
    %32 = tpu.iota {dimensions = array<i32: 0>} : vector<512x8xi32>
    %c512_i32 = arith.constant 512 : i32
    %33 = arith.muli %arg0, %c512_i32 : i32
    %34 = vector.broadcast %33 : i32 to vector<512x8xi32>
    %35 = arith.addi %32, %34 : vector<512x8xi32>
    %c512_i32_18 = arith.constant 512 : i32
    %36 = vector.broadcast %c512_i32_18 : i32 to vector<512x8xi32>
    %37 = arith.cmpi slt, %35, %36 : vector<512x8xi32>
    %38 = arith.subf %22, %0 : vector<512x8xf32>
    %cst_19 = arith.constant 0.000000e+00 : f32
    %39 = vector.broadcast %cst_19 : f32 to vector<512x8xf32>
    %40 = arith.select %37, %38, %39 : vector<512x8xi1>, vector<512x8xf32>
    %41 = arith.mulf %40, %40 : vector<512x8xf32>
    %42 = vector.shape_cast %41 : vector<512x8xf32> to vector<1x512x8xf32>
    %cst_20 = arith.constant dense<0.000000e+00> : vector<1xf32>
    %43 = vector.multi_reduction <add>, %42, %cst_20 [1, 2] : vector<1x512x8xf32> to vector<1xf32>
    %44 = vector.shape_cast %43 : vector<1xf32> to vector<1x1x1xf32>
    %45 = vector.extract %44[0, 0, 0] : f32 from vector<1x1x1xf32>
    %46 = vector.broadcast %45 : f32 to vector<1x1x128xf32>
    %c0_21 = arith.constant 0 : index
    %c0_22 = arith.constant 0 : index
    %c0_23 = arith.constant 0 : index
    %47 = vector.load %arg7[%c0_21, %c0_22, %c0_23] : memref<1x1x128xf32, #tpu.memory_space<vmem>>, vector<1x1x128xf32>
    tpu.vector_store %arg7[%c0_21, %c0_22, %c0_23], %46 {strides = array<i32>} : memref<1x1x128xf32, #tpu.memory_space<vmem>>, vector<1x1x128xf32>,
    return
  }
  func.func @transform_0(%arg0: i32) -> (i32, i32) {
    %c0_i32 = arith.constant 0 : i32
    %c0_i32_0 = arith.constant 0 : i32
    return %arg0, %c0_i32 : i32, i32
  }
  func.func @transform_1(%arg0: i32) -> (i32, i32) {
    %c0_i32 = arith.constant 0 : i32
    %c0_i32_0 = arith.constant 0 : i32
    %c0_i32_1 = arith.constant 0 : i32
    return %c0_i32, %c0_i32_0 : i32, i32
  }
  func.func @transform_2(%arg0: i32) -> (i32, i32) {
    %c0_i32 = arith.constant 0 : i32
    %c0_i32_0 = arith.constant 0 : i32
    %c0_i32_1 = arith.constant 0 : i32
    return %c0_i32, %c0_i32_0 : i32, i32
  }
  func.func @transform_3(%arg0: i32) -> (i32, i32) {
    %c0_i32 = arith.constant 0 : i32
    %c0_i32_0 = arith.constant 0 : i32
    %c0_i32_1 = arith.constant 0 : i32
    return %c0_i32, %c0_i32_0 : i32, i32
  }
  func.func @transform_4(%arg0: i32) -> (i32, i32) {
    %c0_i32 = arith.constant 0 : i32
    %c0_i32_0 = arith.constant 0 : i32
    return %arg0, %c0_i32 : i32, i32
  }
  func.func @transform_5(%arg0: i32) -> (i32, i32, i32) {
    %c0_i32 = arith.constant 0 : i32
    %c0_i32_0 = arith.constant 0 : i32
    %c0_i32_1 = arith.constant 0 : i32
    return %arg0, %c0_i32, %c0_i32_0 : i32, i32, i32
  }
  func.func @transform_6(%arg0: i32) -> (i32, i32, i32) {
    %c0_i32 = arith.constant 0 : i32
    %c0_i32_0 = arith.constant 0 : i32
    %c0_i32_1 = arith.constant 0 : i32
    return %arg0, %c0_i32, %c0_i32_0 : i32, i32, i32
  }
}

</mosaic_0001>

<llo_original>
// kernel: vq_ema_forward.1
$region0: #{vq_ema_forward.1}
  #allocation0 [shape = 'u32[]', space=smem, size = 0x4, offset = 0x4, fixed_abs, tag = 'smem constant byte address 0x4 - core index']
  #allocation1 [shape = 'u32[144,128]{1,0:T(1,128)}', space=vmem, size = 0x12000, scoped, tag = 'internal scratch']
  %s0 = inlined_call_operand.vmem [shape: f32[512,8], index: 0, kind: input, shape index: {}]
  %s1 = inlined_call_operand.vmem [shape: f32[8,128], index: 1, kind: input, shape index: {}]
  %s2 = inlined_call_operand.vmem [shape: f32[1,128], index: 2, kind: input, shape index: {}]
  %s3 = inlined_call_operand.vmem [shape: f32[128,8], index: 3, kind: input, shape index: {}]
  %s4 = inlined_call_operand.vmem [shape: f32[512,8], index: 4, kind: output, shape index: {0}]
  %s5 = inlined_call_operand.vmem [shape: s32[1,1,512], index: 5, kind: output, shape index: {1}]
  %s6 = inlined_call_operand.vmem [shape: f32[1,1,128], index: 6, kind: output, shape index: {2}]
  %7 = xla_tuple %s4, %s5, %s6
  %s8 = sld [smem:[#allocation0]]
  $region42: #{vq_ema_forward.1} parent=0
    _
  %s10 = ssub.s32 1, %s8
  %s11 = scalar_select 0, %s10, %s8
  // Predicated region
  $region2: #{vq_ema_forward.1} parent=0 // pred_check
    _
  $region3: #{vq_ema_forward.1} parent=0 // pred_check_branch
    %13 = sbr.rel (0) target = $region5
  $region4: #{vq_ema_forward.1} parent=0 // pred_region
    _
  $region5: #{vq_ema_forward.1} parent=0 // pred_fallthru
    _
  // Predicated region
  $region6: #{vq_ema_forward.1} parent=0 // pred_check
    _
  $region7: #{vq_ema_forward.1} parent=0 // pred_check_branch
    %15 = sbr.rel (0) target = $region9
  $region8: #{vq_ema_forward.1} parent=0 // pred_region
    _
  $region9: #{vq_ema_forward.1} parent=0 // pred_fallthru
    _
  // Predicated region
  $region10: #{vq_ema_forward.1} parent=0 // pred_check
    _
  $region11: #{vq_ema_forward.1} parent=0 // pred_check_branch
    %17 = sbr.rel (0) target = $region13
  $region12: #{vq_ema_forward.1} parent=0 // pred_region
    _
  $region13: #{vq_ema_forward.1} parent=0 // pred_fallthru
    _
  // Predicated region
  $region14: #{vq_ema_forward.1} parent=0 // pred_check
    _
  $region15: #{vq_ema_forward.1} parent=0 // pred_check_branch
    %19 = sbr.rel (0) target = $region17
  $region16: #{vq_ema_forward.1} parent=0 // pred_region
    _
  $region17: #{vq_ema_forward.1} parent=0 // pred_fallthru
    _
  %v20 = vld [vmem:[%s0] sm:$0xff]
  %v21 = vld [vmem:[%s0 + $0x8] sm:$0xff]
  %v22 = vld [vmem:[%s0 + $0x10] sm:$0xff]
  %v23 = vld [vmem:[%s0 + $0x18] sm:$0xff]
  %v24 = vld [vmem:[%s0 + $0x20] sm:$0xff]
  %v25 = vld [vmem:[%s0 + $0x28] sm:$0xff]
  %v26 = vld [vmem:[%s0 + $0x30] sm:$0xff]
  %v27 = vld [vmem:[%s0 + $0x38] sm:$0xff]
  %v28 = vld [vmem:[%s0 + $0x40] sm:$0xff]
  %v29 = vld [vmem:[%s0 + $0x48] sm:$0xff]
  %v30 = vld [vmem:[%s0 + $0x50] sm:$0xff]
  %v31 = vld [vmem:[%s0 + $0x58] sm:$0xff]
  %v32 = vld [vmem:[%s0 + $0x60] sm:$0xff]
  %v33 = vld [vmem:[%s0 + $0x68] sm:$0xff]
  %v34 = vld [vmem:[%s0 + $0x70] sm:$0xff]
  %v35 = vld [vmem:[%s0 + $0x78] sm:$0xff]
  %v36 = vld [vmem:[%s0 + $0x80] sm:$0xff]
  %v37 = vld [vmem:[%s0 + $0x88] sm:$0xff]
  %v38 = vld [vmem:[%s0 + $0x90] sm:$0xff]
  %v39 = vld [vmem:[%s0 + $0x98] sm:$0xff]
  %v40 = vld [vmem:[%s0 + $0xa0] sm:$0xff]
  %v41 = vld [vmem:[%s0 + $0xa8] sm:$0xff]
  %v42 = vld [vmem:[%s0 + $0xb0] sm:$0xff]
  %v43 = vld [vmem:[%s0 + $0xb8] sm:$0xff]
  %v44 = vld [vmem:[%s0 + $0xc0] sm:$0xff]
  %v45 = vld [vmem:[%s0 + $0xc8] sm:$0xff]
  %v46 = vld [vmem:[%s0 + $0xd0] sm:$0xff]
  %v47 = vld [vmem:[%s0 + $0xd8] sm:$0xff]
  %v48 = vld [vmem:[%s0 + $0xe0] sm:$0xff]
  %v49 = vld [vmem:[%s0 + $0xe8] sm:$0xff]
  %v50 = vld [vmem:[%s0 + $0xf0] sm:$0xff]
  %v51 = vld [vmem:[%s0 + $0xf8] sm:$0xff]
  %v52 = vld [vmem:[%s0 + $0x100] sm:$0xff]
  %v53 = vld [vmem:[%s0 + $0x108] sm:$0xff]
  %v54 = vld [vmem:[%s0 + $0x110] sm:$0xff]
  %v55 = vld [vmem:[%s0 + $0x118] sm:$0xff]
  %v56 = vld [vmem:[%s0 + $0x120] sm:$0xff]
  %v57 = vld [vmem:[%s0 + $0x128] sm:$0xff]
  %v58 = vld [vmem:[%s0 + $0x130] sm:$0xff]
  %v59 = vld [vmem:[%s0 + $0x138] sm:$0xff]
  %v60 = vld [vmem:[%s0 + $0x140] sm:$0xff]
  %v61 = vld [vmem:[%s0 + $0x148] sm:$0xff]
  %v62 = vld [vmem:[%s0 + $0x150] sm:$0xff]
  %v63 = vld [vmem:[%s0 + $0x158] sm:$0xff]
  %v64 = vld [vmem:[%s0 + $0x160] sm:$0xff]
  %v65 = vld [vmem:[%s0 + $0x168] sm:$0xff]
  %v66 = vld [vmem:[%s0 + $0x170] sm:$0xff]
  %v67 = vld [vmem:[%s0 + $0x178] sm:$0xff]
  %v68 = vld [vmem:[%s0 + $0x180] sm:$0xff]
  %v69 = vld [vmem:[%s0 + $0x188] sm:$0xff]
  %v70 = vld [vmem:[%s0 + $0x190] sm:$0xff]
  %v71 = vld [vmem:[%s0 + $0x198] sm:$0xff]
  %v72 = vld [vmem:[%s0 + $0x1a0] sm:$0xff]
  %v73 = vld [vmem:[%s0 + $0x1a8] sm:$0xff]
  %v74 = vld [vmem:[%s0 + $0x1b0] sm:$0xff]
  %v75 = vld [vmem:[%s0 + $0x1b8] sm:$0xff]
  %v76 = vld [vmem:[%s0 + $0x1c0] sm:$0xff]
  %v77 = vld [vmem:[%s0 + $0x1c8] sm:$0xff]
  %v78 = vld [vmem:[%s0 + $0x1d0] sm:$0xff]
  %v79 = vld [vmem:[%s0 + $0x1d8] sm:$0xff]
  %v80 = vld [vmem:[%s0 + $0x1e0] sm:$0xff]
  %v81 = vld [vmem:[%s0 + $0x1e8] sm:$0xff]
  %v82 = vld [vmem:[%s0 + $0x1f0] sm:$0xff]
  %v83 = vld [vmem:[%s0 + $0x1f8] sm:$0xff]
  %v84 = vld [vmem:[%s1] sm:$0xff]
  %v85 = vld [vmem:[%s2] sm:$0x1]
  %v86 = vld [vmem:[%s3] sm:$0xff]
  %v87 = vld [vmem:[%s3 + $0x8] sm:$0xff]
  %v88 = vld [vmem:[%s3 + $0x10] sm:$0xff]
  %v89 = vld [vmem:[%s3 + $0x18] sm:$0xff]
  %v90 = vld [vmem:[%s3 + $0x20] sm:$0xff]
  %v91 = vld [vmem:[%s3 + $0x28] sm:$0xff]
  %v92 = vld [vmem:[%s3 + $0x30] sm:$0xff]
  %v93 = vld [vmem:[%s3 + $0x38] sm:$0xff]
  %v94 = vld [vmem:[%s3 + $0x40] sm:$0xff]
  %v95 = vld [vmem:[%s3 + $0x48] sm:$0xff]
  %v96 = vld [vmem:[%s3 + $0x50] sm:$0xff]
  %v97 = vld [vmem:[%s3 + $0x58] sm:$0xff]
  %v98 = vld [vmem:[%s3 + $0x60] sm:$0xff]
  %v99 = vld [vmem:[%s3 + $0x68] sm:$0xff]
  %v100 = vld [vmem:[%s3 + $0x70] sm:$0xff]
  %v101 = vld [vmem:[%s3 + $0x78] sm:$0xff]
  %vm102 = vcmask 64512
  %v104 = vsel %vm102, %v20, 0
  %v107 = vsel %vm102, %v21, 0
  %v110 = vsel %vm102, %v22, 0
  %v113 = vsel %vm102, %v23, 0
  %v116 = vsel %vm102, %v24, 0
  %v119 = vsel %vm102, %v25, 0
  %v122 = vsel %vm102, %v26, 0
  %v125 = vsel %vm102, %v27, 0
  %v128 = vsel %vm102, %v28, 0
  %v131 = vsel %vm102, %v29, 0
  %v134 = vsel %vm102, %v30, 0
  %v137 = vsel %vm102, %v31, 0
  %v140 = vsel %vm102, %v32, 0
  %v143 = vsel %vm102, %v33, 0
  %v146 = vsel %vm102, %v34, 0
  %v149 = vsel %vm102, %v35, 0
  %v152 = vsel %vm102, %v36, 0
  %v155 = vsel %vm102, %v37, 0
  %v158 = vsel %vm102, %v38, 0
  %v161 = vsel %vm102, %v39, 0
  %v164 = vsel %vm102, %v40, 0
  %v167 = vsel %vm102, %v41, 0
  %v170 = vsel %vm102, %v42, 0
  %v173 = vsel %vm102, %v43, 0
  %v176 = vsel %vm102, %v44, 0
  %v179 = vsel %vm102, %v45, 0
  %v182 = vsel %vm102, %v46, 0
  %v185 = vsel %vm102, %v47, 0
  %v188 = vsel %vm102, %v48, 0
  %v191 = vsel %vm102, %v49, 0
  %v194 = vsel %vm102, %v50, 0
  %v197 = vsel %vm102, %v51, 0
  %v200 = vsel %vm102, %v52, 0
  %v203 = vsel %vm102, %v53, 0
  %v206 = vsel %vm102, %v54, 0
  %v209 = vsel %vm102, %v55, 0
  %v212 = vsel %vm102, %v56, 0
  %v215 = vsel %vm102, %v57, 0
  %v218 = vsel %vm102, %v58, 0
  %v221 = vsel %vm102, %v59, 0
  %v224 = vsel %vm102, %v60, 0
  %v227 = vsel %vm102, %v61, 0
  %v230 = vsel %vm102, %v62, 0
  %v233 = vsel %vm102, %v63, 0
  %v236 = vsel %vm102, %v64, 0
  %v239 = vsel %vm102, %v65, 0
  %v242 = vsel %vm102, %v66, 0
  %v245 = vsel %vm102, %v67, 0
  %v248 = vsel %vm102, %v68, 0
  %v251 = vsel %vm102, %v69, 0
  %v254 = vsel %vm102, %v70, 0
  %v257 = vsel %vm102, %v71, 0
  %v260 = vsel %vm102, %v72, 0
  %v263 = vsel %vm102, %v73, 0
  %v266 = vsel %vm102, %v74, 0
  %v269 = vsel %vm102, %v75, 0
  %v272 = vsel %vm102, %v76, 0
  %v275 = vsel %vm102, %v77, 0
  %v278 = vsel %vm102, %v78, 0
  %v281 = vsel %vm102, %v79, 0
  %v284 = vsel %vm102, %v80, 0
  %v287 = vsel %vm102, %v81, 0
  %v290 = vsel %vm102, %v82, 0
  %v293 = vsel %vm102, %v83, 0
  %295 = vmatprep.subr.mxu0 0.0
  %296 = vmatpush1.msra.mxu0 %v84
  %297 = vmatprep.subr.mxu0 0.0
  %298 = vmatpush1.msra.mxu0 0.0
  %299 = vmatprep.subr.mxu0 0.0
  %300 = vmatpush1.msra.mxu0 0.0
  %301 = vmatprep.subr.mxu0 0.0
  %302 = vmatpush1.msra.mxu0 0.0
  %303 = vmatprep.subr.mxu0 0.0
  %304 = vmatpush1.msra.mxu0 0.0
  %305 = vmatprep.subr.mxu0 0.0
  %306 = vmatpush1.msra.mxu0 0.0
  %307 = vmatprep.subr.mxu0 0.0
  %308 = vmatpush1.msra.mxu0 0.0
  %309 = vmatprep.subr.mxu0 0.0
  %310 = vmatpush1.msra.mxu0 0.0
  %311 = vmatprep.subr.mxu0 0.0
  %312 = vmatpush1.msra.mxu0 0.0
  %313 = vmatprep.subr.mxu0 0.0
  %314 = vmatpush1.msra.mxu0 0.0
  %315 = vmatprep.subr.mxu0 0.0
  %316 = vmatpush1.msra.mxu0 0.0
  %317 = vmatprep.subr.mxu0 0.0
  %318 = vmatpush1.msra.mxu0 0.0
  %319 = vmatprep.subr.mxu0 0.0
  %320 = vmatpush1.msra.mxu0 0.0
  %321 = vmatprep.subr.mxu0 0.0
  %322 = vmatpush1.msra.mxu0 0.0
  %323 = vmatprep.subr.mxu0 0.0
  %324 = vmatpush1.msra.mxu0 0.0
  %325 = vmatprep.subr.mxu0 0.0
  %326 = vmatpush1.msra.mxu0 0.0
  %327 = vmatprep.subr.mxu0 0.0
  %328 = vmatpush1.msra.mxu0 0.0
  %329 = vmatprep.subr.mxu0 0.0
  %330 = vmatpush1.msra.mxu0 0.0
  %331 = vmatprep.subr.mxu0 0.0
  %332 = vmatpush1.msra.mxu0 0.0
  %333 = vmatprep.subr.mxu0 0.0
  %334 = vmatpush1.msra.mxu0 0.0
  %335 = vmatprep.subr.mxu0 0.0
  %336 = vmatpush1.msra.mxu0 0.0
  %337 = vmatprep.subr.mxu0 0.0
  %338 = vmatpush1.msra.mxu0 0.0
  %339 = vmatprep.subr.mxu0 0.0
  %340 = vmatpush1.msra.mxu0 0.0
  %341 = vmatprep.subr.mxu0 0.0
  %342 = vmatpush1.msra.mxu0 0.0
  %343 = vmatprep.subr.mxu0 0.0
  %344 = vmatpush1.msra.mxu0 0.0
  %345 = vmatprep.subr.mxu0 0.0
  %346 = vmatpush1.msra.mxu0 0.0
  %347 = vmatprep.subr.mxu0 0.0
  %348 = vmatpush1.msra.mxu0 0.0
  %349 = vmatprep.subr.mxu0 0.0
  %350 = vmatpush1.msra.mxu0 0.0
  %351 = vmatprep.subr.mxu0 0.0
  %352 = vmatpush1.msra.mxu0 0.0
  %353 = vmatprep.subr.mxu0 0.0
  %354 = vmatpush1.msra.mxu0 0.0
  %355 = vmatprep.subr.mxu0 0.0
  %356 = vmatpush1.msra.mxu0 0.0
  %357 = vmatprep.subr.mxu0 0.0
  %358 = vmatpush1.msra.mxu0 0.0
  %359 = vmatprep.mubr.f32.mxu0 0.0
  %360 = vmatmul.mubr.f32.gmra.mrb[0].mxu0 %v104
  %v361 = vpop.f32.mrb[0].mxu0
  %v362 = vadd.f32 0.0, %v361
  %v363 = vpop.f32.mrb[0].mxu0
  %364 = vmatprep.mubr.f32.mxu0 0.0
  %365 = vmatmul.mubr.f32.gmra.mrb[0].mxu0 %v107
  %v366 = vpop.f32.mrb[0].mxu0
  %v367 = vadd.f32 0.0, %v366
  %v368 = vpop.f32.mrb[0].mxu0
  %369 = vmatprep.mubr.f32.mxu0 0.0
  %370 = vmatmul.mubr.f32.gmra.mrb[0].mxu0 %v110
  %v371 = vpop.f32.mrb[0].mxu0
  %v372 = vadd.f32 0.0, %v371
  %v373 = vpop.f32.mrb[0].mxu0
  %374 = vmatprep.mubr.f32.mxu0 0.0
  %375 = vmatmul.mubr.f32.gmra.mrb[0].mxu0 %v113
  %v376 = vpop.f32.mrb[0].mxu0
  %v377 = vadd.f32 0.0, %v376
  %v378 = vpop.f32.mrb[0].mxu0
  %379 = vmatprep.mubr.f32.mxu0 0.0
  %380 = vmatmul.mubr.f32.gmra.mrb[0].mxu0 %v116
  %v381 = vpop.f32.mrb[0].mxu0
  %v382 = vadd.f32 0.0, %v381
  %v383 = vpop.f32.mrb[0].mxu0
  %384 = vmatprep.mubr.f32.mxu0 0.0
  %385 = vmatmul.mubr.f32.gmra.mrb[0].mxu0 %v119
  %v386 = vpop.f32.mrb[0].mxu0
  %v387 = vadd.f32 0.0, %v386
  %v388 = vpop.f32.mrb[0].mxu0
  %389 = vmatprep.mubr.f32.mxu0 0.0
  %390 = vmatmul.mubr.f32.gmra.mrb[0].mxu0 %v122
  %v391 = vpop.f32.mrb[0].mxu0
  %v392 = vadd.f32 0.0, %v391
  %v393 = vpop.f32.mrb[0].mxu0
  %394 = vmatprep.mubr.f32.mxu0 0.0
  %395 = vmatmul.mubr.f32.gmra.mrb[0].mxu0 %v125
  %v396 = vpop.f32.mrb[0].mxu0
  %v397 = vadd.f32 0.0, %v396
  %v398 = vpop.f32.mrb[0].mxu0
  %399 = vmatprep.mubr.f32.mxu0 0.0
  %400 = vmatmul.mubr.f32.gmra.mrb[0].mxu0 %v128
  %v401 = vpop.f32.mrb[0].mxu0
  %v402 = vadd.f32 0.0, %v401
  %v403 = vpop.f32.mrb[0].mxu0
  %404 = vmatprep.mubr.f32.mxu0 0.0
  %405 = vmatmul.mubr.f32.gmra.mrb[0].mxu0 %v131
  %v406 = vpop.f32.mrb[0].mxu0
  %v407 = vadd.f32 0.0, %v406
  %v408 = vpop.f32.mrb[0].mxu0
  %409 = vmatprep.mubr.f32.mxu0 0.0
  %410 = vmatmul.mubr.f32.gmra.mrb[0].mxu0 %v134
  %v411 = vpop.f32.mrb[0].mxu0
  %v412 = vadd.f32 0.0, %v411
  %v413 = vpop.f32.mrb[0].mxu0
  %414 = vmatprep.mubr.f32.mxu0 0.0
  %415 = vmatmul.mubr.f32.gmra.mrb[0].mxu0 %v137
  %v416 = vpop.f32.mrb[0].mxu0
  %v417 = vadd.f32 0.0, %v416
  %v418 = vpop.f32.mrb[0].mxu0
  %419 = vmatprep.mubr.f32.mxu0 0.0
  %420 = vmatmul.mubr.f32.gmra.mrb[0].mxu0 %v140
  %v421 = vpop.f32.mrb[0].mxu0
  %v422 = vadd.f32 0.0, %v421
  %v423 = vpop.f32.mrb[0].mxu0
  %424 = vmatprep.mubr.f32.mxu0 0.0
  %425 = vmatmul.mubr.f32.gmra.mrb[0].mxu0 %v143
  %v426 = vpop.f32.mrb[0].mxu0
  %v427 = vadd.f32 0.0, %v426
  %v428 = vpop.f32.mrb[0].mxu0
  %429 = vmatprep.mubr.f32.mxu0 0.0
  %430 = vmatmul.mubr.f32.gmra.mrb[0].mxu0 %v146
  %v431 = vpop.f32.mrb[0].mxu0
  %v432 = vadd.f32 0.0, %v431
  %v433 = vpop.f32.mrb[0].mxu0
  %434 = vmatprep.mubr.f32.mxu0 0.0
  %435 = vmatmul.mubr.f32.gmra.mrb[0].mxu0 %v149
  %v436 = vpop.f32.mrb[0].mxu0
  %v437 = vadd.f32 0.0, %v436
  %v438 = vpop.f32.mrb[0].mxu0
  %439 = vmatprep.mubr.f32.mxu0 0.0
  %440 = vmatmul.mubr.f32.gmra.mrb[0].mxu0 %v152
  %v441 = vpop.f32.mrb[0].mxu0
  %v442 = vadd.f32 0.0, %v441
  %v443 = vpop.f32.mrb[0].mxu0
  %444 = vmatprep.mubr.f32.mxu0 0.0
  %445 = vmatmul.mubr.f32.gmra.mrb[0].mxu0 %v155
  %v446 = vpop.f32.mrb[0].mxu0
  %v447 = vadd.f32 0.0, %v446
  %v448 = vpop.f32.mrb[0].mxu0
  %449 = vmatprep.mubr.f32.mxu0 0.0
  %450 = vmatmul.mubr.f32.gmra.mrb[0].mxu0 %v158
  %v451 = vpop.f32.mrb[0].mxu0
  %v452 = vadd.f32 0.0, %v451
  %v453 = vpop.f32.mrb[0].mxu0
  %454 = vmatprep.mubr.f32.mxu0 0.0
  %455 = vmatmul.mubr.f32.gmra.mrb[0].mxu0 %v161
  %v456 = vpop.f32.mrb[0].mxu0
  %v457 = vadd.f32 0.0, %v456
  %v458 = vpop.f32.mrb[0].mxu0
  %459 = vmatprep.mubr.f32.mxu0 0.0
  %460 = vmatmul.mubr.f32.gmra.mrb[0].mxu0 %v164
  %v461 = vpop.f32.mrb[0].mxu0
  %v462 = vadd.f32 0.0, %v461
  %v463 = vpop.f32.mrb[0].mxu0
  %464 = vmatprep.mubr.f32.mxu0 0.0
  %465 = vmatmul.mubr.f32.gmra.mrb[0].mxu0 %v167
  %v466 = vpop.f32.mrb[0].mxu0
  %v467 = vadd.f32 0.0, %v466
  %v468 = vpop.f32.mrb[0].mxu0
  %469 = vmatprep.mubr.f32.mxu0 0.0
  %470 = vmatmul.mubr.f32.gmra.mrb[0].mxu0 %v170
  %v471 = vpop.f32.mrb[0].mxu0
  %v472 = vadd.f32 0.0, %v471
  %v473 = vpop.f32.mrb[0].mxu0
  %474 = vmatprep.mubr.f32.mxu0 0.0
  %475 = vmatmul.mubr.f32.gmra.mrb[0].mxu0 %v173
  %v476 = vpop.f32.mrb[0].mxu0
  %v477 = vadd.f32 0.0, %v476
  %v478 = vpop.f32.mrb[0].mxu0
  %479 = vmatprep.mubr.f32.mxu0 0.0
  %480 = vmatmul.mubr.f32.gmra.mrb[0].mxu0 %v176
  %v481 = vpop.f32.mrb[0].mxu0
  %v482 = vadd.f32 0.0, %v481
  %v483 = vpop.f32.mrb[0].mxu0
  %484 = vmatprep.mubr.f32.mxu0 0.0
  %485 = vmatmul.mubr.f32.gmra.mrb[0].mxu0 %v179
  %v486 = vpop.f32.mrb[0].mxu0
  %v487 = vadd.f32 0.0, %v486
  %v488 = vpop.f32.mrb[0].mxu0
  %489 = vmatprep.mubr.f32.mxu0 0.0
  %490 = vmatmul.mubr.f32.gmra.mrb[0].mxu0 %v182
  %v491 = vpop.f32.mrb[0].mxu0
  %v492 = vadd.f32 0.0, %v491
  %v493 = vpop.f32.mrb[0].mxu0
  %494 = vmatprep.mubr.f32.mxu0 0.0
  %495 = vmatmul.mubr.f32.gmra.mrb[0].mxu0 %v185
  %v496 = vpop.f32.mrb[0].mxu0
  %v497 = vadd.f32 0.0, %v496
  %v498 = vpop.f32.mrb[0].mxu0
  %499 = vmatprep.mubr.f32.mxu0 0.0
  %500 = vmatmul.mubr.f32.gmra.mrb[0].mxu0 %v188
  %v501 = vpop.f32.mrb[0].mxu0
  %v502 = vadd.f32 0.0, %v501
  %v503 = vpop.f32.mrb[0].mxu0
  %504 = vmatprep.mubr.f32.mxu0 0.0
  %505 = vmatmul.mubr.f32.gmra.mrb[0].mxu0 %v191
  %v506 = vpop.f32.mrb[0].mxu0
  %v507 = vadd.f32 0.0, %v506
  %v508 = vpop.f32.mrb[0].mxu0
  %509 = vmatprep.mubr.f32.mxu0 0.0
  %510 = vmatmul.mubr.f32.gmra.mrb[0].mxu0 %v194
  %v511 = vpop.f32.mrb[0].mxu0
  %v512 = vadd.f32 0.0, %v511
  %v513 = vpop.f32.mrb[0].mxu0
  %514 = vmatprep.mubr.f32.mxu0 0.0
  %515 = vmatmul.mubr.f32.gmra.mrb[0].mxu0 %v197
  %v516 = vpop.f32.mrb[0].mxu0
  %v517 = vadd.f32 0.0, %v516
  %v518 = vpop.f32.mrb[0].mxu0
  %519 = vmatprep.mubr.f32.mxu0 0.0
  %520 = vmatmul.mubr.f32.gmra.mrb[0].mxu0 %v200
  %v521 = vpop.f32.mrb[0].mxu0
  %v522 = vadd.f32 0.0, %v521
  %v523 = vpop.f32.mrb[0].mxu0
  %524 = vmatprep.mubr.f32.mxu0 0.0
  %525 = vmatmul.mubr.f32.gmra.mrb[0].mxu0 %v203
  %v526 = vpop.f32.mrb[0].mxu0
  %v527 = vadd.f32 0.0, %v526
  %v528 = vpop.f32.mrb[0].mxu0
  %529 = vmatprep.mubr.f32.mxu0 0.0
  %530 = vmatmul.mubr.f32.gmra.mrb[0].mxu0 %v206
  %v531 = vpop.f32.mrb[0].mxu0
  %v532 = vadd.f32 0.0, %v531
  %v533 = vpop.f32.mrb[0].mxu0
  %534 = vmatprep.mubr.f32.mxu0 0.0
  %535 = vmatmul.mubr.f32.gmra.mrb[0].mxu0 %v209
  %v536 = vpop.f32.mrb[0].mxu0
  %v537 = vadd.f32 0.0, %v536
  %v538 = vpop.f32.mrb[0].mxu0
  %539 = vmatprep.mubr.f32.mxu0 0.0
  %540 = vmatmul.mubr.f32.gmra.mrb[0].mxu0 %v212
  %v541 = vpop.f32.mrb[0].mxu0
  %v542 = vadd.f32 0.0, %v541
  %v543 = vpop.f32.mrb[0].mxu0
  %544 = vmatprep.mubr.f32.mxu0 0.0
  %545 = vmatmul.mubr.f32.gmra.mrb[0].mxu0 %v215
  %v546 = vpop.f32.mrb[0].mxu0
  %v547 = vadd.f32 0.0, %v546
  %v548 = vpop.f32.mrb[0].mxu0
  %549 = vmatprep.mubr.f32.mxu0 0.0
  %550 = vmatmul.mubr.f32.gmra.mrb[0].mxu0 %v218
  %v551 = vpop.f32.mrb[0].mxu0
  %v552 = vadd.f32 0.0, %v551
  %v553 = vpop.f32.mrb[0].mxu0
  %554 = vmatprep.mubr.f32.mxu0 0.0
  %555 = vmatmul.mubr.f32.gmra.mrb[0].mxu0 %v221
  %v556 = vpop.f32.mrb[0].mxu0
  %v557 = vadd.f32 0.0, %v556
  %v558 = vpop.f32.mrb[0].mxu0
  %559 = vmatprep.mubr.f32.mxu0 0.0
  %560 = vmatmul.mubr.f32.gmra.mrb[0].mxu0 %v224
  %v561 = vpop.f32.mrb[0].mxu0
  %v562 = vadd.f32 0.0, %v561
  %v563 = vpop.f32.mrb[0].mxu0
  %564 = vmatprep.mubr.f32.mxu0 0.0
  %565 = vmatmul.mubr.f32.gmra.mrb[0].mxu0 %v227
  %v566 = vpop.f32.mrb[0].mxu0
  %v567 = vadd.f32 0.0, %v566
  %v568 = vpop.f32.mrb[0].mxu0
  %569 = vmatprep.mubr.f32.mxu0 0.0
  %570 = vmatmul.mubr.f32.gmra.mrb[0].mxu0 %v230
  %v571 = vpop.f32.mrb[0].mxu0
  %v572 = vadd.f32 0.0, %v571
  %v573 = vpop.f32.mrb[0].mxu0
  %574 = vmatprep.mubr.f32.mxu0 0.0
  %575 = vmatmul.mubr.f32.gmra.mrb[0].mxu0 %v233
  %v576 = vpop.f32.mrb[0].mxu0
  %v577 = vadd.f32 0.0, %v576
  %v578 = vpop.f32.mrb[0].mxu0
  %579 = vmatprep.mubr.f32.mxu0 0.0
  %580 = vmatmul.mubr.f32.gmra.mrb[0].mxu0 %v236
  %v581 = vpop.f32.mrb[0].mxu0
  %v582 = vadd.f32 0.0, %v581
  %v583 = vpop.f32.mrb[0].mxu0
  %584 = vmatprep.mubr.f32.mxu0 0.0
  %585 = vmatmul.mubr.f32.gmra.mrb[0].mxu0 %v239
  %v586 = vpop.f32.mrb[0].mxu0
  %v587 = vadd.f32 0.0, %v586
  %v588 = vpop.f32.mrb[0].mxu0
  %589 = vmatprep.mubr.f32.mxu0 0.0
  %590 = vmatmul.mubr.f32.gmra.mrb[0].mxu0 %v242
  %v591 = vpop.f32.mrb[0].mxu0
  %v592 = vadd.f32 0.0, %v591
  %v593 = vpop.f32.mrb[0].mxu0
  %594 = vmatprep.mubr.f32.mxu0 0.0
  %595 = vmatmul.mubr.f32.gmra.mrb[0].mxu0 %v245
  %v596 = vpop.f32.mrb[0].mxu0
  %v597 = vadd.f32 0.0, %v596
  %v598 = vpop.f32.mrb[0].mxu0
  %599 = vmatprep.mubr.f32.mxu0 0.0
  %600 = vmatmul.mubr.f32.gmra.mrb[0].mxu0 %v248
  %v601 = vpop.f32.mrb[0].mxu0
  %v602 = vadd.f32 0.0, %v601
  %v603 = vpop.f32.mrb[0].mxu0
  %604 = vmatprep.mubr.f32.mxu0 0.0
  %605 = vmatmul.mubr.f32.gmra.mrb[0].mxu0 %v251
  %v606 = vpop.f32.mrb[0].mxu0
  %v607 = vadd.f32 0.0, %v606
  %v608 = vpop.f32.mrb[0].mxu0
  %609 = vmatprep.mubr.f32.mxu0 0.0
  %610 = vmatmul.mubr.f32.gmra.mrb[0].mxu0 %v254
  %v611 = vpop.f32.mrb[0].mxu0
  %v612 = vadd.f32 0.0, %v611
  %v613 = vpop.f32.mrb[0].mxu0
  %614 = vmatprep.mubr.f32.mxu0 0.0
  %615 = vmatmul.mubr.f32.gmra.mrb[0].mxu0 %v257
  %v616 = vpop.f32.mrb[0].mxu0
  %v617 = vadd.f32 0.0, %v616
  %v618 = vpop.f32.mrb[0].mxu0
  %619 = vmatprep.mubr.f32.mxu0 0.0
  %620 = vmatmul.mubr.f32.gmra.mrb[0].mxu0 %v260
  %v621 = vpop.f32.mrb[0].mxu0
  %v622 = vadd.f32 0.0, %v621
  %v623 = vpop.f32.mrb[0].mxu0
  %624 = vmatprep.mubr.f32.mxu0 0.0
  %625 = vmatmul.mubr.f32.gmra.mrb[0].mxu0 %v263
  %v626 = vpop.f32.mrb[0].mxu0
  %v627 = vadd.f32 0.0, %v626
  %v628 = vpop.f32.mrb[0].mxu0
  %629 = vmatprep.mubr.f32.mxu0 0.0
  %630 = vmatmul.mubr.f32.gmra.mrb[0].mxu0 %v266
  %v631 = vpop.f32.mrb[0].mxu0
  %v632 = vadd.f32 0.0, %v631
  %v633 = vpop.f32.mrb[0].mxu0
  %634 = vmatprep.mubr.f32.mxu0 0.0
  %635 = vmatmul.mubr.f32.gmra.mrb[0].mxu0 %v269
  %v636 = vpop.f32.mrb[0].mxu0
  %v637 = vadd.f32 0.0, %v636
  %v638 = vpop.f32.mrb[0].mxu0
  %639 = vmatprep.mubr.f32.mxu0 0.0
  %640 = vmatmul.mubr.f32.gmra.mrb[0].mxu0 %v272
  %v641 = vpop.f32.mrb[0].mxu0
  %v642 = vadd.f32 0.0, %v641
  %v643 = vpop.f32.mrb[0].mxu0
  %644 = vmatprep.mubr.f32.mxu0 0.0
  %645 = vmatmul.mubr.f32.gmra.mrb[0].mxu0 %v275
  %v646 = vpop.f32.mrb[0].mxu0
  %v647 = vadd.f32 0.0, %v646
  %v648 = vpop.f32.mrb[0].mxu0
  %649 = vmatprep.mubr.f32.mxu0 0.0
  %650 = vmatmul.mubr.f32.gmra.mrb[0].mxu0 %v278
  %v651 = vpop.f32.mrb[0].mxu0
  %v652 = vadd.f32 0.0, %v651
  %v653 = vpop.f32.mrb[0].mxu0
  %654 = vmatprep.mubr.f32.mxu0 0.0
  %655 = vmatmul.mubr.f32.gmra.mrb[0].mxu0 %v281
  %v656 = vpop.f32.mrb[0].mxu0
  %v657 = vadd.f32 0.0, %v656
  %v658 = vpop.f32.mrb[0].mxu0
  %659 = vmatprep.mubr.f32.mxu0 0.0
  %660 = vmatmul.mubr.f32.gmra.mrb[0].mxu0 %v284
  %v661 = vpop.f32.mrb[0].mxu0
  %v662 = vadd.f32 0.0, %v661
  %v663 = vpop.f32.mrb[0].mxu0
  %664 = vmatprep.mubr.f32.mxu0 0.0
  %665 = vmatmul.mubr.f32.gmra.mrb[0].mxu0 %v287
  %v666 = vpop.f32.mrb[0].mxu0
  %v667 = vadd.f32 0.0, %v666
  %v668 = vpop.f32.mrb[0].mxu0
  %669 = vmatprep.mubr.f32.mxu0 0.0
  %670 = vmatmul.mubr.f32.gmra.mrb[0].mxu0 %v290
  %v671 = vpop.f32.mrb[0].mxu0
  %v672 = vadd.f32 0.0, %v671
  %v673 = vpop.f32.mrb[0].mxu0
  %674 = vmatprep.mubr.f32.mxu0 0.0
  %675 = vmatmul.mubr.f32.gmra.mrb[0].mxu0 %v293
  %v676 = vpop.f32.mrb[0].mxu0
  %v677 = vadd.f32 0.0, %v676
  %v678 = vpop.f32.mrb[0].mxu0
  %679 = vdwg.mxu0
  %v680 = vmul.f32 %v362, 2.0
  %v681 = vmul.f32 %v367, 2.0
  %v682 = vmul.f32 %v372, 2.0
  %v683 = vmul.f32 %v377, 2.0
  %v684 = vmul.f32 %v382, 2.0
  %v685 = vmul.f32 %v387, 2.0
  %v686 = vmul.f32 %v392, 2.0
  %v687 = vmul.f32 %v397, 2.0
  %v688 = vmul.f32 %v402, 2.0
  %v689 = vmul.f32 %v407, 2.0
  %v690 = vmul.f32 %v412, 2.0
  %v691 = vmul.f32 %v417, 2.0
  %v692 = vmul.f32 %v422, 2.0
  %v693 = vmul.f32 %v427, 2.0
  %v694 = vmul.f32 %v432, 2.0
  %v695 = vmul.f32 %v437, 2.0
  %v696 = vmul.f32 %v442, 2.0
  %v697 = vmul.f32 %v447, 2.0
  %v698 = vmul.f32 %v452, 2.0
  %v699 = vmul.f32 %v457, 2.0
  %v700 = vmul.f32 %v462, 2.0
  %v701 = vmul.f32 %v467, 2.0
  %v702 = vmul.f32 %v472, 2.0
  %v703 = vmul.f32 %v477, 2.0
  %v704 = vmul.f32 %v482, 2.0
  %v705 = vmul.f32 %v487, 2.0
  %v706 = vmul.f32 %v492, 2.0
  %v707 = vmul.f32 %v497, 2.0
  %v708 = vmul.f32 %v502, 2.0
  %v709 = vmul.f32 %v507, 2.0
  %v710 = vmul.f32 %v512, 2.0
  %v711 = vmul.f32 %v517, 2.0
  %v712 = vmul.f32 %v522, 2.0
  %v713 = vmul.f32 %v527, 2.0
  %v714 = vmul.f32 %v532, 2.0
  %v715 = vmul.f32 %v537, 2.0
  %v716 = vmul.f32 %v542, 2.0
  %v717 = vmul.f32 %v547, 2.0
  %v718 = vmul.f32 %v552, 2.0
  %v719 = vmul.f32 %v557, 2.0
  %v720 = vmul.f32 %v562, 2.0
  %v721 = vmul.f32 %v567, 2.0
  %v722 = vmul.f32 %v572, 2.0
  %v723 = vmul.f32 %v577, 2.0
  %v724 = vmul.f32 %v582, 2.0
  %v725 = vmul.f32 %v587, 2.0
  %v726 = vmul.f32 %v592, 2.0
  %v727 = vmul.f32 %v597, 2.0
  %v728 = vmul.f32 %v602, 2.0
  %v729 = vmul.f32 %v607, 2.0
  %v730 = vmul.f32 %v612, 2.0
  %v731 = vmul.f32 %v617, 2.0
  %v732 = vmul.f32 %v622, 2.0
  %v733 = vmul.f32 %v627, 2.0
  %v734 = vmul.f32 %v632, 2.0
  %v735 = vmul.f32 %v637, 2.0
  %v736 = vmul.f32 %v642, 2.0
  %v737 = vmul.f32 %v647, 2.0
  %v738 = vmul.f32 %v652, 2.0
  %v739 = vmul.f32 %v657, 2.0
  %v740 = vmul.f32 %v662, 2.0
  %v741 = vmul.f32 %v667, 2.0
  %v742 = vmul.f32 %v672, 2.0
  %v743 = vmul.f32 %v677, 2.0
  %v745 = vlaneseq
  %v746 = vshrl.u32 %v745, 7
  %v747 = vsub.s32 0, %v746
  %v748 = vrot.slane %v85, %v747
  %v750 = vsub.f32 %v748, %v680
  %v751 = vsub.f32 %v748, %v681
  %v752 = vsub.f32 %v748, %v682
  %v753 = vsub.f32 %v748, %v683
  %v754 = vsub.f32 %v748, %v684
  %v755 = vsub.f32 %v748, %v685
  %v756 = vsub.f32 %v748, %v686
  %v757 = vsub.f32 %v748, %v687
  %v758 = vsub.f32 %v748, %v688
  %v759 = vsub.f32 %v748, %v689
  %v760 = vsub.f32 %v748, %v690
  %v761 = vsub.f32 %v748, %v691
  %v762 = vsub.f32 %v748, %v692
  %v763 = vsub.f32 %v748, %v693
  %v764 = vsub.f32 %v748, %v694
  %v765 = vsub.f32 %v748, %v695
  %v766 = vsub.f32 %v748, %v696
  %v767 = vsub.f32 %v748, %v697
  %v768 = vsub.f32 %v748, %v698
  %v769 = vsub.f32 %v748, %v699
  %v770 = vsub.f32 %v748, %v700
  %v771 = vsub.f32 %v748, %v701
  %v772 = vsub.f32 %v748, %v702
  %v773 = vsub.f32 %v748, %v703
  %v774 = vsub.f32 %v748, %v704
  %v775 = vsub.f32 %v748, %v705
  %v776 = vsub.f32 %v748, %v706
  %v777 = vsub.f32 %v748, %v707
  %v778 = vsub.f32 %v748, %v708
  %v779 = vsub.f32 %v748, %v709
  %v780 = vsub.f32 %v748, %v710
  %v781 = vsub.f32 %v748, %v711
  %v782 = vsub.f32 %v748, %v712
  %v783 = vsub.f32 %v748, %v713
  %v784 = vsub.f32 %v748, %v714
  %v785 = vsub.f32 %v748, %v715
  %v786 = vsub.f32 %v748, %v716
  %v787 = vsub.f32 %v748, %v717
  %v788 = vsub.f32 %v748, %v718
  %v789 = vsub.f32 %v748, %v719
  %v790 = vsub.f32 %v748, %v720
  %v791 = vsub.f32 %v748, %v721
  %v792 = vsub.f32 %v748, %v722
  %v793 = vsub.f32 %v748, %v723
  %v794 = vsub.f32 %v748, %v724
  %v795 = vsub.f32 %v748, %v725
  %v796 = vsub.f32 %v748, %v726
  %v797 = vsub.f32 %v748, %v727
  %v798 = vsub.f32 %v748, %v728
  %v799 = vsub.f32 %v748, %v729
  %v800 = vsub.f32 %v748, %v730
  %v801 = vsub.f32 %v748, %v731
  %v802 = vsub.f32 %v748, %v732
  %v803 = vsub.f32 %v748, %v733
  %v804 = vsub.f32 %v748, %v734
  %v805 = vsub.f32 %v748, %v735
  %v806 = vsub.f32 %v748, %v736
  %v807 = vsub.f32 %v748, %v737
  %v808 = vsub.f32 %v748, %v738
  %v809 = vsub.f32 %v748, %v739
  %v810 = vsub.f32 %v748, %v740
  %v811 = vsub.f32 %v748, %v741
  %v812 = vsub.f32 %v748, %v742
  %v813 = vsub.f32 %v748, %v743
  %814 = vmin.xlane.f32.xlu0 %v750
  %v815 = vpop.xlane.xlu0 %814
  %816 = vmin.xlane.f32.xlu0 %v751
  %v817 = vpop.xlane.xlu0 %816
  %818 = vmin.xlane.f32.xlu0 %v752
  %v819 = vpop.xlane.xlu0 %818
  %820 = vmin.xlane.f32.xlu0 %v753
  %v821 = vpop.xlane.xlu0 %820
  %822 = vmin.xlane.f32.xlu0 %v754
  %v823 = vpop.xlane.xlu0 %822
  %824 = vmin.xlane.f32.xlu0 %v755
  %v825 = vpop.xlane.xlu0 %824
  %826 = vmin.xlane.f32.xlu0 %v756
  %v827 = vpop.xlane.xlu0 %826
  %828 = vmin.xlane.f32.xlu0 %v757
  %v829 = vpop.xlane.xlu0 %828
  %830 = vmin.xlane.f32.xlu0 %v758
  %v831 = vpop.xlane.xlu0 %830
  %832 = vmin.xlane.f32.xlu0 %v759
  %v833 = vpop.xlane.xlu0 %832
  %834 = vmin.xlane.f32.xlu0 %v760
  %v835 = vpop.xlane.xlu0 %834
  %836 = vmin.xlane.f32.xlu0 %v761
  %v837 = vpop.xlane.xlu0 %836
  %838 = vmin.xlane.f32.xlu0 %v762
  %v839 = vpop.xlane.xlu0 %838
  %840 = vmin.xlane.f32.xlu0 %v763
  %v841 = vpop.xlane.xlu0 %840
  %842 = vmin.xlane.f32.xlu0 %v764
  %v843 = vpop.xlane.xlu0 %842
  %844 = vmin.xlane.f32.xlu0 %v765
  %v845 = vpop.xlane.xlu0 %844
  %846 = vmin.xlane.f32.xlu0 %v766
  %v847 = vpop.xlane.xlu0 %846
  %848 = vmin.xlane.f32.xlu0 %v767
  %v849 = vpop.xlane.xlu0 %848
  %850 = vmin.xlane.f32.xlu0 %v768
  %v851 = vpop.xlane.xlu0 %850
  %852 = vmin.xlane.f32.xlu0 %v769
  %v853 = vpop.xlane.xlu0 %852
  %854 = vmin.xlane.f32.xlu0 %v770
  %v855 = vpop.xlane.xlu0 %854
  %856 = vmin.xlane.f32.xlu0 %v771
  %v857 = vpop.xlane.xlu0 %856
  %858 = vmin.xlane.f32.xlu0 %v772
  %v859 = vpop.xlane.xlu0 %858
  %860 = vmin.xlane.f32.xlu0 %v773
  %v861 = vpop.xlane.xlu0 %860
  %862 = vmin.xlane.f32.xlu0 %v774
  %v863 = vpop.xlane.xlu0 %862
  %864 = vmin.xlane.f32.xlu0 %v775
  %v865 = vpop.xlane.xlu0 %864
  %866 = vmin.xlane.f32.xlu0 %v776
  %v867 = vpop.xlane.xlu0 %866
  %868 = vmin.xlane.f32.xlu0 %v777
  %v869 = vpop.xlane.xlu0 %868
  %870 = vmin.xlane.f32.xlu0 %v778
  %v871 = vpop.xlane.xlu0 %870
  %872 = vmin.xlane.f32.xlu0 %v779
  %v873 = vpop.xlane.xlu0 %872
  %874 = vmin.xlane.f32.xlu0 %v780
  %v875 = vpop.xlane.xlu0 %874
  %876 = vmin.xlane.f32.xlu0 %v781
  %v877 = vpop.xlane.xlu0 %876
  %878 = vmin.xlane.f32.xlu0 %v782
  %v879 = vpop.xlane.xlu0 %878
  %880 = vmin.xlane.f32.xlu0 %v783
  %v881 = vpop.xlane.xlu0 %880
  %882 = vmin.xlane.f32.xlu0 %v784
  %v883 = vpop.xlane.xlu0 %882
  %884 = vmin.xlane.f32.xlu0 %v785
  %v885 = vpop.xlane.xlu0 %884
  %886 = vmin.xlane.f32.xlu0 %v786
  %v887 = vpop.xlane.xlu0 %886
  %888 = vmin.xlane.f32.xlu0 %v787
  %v889 = vpop.xlane.xlu0 %888
  %890 = vmin.xlane.f32.xlu0 %v788
  %v891 = vpop.xlane.xlu0 %890
  %892 = vmin.xlane.f32.xlu0 %v789
  %v893 = vpop.xlane.xlu0 %892
  %894 = vmin.xlane.f32.xlu0 %v790
  %v895 = vpop.xlane.xlu0 %894
  %896 = vmin.xlane.f32.xlu0 %v791
  %v897 = vpop.xlane.xlu0 %896
  %898 = vmin.xlane.f32.xlu0 %v792
  %v899 = vpop.xlane.xlu0 %898
  %900 = vmin.xlane.f32.xlu0 %v793
  %v901 = vpop.xlane.xlu0 %900
  %902 = vmin.xlane.f32.xlu0 %v794
  %v903 = vpop.xlane.xlu0 %902
  %904 = vmin.xlane.f32.xlu0 %v795
  %v905 = vpop.xlane.xlu0 %904
  %906 = vmin.xlane.f32.xlu0 %v796
  %v907 = vpop.xlane.xlu0 %906
  %908 = vmin.xlane.f32.xlu0 %v797
  %v909 = vpop.xlane.xlu0 %908
  %910 = vmin.xlane.f32.xlu0 %v798
  %v911 = vpop.xlane.xlu0 %910
  %912 = vmin.xlane.f32.xlu0 %v799
  %v913 = vpop.xlane.xlu0 %912
  %914 = vmin.xlane.f32.xlu0 %v800
  %v915 = vpop.xlane.xlu0 %914
  %916 = vmin.xlane.f32.xlu0 %v801
  %v917 = vpop.xlane.xlu0 %916
  %918 = vmin.xlane.f32.xlu0 %v802
  %v919 = vpop.xlane.xlu0 %918
  %920 = vmin.xlane.f32.xlu0 %v803
  %v921 = vpop.xlane.xlu0 %920
  %922 = vmin.xlane.f32.xlu0 %v804
  %v923 = vpop.xlane.xlu0 %922
  %924 = vmin.xlane.f32.xlu0 %v805
  %v925 = vpop.xlane.xlu0 %924
  %926 = vmin.xlane.f32.xlu0 %v806
  %v927 = vpop.xlane.xlu0 %926
  %928 = vmin.xlane.f32.xlu0 %v807
  %v929 = vpop.xlane.xlu0 %928
  %930 = vmin.xlane.f32.xlu0 %v808
  %v931 = vpop.xlane.xlu0 %930
  %932 = vmin.xlane.f32.xlu0 %v809
  %v933 = vpop.xlane.xlu0 %932
  %934 = vmin.xlane.f32.xlu0 %v810
  %v935 = vpop.xlane.xlu0 %934
  %936 = vmin.xlane.f32.xlu0 %v811
  %v937 = vpop.xlane.xlu0 %936
  %938 = vmin.xlane.f32.xlu0 %v812
  %v939 = vpop.xlane.xlu0 %938
  %940 = vmin.xlane.f32.xlu0 %v813
  %v941 = vpop.xlane.xlu0 %940
  %v942 = vlaneseq
  %v943 = vand.u32 %v942, 127
  %vm944 = vcmp.le.f32.partialorder %v750, %v815
  %vm945 = vcmp.le.f32.partialorder %v751, %v817
  %vm946 = vcmp.le.f32.partialorder %v752, %v819
  %vm947 = vcmp.le.f32.partialorder %v753, %v821
  %vm948 = vcmp.le.f32.partialorder %v754, %v823
  %vm949 = vcmp.le.f32.partialorder %v755, %v825
  %vm950 = vcmp.le.f32.partialorder %v756, %v827
  %vm951 = vcmp.le.f32.partialorder %v757, %v829
  %vm952 = vcmp.le.f32.partialorder %v758, %v831
  %vm953 = vcmp.le.f32.partialorder %v759, %v833
  %vm954 = vcmp.le.f32.partialorder %v760, %v835
  %vm955 = vcmp.le.f32.partialorder %v761, %v837
  %vm956 = vcmp.le.f32.partialorder %v762, %v839
  %vm957 = vcmp.le.f32.partialorder %v763, %v841
  %vm958 = vcmp.le.f32.partialorder %v764, %v843
  %vm959 = vcmp.le.f32.partialorder %v765, %v845
  %vm960 = vcmp.le.f32.partialorder %v766, %v847
  %vm961 = vcmp.le.f32.partialorder %v767, %v849
  %vm962 = vcmp.le.f32.partialorder %v768, %v851
  %vm963 = vcmp.le.f32.partialorder %v769, %v853
  %vm964 = vcmp.le.f32.partialorder %v770, %v855
  %vm965 = vcmp.le.f32.partialorder %v771, %v857
  %vm966 = vcmp.le.f32.partialorder %v772, %v859
  %vm967 = vcmp.le.f32.partialorder %v773, %v861
  %vm968 = vcmp.le.f32.partialorder %v774, %v863
  %vm969 = vcmp.le.f32.partialorder %v775, %v865
  %vm970 = vcmp.le.f32.partialorder %v776, %v867
  %vm971 = vcmp.le.f32.partialorder %v777, %v869
  %vm972 = vcmp.le.f32.partialorder %v778, %v871
  %vm973 = vcmp.le.f32.partialorder %v779, %v873
  %vm974 = vcmp.le.f32.partialorder %v780, %v875
  %vm975 = vcmp.le.f32.partialorder %v781, %v877
  %vm976 = vcmp.le.f32.partialorder %v782, %v879
  %vm977 = vcmp.le.f32.partialorder %v783, %v881
  %vm978 = vcmp.le.f32.partialorder %v784, %v883
  %vm979 = vcmp.le.f32.partialorder %v785, %v885
  %vm980 = vcmp.le.f32.partialorder %v786, %v887
  %vm981 = vcmp.le.f32.partialorder %v787, %v889
  %vm982 = vcmp.le.f32.partialorder %v788, %v891
  %vm983 = vcmp.le.f32.partialorder %v789, %v893
  %vm984 = vcmp.le.f32.partialorder %v790, %v895
  %vm985 = vcmp.le.f32.partialorder %v791, %v897
  %vm986 = vcmp.le.f32.partialorder %v792, %v899
  %vm987 = vcmp.le.f32.partialorder %v793, %v901
  %vm988 = vcmp.le.f32.partialorder %v794, %v903
  %vm989 = vcmp.le.f32.partialorder %v795, %v905
  %vm990 = vcmp.le.f32.partialorder %v796, %v907
  %vm991 = vcmp.le.f32.partialorder %v797, %v909
  %vm992 = vcmp.le.f32.partialorder %v798, %v911
  %vm993 = vcmp.le.f32.partialorder %v799, %v913
  %vm994 = vcmp.le.f32.partialorder %v800, %v915
  %vm995 = vcmp.le.f32.partialorder %v801, %v917
  %vm996 = vcmp.le.f32.partialorder %v802, %v919
  %vm997 = vcmp.le.f32.partialorder %v803, %v921
  %vm998 = vcmp.le.f32.partialorder %v804, %v923
  %vm999 = vcmp.le.f32.partialorder %v805, %v925
  %vm1000 = vcmp.le.f32.partialorder %v806, %v927
  %vm1001 = vcmp.le.f32.partialorder %v807, %v929
  %vm1002 = vcmp.le.f32.partialorder %v808, %v931
  %vm1003 = vcmp.le.f32.partialorder %v809, %v933
  %vm1004 = vcmp.le.f32.partialorder %v810, %v935
  %vm1005 = vcmp.le.f32.partialorder %v811, %v937
  %vm1006 = vcmp.le.f32.partialorder %v812, %v939
  %vm1007 = vcmp.le.f32.partialorder %v813, %v941
  %v1008 = vsel %vm944, %v943, 128
  %v1009 = vsel %vm945, %v943, 128
  %v1010 = vsel %vm946, %v943, 128
  %v1011 = vsel %vm947, %v943, 128
  %v1012 = vsel %vm948, %v943, 128
  %v1013 = vsel %vm949, %v943, 128
  %v1014 = vsel %vm950, %v943, 128
  %v1015 = vsel %vm951, %v943, 128
  %v1016 = vsel %vm952, %v943, 128
  %v1017 = vsel %vm953, %v943, 128
  %v1018 = vsel %vm954, %v943, 128
  %v1019 = vsel %vm955, %v943, 128
  %v1020 = vsel %vm956, %v943, 128
  %v1021 = vsel %vm957, %v943, 128
  %v1022 = vsel %vm958, %v943, 128
  %v1023 = vsel %vm959, %v943, 128
  %v1024 = vsel %vm960, %v943, 128
  %v1025 = vsel %vm961, %v943, 128
  %v1026 = vsel %vm962, %v943, 128
  %v1027 = vsel %vm963, %v943, 128
  %v1028 = vsel %vm964, %v943, 128
  %v1029 = vsel %vm965, %v943, 128
  %v1030 = vsel %vm966, %v943, 128
  %v1031 = vsel %vm967, %v943, 128
  %v1032 = vsel %vm968, %v943, 128
  %v1033 = vsel %vm969, %v943, 128
  %v1034 = vsel %vm970, %v943, 128
  %v1035 = vsel %vm971, %v943, 128
  %v1036 = vsel %vm972, %v943, 128
  %v1037 = vsel %vm973, %v943, 128
  %v1038 = vsel %vm974, %v943, 128
  %v1039 = vsel %vm975, %v943, 128
  %v1040 = vsel %vm976, %v943, 128
  %v1041 = vsel %vm977, %v943, 128
  %v1042 = vsel %vm978, %v943, 128
  %v1043 = vsel %vm979, %v943, 128
  %v1044 = vsel %vm980, %v943, 128
  %v1045 = vsel %vm981, %v943, 128
  %v1046 = vsel %vm982, %v943, 128
  %v1047 = vsel %vm983, %v943, 128
  %v1048 = vsel %vm984, %v943, 128
  %v1049 = vsel %vm985, %v943, 128
  %v1050 = vsel %vm986, %v943, 128
  %v1051 = vsel %vm987, %v943, 128
  %v1052 = vsel %vm988, %v943, 128
  %v1053 = vsel %vm989, %v943, 128
  %v1054 = vsel %vm990, %v943, 128
  %v1055 = vsel %vm991, %v943, 128
  %v1056 = vsel %vm992, %v943, 128
  %v1057 = vsel %vm993, %v943, 128
  %v1058 = vsel %vm994, %v943, 128
  %v1059 = vsel %vm995, %v943, 128
  %v1060 = vsel %vm996, %v943, 128
  %v1061 = vsel %vm997, %v943, 128
  %v1062 = vsel %vm998, %v943, 128
  %v1063 = vsel %vm999, %v943, 128
  %v1064 = vsel %vm1000, %v943, 128
  %v1065 = vsel %vm1001, %v943, 128
  %v1066 = vsel %vm1002, %v943, 128
  %v1067 = vsel %vm1003, %v943, 128
  %v1068 = vsel %vm1004, %v943, 128
  %v1069 = vsel %vm1005, %v943, 128
  %v1070 = vsel %vm1006, %v943, 128
  %v1071 = vsel %vm1007, %v943, 128
  %v1072 = vand.u32 %v1008, 65535
  %v1073 = vshra.s32 %v1008, 16
  %v1074 = vcvt.s32.f32 %v1072
  %v1075 = vcvt.s32.f32 %v1073
  %1076 = vmin.xlane.f32.xlu0 %v1075
  %v1077 = vpop.xlane.xlu0 %1076
  %vm1078 = vcmp.eq.f32.partialorder %v1075, %v1077
  %v1079 = vsel %vm1078, %v1074, inf
  %1080 = vmin.xlane.f32.xlu0 %v1079
  %v1081 = vpop.xlane.xlu0 %1080
  %v1082 = vcvt.f32.s32 %v1081
  %v1083 = vcvt.f32.s32 %v1077
  %v1084 = vshll.u32 %v1083, 16
  %v1085 = vadd.s32 %v1084, %v1082
  %v1086 = vand.u32 %v1009, 65535
  %v1087 = vshra.s32 %v1009, 16
  %v1088 = vcvt.s32.f32 %v1086
  %v1089 = vcvt.s32.f32 %v1087
  %1090 = vmin.xlane.f32.xlu0 %v1089
  %v1091 = vpop.xlane.xlu0 %1090
  %vm1092 = vcmp.eq.f32.partialorder %v1089, %v1091
  %v1093 = vsel %vm1092, %v1088, inf
  %1094 = vmin.xlane.f32.xlu0 %v1093
  %v1095 = vpop.xlane.xlu0 %1094
  %v1096 = vcvt.f32.s32 %v1095
  %v1097 = vcvt.f32.s32 %v1091
  %v1098 = vshll.u32 %v1097, 16
  %v1099 = vadd.s32 %v1098, %v1096
  %v1100 = vand.u32 %v1010, 65535
  %v1101 = vshra.s32 %v1010, 16
  %v1102 = vcvt.s32.f32 %v1100
  %v1103 = vcvt.s32.f32 %v1101
  %1104 = vmin.xlane.f32.xlu0 %v1103
  %v1105 = vpop.xlane.xlu0 %1104
  %vm1106 = vcmp.eq.f32.partialorder %v1103, %v1105
  %v1107 = vsel %vm1106, %v1102, inf
  %1108 = vmin.xlane.f32.xlu0 %v1107
  %v1109 = vpop.xlane.xlu0 %1108
  %v1110 = vcvt.f32.s32 %v1109
  %v1111 = vcvt.f32.s32 %v1105
  %v1112 = vshll.u32 %v1111, 16
  %v1113 = vadd.s32 %v1112, %v1110
  %v1114 = vand.u32 %v1011, 65535
  %v1115 = vshra.s32 %v1011, 16
  %v1116 = vcvt.s32.f32 %v1114
  %v1117 = vcvt.s32.f32 %v1115
  %1118 = vmin.xlane.f32.xlu0 %v1117
  %v1119 = vpop.xlane.xlu0 %1118
  %vm1120 = vcmp.eq.f32.partialorder %v1117, %v1119
  %v1121 = vsel %vm1120, %v1116, inf
  %1122 = vmin.xlane.f32.xlu0 %v1121
  %v1123 = vpop.xlane.xlu0 %1122
  %v1124 = vcvt.f32.s32 %v1123
  %v1125 = vcvt.f32.s32 %v1119
  %v1126 = vshll.u32 %v1125, 16
  %v1127 = vadd.s32 %v1126, %v1124
  %v1128 = vand.u32 %v1012, 65535
  %v1129 = vshra.s32 %v1012, 16
  %v1130 = vcvt.s32.f32 %v1128
  %v1131 = vcvt.s32.f32 %v1129
  %1132 = vmin.xlane.f32.xlu0 %v1131
  %v1133 = vpop.xlane.xlu0 %1132
  %vm1134 = vcmp.eq.f32.partialorder %v1131, %v1133
  %v1135 = vsel %vm1134, %v1130, inf
  %1136 = vmin.xlane.f32.xlu0 %v1135
  %v1137 = vpop.xlane.xlu0 %1136
  %v1138 = vcvt.f32.s32 %v1137
  %v1139 = vcvt.f32.s32 %v1133
  %v1140 = vshll.u32 %v1139, 16
  %v1141 = vadd.s32 %v1140, %v1138
  %v1142 = vand.u32 %v1013, 65535
  %v1143 = vshra.s32 %v1013, 16
  %v1144 = vcvt.s32.f32 %v1142
  %v1145 = vcvt.s32.f32 %v1143
  %1146 = vmin.xlane.f32.xlu0 %v1145
  %v1147 = vpop.xlane.xlu0 %1146
  %vm1148 = vcmp.eq.f32.partialorder %v1145, %v1147
  %v1149 = vsel %vm1148, %v1144, inf
  %1150 = vmin.xlane.f32.xlu0 %v1149
  %v1151 = vpop.xlane.xlu0 %1150
  %v1152 = vcvt.f32.s32 %v1151
  %v1153 = vcvt.f32.s32 %v1147
  %v1154 = vshll.u32 %v1153, 16
  %v1155 = vadd.s32 %v1154, %v1152
  %v1156 = vand.u32 %v1014, 65535
  %v1157 = vshra.s32 %v1014, 16
  %v1158 = vcvt.s32.f32 %v1156
  %v1159 = vcvt.s32.f32 %v1157
  %1160 = vmin.xlane.f32.xlu0 %v1159
  %v1161 = vpop.xlane.xlu0 %1160
  %vm1162 = vcmp.eq.f32.partialorder %v1159, %v1161
  %v1163 = vsel %vm1162, %v1158, inf
  %1164 = vmin.xlane.f32.xlu0 %v1163
  %v1165 = vpop.xlane.xlu0 %1164
  %v1166 = vcvt.f32.s32 %v1165
  %v1167 = vcvt.f32.s32 %v1161
  %v1168 = vshll.u32 %v1167, 16
  %v1169 = vadd.s32 %v1168, %v1166
  %v1170 = vand.u32 %v1015, 65535
  %v1171 = vshra.s32 %v1015, 16
  %v1172 = vcvt.s32.f32 %v1170
  %v1173 = vcvt.s32.f32 %v1171
  %1174 = vmin.xlane.f32.xlu0 %v1173
  %v1175 = vpop.xlane.xlu0 %1174
  %vm1176 = vcmp.eq.f32.partialorder %v1173, %v1175
  %v1177 = vsel %vm1176, %v1172, inf
  %1178 = vmin.xlane.f32.xlu0 %v1177
  %v1179 = vpop.xlane.xlu0 %1178
  %v1180 = vcvt.f32.s32 %v1179
  %v1181 = vcvt.f32.s32 %v1175
  %v1182 = vshll.u32 %v1181, 16
  %v1183 = vadd.s32 %v1182, %v1180
  %v1184 = vand.u32 %v1016, 65535
  %v1185 = vshra.s32 %v1016, 16
  %v1186 = vcvt.s32.f32 %v1184
  %v1187 = vcvt.s32.f32 %v1185
  %1188 = vmin.xlane.f32.xlu0 %v1187
  %v1189 = vpop.xlane.xlu0 %1188
  %vm1190 = vcmp.eq.f32.partialorder %v1187, %v1189
  %v1191 = vsel %vm1190, %v1186, inf
  %1192 = vmin.xlane.f32.xlu0 %v1191
  %v1193 = vpop.xlane.xlu0 %1192
  %v1194 = vcvt.f32.s32 %v1193
  %v1195 = vcvt.f32.s32 %v1189
  %v1196 = vshll.u32 %v1195, 16
  %v1197 = vadd.s32 %v1196, %v1194
  %v1198 = vand.u32 %v1017, 65535
  %v1199 = vshra.s32 %v1017, 16
  %v1200 = vcvt.s32.f32 %v1198
  %v1201 = vcvt.s32.f32 %v1199
  %1202 = vmin.xlane.f32.xlu0 %v1201
  %v1203 = vpop.xlane.xlu0 %1202
  %vm1204 = vcmp.eq.f32.partialorder %v1201, %v1203
  %v1205 = vsel %vm1204, %v1200, inf
  %1206 = vmin.xlane.f32.xlu0 %v1205
  %v1207 = vpop.xlane.xlu0 %1206
  %v1208 = vcvt.f32.s32 %v1207
  %v1209 = vcvt.f32.s32 %v1203
  %v1210 = vshll.u32 %v1209, 16
  %v1211 = vadd.s32 %v1210, %v1208
  %v1212 = vand.u32 %v1018, 65535
  %v1213 = vshra.s32 %v1018, 16
  %v1214 = vcvt.s32.f32 %v1212
  %v1215 = vcvt.s32.f32 %v1213
  %1216 = vmin.xlane.f32.xlu0 %v1215
  %v1217 = vpop.xlane.xlu0 %1216
  %vm1218 = vcmp.eq.f32.partialorder %v1215, %v1217
  %v1219 = vsel %vm1218, %v1214, inf
  %1220 = vmin.xlane.f32.xlu0 %v1219
  %v1221 = vpop.xlane.xlu0 %1220
  %v1222 = vcvt.f32.s32 %v1221
  %v1223 = vcvt.f32.s32 %v1217
  %v1224 = vshll.u32 %v1223, 16
  %v1225 = vadd.s32 %v1224, %v1222
  %v1226 = vand.u32 %v1019, 65535
  %v1227 = vshra.s32 %v1019, 16
  %v1228 = vcvt.s32.f32 %v1226
  %v1229 = vcvt.s32.f32 %v1227
  %1230 = vmin.xlane.f32.xlu0 %v1229
  %v1231 = vpop.xlane.xlu0 %1230
  %vm1232 = vcmp.eq.f32.partialorder %v1229, %v1231
  %v1233 = vsel %vm1232, %v1228, inf
  %1234 = vmin.xlane.f32.xlu0 %v1233
  %v1235 = vpop.xlane.xlu0 %1234
  %v1236 = vcvt.f32.s32 %v1235
  %v1237 = vcvt.f32.s32 %v1231
  %v1238 = vshll.u32 %v1237, 16
  %v1239 = vadd.s32 %v1238, %v1236
  %v1240 = vand.u32 %v1020, 65535
  %v1241 = vshra.s32 %v1020, 16
  %v1242 = vcvt.s32.f32 %v1240
  %v1243 = vcvt.s32.f32 %v1241
  %1244 = vmin.xlane.f32.xlu0 %v1243
  %v1245 = vpop.xlane.xlu0 %1244
  %vm1246 = vcmp.eq.f32.partialorder %v1243, %v1245
  %v1247 = vsel %vm1246, %v1242, inf
  %1248 = vmin.xlane.f32.xlu0 %v1247
  %v1249 = vpop.xlane.xlu0 %1248
  %v1250 = vcvt.f32.s32 %v1249
  %v1251 = vcvt.f32.s32 %v1245
  %v1252 = vshll.u32 %v1251, 16
  %v1253 = vadd.s32 %v1252, %v1250
  %v1254 = vand.u32 %v1021, 65535
  %v1255 = vshra.s32 %v1021, 16
  %v1256 = vcvt.s32.f32 %v1254
  %v1257 = vcvt.s32.f32 %v1255
  %1258 = vmin.xlane.f32.xlu0 %v1257
  %v1259 = vpop.xlane.xlu0 %1258
  %vm1260 = vcmp.eq.f32.partialorder %v1257, %v1259
  %v1261 = vsel %vm1260, %v1256, inf
  %1262 = vmin.xlane.f32.xlu0 %v1261
  %v1263 = vpop.xlane.xlu0 %1262
  %v1264 = vcvt.f32.s32 %v1263
  %v1265 = vcvt.f32.s32 %v1259
  %v1266 = vshll.u32 %v1265, 16
  %v1267 = vadd.s32 %v1266, %v1264
  %v1268 = vand.u32 %v1022, 65535
  %v1269 = vshra.s32 %v1022, 16
  %v1270 = vcvt.s32.f32 %v1268
  %v1271 = vcvt.s32.f32 %v1269
  %1272 = vmin.xlane.f32.xlu0 %v1271
  %v1273 = vpop.xlane.xlu0 %1272
  %vm1274 = vcmp.eq.f32.partialorder %v1271, %v1273
  %v1275 = vsel %vm1274, %v1270, inf
  %1276 = vmin.xlane.f32.xlu0 %v1275
  %v1277 = vpop.xlane.xlu0 %1276
  %v1278 = vcvt.f32.s32 %v1277
  %v1279 = vcvt.f32.s32 %v1273
  %v1280 = vshll.u32 %v1279, 16
  %v1281 = vadd.s32 %v1280, %v1278
  %v1282 = vand.u32 %v1023, 65535
  %v1283 = vshra.s32 %v1023, 16
  %v1284 = vcvt.s32.f32 %v1282
  %v1285 = vcvt.s32.f32 %v1283
  %1286 = vmin.xlane.f32.xlu0 %v1285
  %v1287 = vpop.xlane.xlu0 %1286
  %vm1288 = vcmp.eq.f32.partialorder %v1285, %v1287
  %v1289 = vsel %vm1288, %v1284, inf
  %1290 = vmin.xlane.f32.xlu0 %v1289
  %v1291 = vpop.xlane.xlu0 %1290
  %v1292 = vcvt.f32.s32 %v1291
  %v1293 = vcvt.f32.s32 %v1287
  %v1294 = vshll.u32 %v1293, 16
  %v1295 = vadd.s32 %v1294, %v1292
  %v1296 = vand.u32 %v1024, 65535
  %v1297 = vshra.s32 %v1024, 16
  %v1298 = vcvt.s32.f32 %v1296
  %v1299 = vcvt.s32.f32 %v1297
  %1300 = vmin.xlane.f32.xlu0 %v1299
  %v1301 = vpop.xlane.xlu0 %1300
  %vm1302 = vcmp.eq.f32.partialorder %v1299, %v1301
  %v1303 = vsel %vm1302, %v1298, inf
  %1304 = vmin.xlane.f32.xlu0 %v1303
  %v1305 = vpop.xlane.xlu0 %1304
  %v1306 = vcvt.f32.s32 %v1305
  %v1307 = vcvt.f32.s32 %v1301
  %v1308 = vshll.u32 %v1307, 16
  %v1309 = vadd.s32 %v1308, %v1306
  %v1310 = vand.u32 %v1025, 65535
  %v1311 = vshra.s32 %v1025, 16
  %v1312 = vcvt.s32.f32 %v1310
  %v1313 = vcvt.s32.f32 %v1311
  %1314 = vmin.xlane.f32.xlu0 %v1313
  %v1315 = vpop.xlane.xlu0 %1314
  %vm1316 = vcmp.eq.f32.partialorder %v1313, %v1315
  %v1317 = vsel %vm1316, %v1312, inf
  %1318 = vmin.xlane.f32.xlu0 %v1317
  %v1319 = vpop.xlane.xlu0 %1318
  %v1320 = vcvt.f32.s32 %v1319
  %v1321 = vcvt.f32.s32 %v1315
  %v1322 = vshll.u32 %v1321, 16
  %v1323 = vadd.s32 %v1322, %v1320
  %v1324 = vand.u32 %v1026, 65535
  %v1325 = vshra.s32 %v1026, 16
  %v1326 = vcvt.s32.f32 %v1324
  %v1327 = vcvt.s32.f32 %v1325
  %1328 = vmin.xlane.f32.xlu0 %v1327
  %v1329 = vpop.xlane.xlu0 %1328
  %vm1330 = vcmp.eq.f32.partialorder %v1327, %v1329
  %v1331 = vsel %vm1330, %v1326, inf
  %1332 = vmin.xlane.f32.xlu0 %v1331
  %v1333 = vpop.xlane.xlu0 %1332
  %v1334 = vcvt.f32.s32 %v1333
  %v1335 = vcvt.f32.s32 %v1329
  %v1336 = vshll.u32 %v1335, 16
  %v1337 = vadd.s32 %v1336, %v1334
  %v1338 = vand.u32 %v1027, 65535
  %v1339 = vshra.s32 %v1027, 16
  %v1340 = vcvt.s32.f32 %v1338
  %v1341 = vcvt.s32.f32 %v1339
  %1342 = vmin.xlane.f32.xlu0 %v1341
  %v1343 = vpop.xlane.xlu0 %1342
  %vm1344 = vcmp.eq.f32.partialorder %v1341, %v1343
  %v1345 = vsel %vm1344, %v1340, inf
  %1346 = vmin.xlane.f32.xlu0 %v1345
  %v1347 = vpop.xlane.xlu0 %1346
  %v1348 = vcvt.f32.s32 %v1347
  %v1349 = vcvt.f32.s32 %v1343
  %v1350 = vshll.u32 %v1349, 16
  %v1351 = vadd.s32 %v1350, %v1348
  %v1352 = vand.u32 %v1028, 65535
  %v1353 = vshra.s32 %v1028, 16
  %v1354 = vcvt.s32.f32 %v1352
  %v1355 = vcvt.s32.f32 %v1353
  %1356 = vmin.xlane.f32.xlu0 %v1355
  %v1357 = vpop.xlane.xlu0 %1356
  %vm1358 = vcmp.eq.f32.partialorder %v1355, %v1357
  %v1359 = vsel %vm1358, %v1354, inf
  %1360 = vmin.xlane.f32.xlu0 %v1359
  %v1361 = vpop.xlane.xlu0 %1360
  %v1362 = vcvt.f32.s32 %v1361
  %v1363 = vcvt.f32.s32 %v1357
  %v1364 = vshll.u32 %v1363, 16
  %v1365 = vadd.s32 %v1364, %v1362
  %v1366 = vand.u32 %v1029, 65535
  %v1367 = vshra.s32 %v1029, 16
  %v1368 = vcvt.s32.f32 %v1366
  %v1369 = vcvt.s32.f32 %v1367
  %1370 = vmin.xlane.f32.xlu0 %v1369
  %v1371 = vpop.xlane.xlu0 %1370
  %vm1372 = vcmp.eq.f32.partialorder %v1369, %v1371
  %v1373 = vsel %vm1372, %v1368, inf
  %1374 = vmin.xlane.f32.xlu0 %v1373
  %v1375 = vpop.xlane.xlu0 %1374
  %v1376 = vcvt.f32.s32 %v1375
  %v1377 = vcvt.f32.s32 %v1371
  %v1378 = vshll.u32 %v1377, 16
  %v1379 = vadd.s32 %v1378, %v1376
  %v1380 = vand.u32 %v1030, 65535
  %v1381 = vshra.s32 %v1030, 16
  %v1382 = vcvt.s32.f32 %v1380
  %v1383 = vcvt.s32.f32 %v1381
  %1384 = vmin.xlane.f32.xlu0 %v1383
  %v1385 = vpop.xlane.xlu0 %1384
  %vm1386 = vcmp.eq.f32.partialorder %v1383, %v1385
  %v1387 = vsel %vm1386, %v1382, inf
  %1388 = vmin.xlane.f32.xlu0 %v1387
  %v1389 = vpop.xlane.xlu0 %1388
  %v1390 = vcvt.f32.s32 %v1389
  %v1391 = vcvt.f32.s32 %v1385
  %v1392 = vshll.u32 %v1391, 16
  %v1393 = vadd.s32 %v1392, %v1390
  %v1394 = vand.u32 %v1031, 65535
  %v1395 = vshra.s32 %v1031, 16
  %v1396 = vcvt.s32.f32 %v1394
  %v1397 = vcvt.s32.f32 %v1395
  %1398 = vmin.xlane.f32.xlu0 %v1397
  %v1399 = vpop.xlane.xlu0 %1398
  %vm1400 = vcmp.eq.f32.partialorder %v1397, %v1399
  %v1401 = vsel %vm1400, %v1396, inf
  %1402 = vmin.xlane.f32.xlu0 %v1401
  %v1403 = vpop.xlane.xlu0 %1402
  %v1404 = vcvt.f32.s32 %v1403
  %v1405 = vcvt.f32.s32 %v1399
  %v1406 = vshll.u32 %v1405, 16
  %v1407 = vadd.s32 %v1406, %v1404
  %v1408 = vand.u32 %v1032, 65535
  %v1409 = vshra.s32 %v1032, 16
  %v1410 = vcvt.s32.f32 %v1408
  %v1411 = vcvt.s32.f32 %v1409
  %1412 = vmin.xlane.f32.xlu0 %v1411
  %v1413 = vpop.xlane.xlu0 %1412
  %vm1414 = vcmp.eq.f32.partialorder %v1411, %v1413
  %v1415 = vsel %vm1414, %v1410, inf
  %1416 = vmin.xlane.f32.xlu0 %v1415
  %v1417 = vpop.xlane.xlu0 %1416
  %v1418 = vcvt.f32.s32 %v1417
  %v1419 = vcvt.f32.s32 %v1413
  %v1420 = vshll.u32 %v1419, 16
  %v1421 = vadd.s32 %v1420, %v1418
  %v1422 = vand.u32 %v1033, 65535
  %v1423 = vshra.s32 %v1033, 16
  %v1424 = vcvt.s32.f32 %v1422
  %v1425 = vcvt.s32.f32 %v1423
  %1426 = vmin.xlane.f32.xlu0 %v1425
  %v1427 = vpop.xlane.xlu0 %1426
  %vm1428 = vcmp.eq.f32.partialorder %v1425, %v1427
  %v1429 = vsel %vm1428, %v1424, inf
  %1430 = vmin.xlane.f32.xlu0 %v1429
  %v1431 = vpop.xlane.xlu0 %1430
  %v1432 = vcvt.f32.s32 %v1431
  %v1433 = vcvt.f32.s32 %v1427
  %v1434 = vshll.u32 %v1433, 16
  %v1435 = vadd.s32 %v1434, %v1432
  %v1436 = vand.u32 %v1034, 65535
  %v1437 = vshra.s32 %v1034, 16
  %v1438 = vcvt.s32.f32 %v1436
  %v1439 = vcvt.s32.f32 %v1437
  %1440 = vmin.xlane.f32.xlu0 %v1439
  %v1441 = vpop.xlane.xlu0 %1440
  %vm1442 = vcmp.eq.f32.partialorder %v1439, %v1441
  %v1443 = vsel %vm1442, %v1438, inf
  %1444 = vmin.xlane.f32.xlu0 %v1443
  %v1445 = vpop.xlane.xlu0 %1444
  %v1446 = vcvt.f32.s32 %v1445
  %v1447 = vcvt.f32.s32 %v1441
  %v1448 = vshll.u32 %v1447, 16
  %v1449 = vadd.s32 %v1448, %v1446
  %v1450 = vand.u32 %v1035, 65535
  %v1451 = vshra.s32 %v1035, 16
  %v1452 = vcvt.s32.f32 %v1450
  %v1453 = vcvt.s32.f32 %v1451
  %1454 = vmin.xlane.f32.xlu0 %v1453
  %v1455 = vpop.xlane.xlu0 %1454
  %vm1456 = vcmp.eq.f32.partialorder %v1453, %v1455
  %v1457 = vsel %vm1456, %v1452, inf
  %1458 = vmin.xlane.f32.xlu0 %v1457
  %v1459 = vpop.xlane.xlu0 %1458
  %v1460 = vcvt.f32.s32 %v1459
  %v1461 = vcvt.f32.s32 %v1455
  %v1462 = vshll.u32 %v1461, 16
  %v1463 = vadd.s32 %v1462, %v1460
  %v1464 = vand.u32 %v1036, 65535
  %v1465 = vshra.s32 %v1036, 16
  %v1466 = vcvt.s32.f32 %v1464
  %v1467 = vcvt.s32.f32 %v1465
  %1468 = vmin.xlane.f32.xlu0 %v1467
  %v1469 = vpop.xlane.xlu0 %1468
  %vm1470 = vcmp.eq.f32.partialorder %v1467, %v1469
  %v1471 = vsel %vm1470, %v1466, inf
  %1472 = vmin.xlane.f32.xlu0 %v1471
  %v1473 = vpop.xlane.xlu0 %1472
  %v1474 = vcvt.f32.s32 %v1473
  %v1475 = vcvt.f32.s32 %v1469
  %v1476 = vshll.u32 %v1475, 16
  %v1477 = vadd.s32 %v1476, %v1474
  %v1478 = vand.u32 %v1037, 65535
  %v1479 = vshra.s32 %v1037, 16
  %v1480 = vcvt.s32.f32 %v1478
  %v1481 = vcvt.s32.f32 %v1479
  %1482 = vmin.xlane.f32.xlu0 %v1481
  %v1483 = vpop.xlane.xlu0 %1482
  %vm1484 = vcmp.eq.f32.partialorder %v1481, %v1483
  %v1485 = vsel %vm1484, %v1480, inf
  %1486 = vmin.xlane.f32.xlu0 %v1485
  %v1487 = vpop.xlane.xlu0 %1486
  %v1488 = vcvt.f32.s32 %v1487
  %v1489 = vcvt.f32.s32 %v1483
  %v1490 = vshll.u32 %v1489, 16
  %v1491 = vadd.s32 %v1490, %v1488
  %v1492 = vand.u32 %v1038, 65535
  %v1493 = vshra.s32 %v1038, 16
  %v1494 = vcvt.s32.f32 %v1492
  %v1495 = vcvt.s32.f32 %v1493
  %1496 = vmin.xlane.f32.xlu0 %v1495
  %v1497 = vpop.xlane.xlu0 %1496
  %vm1498 = vcmp.eq.f32.partialorder %v1495, %v1497
  %v1499 = vsel %vm1498, %v1494, inf
  %1500 = vmin.xlane.f32.xlu0 %v1499
  %v1501 = vpop.xlane.xlu0 %1500
  %v1502 = vcvt.f32.s32 %v1501
  %v1503 = vcvt.f32.s32 %v1497
  %v1504 = vshll.u32 %v1503, 16
  %v1505 = vadd.s32 %v1504, %v1502
  %v1506 = vand.u32 %v1039, 65535
  %v1507 = vshra.s32 %v1039, 16
  %v1508 = vcvt.s32.f32 %v1506
  %v1509 = vcvt.s32.f32 %v1507
  %1510 = vmin.xlane.f32.xlu0 %v1509
  %v1511 = vpop.xlane.xlu0 %1510
  %vm1512 = vcmp.eq.f32.partialorder %v1509, %v1511
  %v1513 = vsel %vm1512, %v1508, inf
  %1514 = vmin.xlane.f32.xlu0 %v1513
  %v1515 = vpop.xlane.xlu0 %1514
  %v1516 = vcvt.f32.s32 %v1515
  %v1517 = vcvt.f32.s32 %v1511
  %v1518 = vshll.u32 %v1517, 16
  %v1519 = vadd.s32 %v1518, %v1516
  %v1520 = vand.u32 %v1040, 65535
  %v1521 = vshra.s32 %v1040, 16
  %v1522 = vcvt.s32.f32 %v1520
  %v1523 = vcvt.s32.f32 %v1521
  %1524 = vmin.xlane.f32.xlu0 %v1523
  %v1525 = vpop.xlane.xlu0 %1524
  %vm1526 = vcmp.eq.f32.partialorder %v1523, %v1525
  %v1527 = vsel %vm1526, %v1522, inf
  %1528 = vmin.xlane.f32.xlu0 %v1527
  %v1529 = vpop.xlane.xlu0 %1528
  %v1530 = vcvt.f32.s32 %v1529
  %v1531 = vcvt.f32.s32 %v1525
  %v1532 = vshll.u32 %v1531, 16
  %v1533 = vadd.s32 %v1532, %v1530
  %v1534 = vand.u32 %v1041, 65535
  %v1535 = vshra.s32 %v1041, 16
  %v1536 = vcvt.s32.f32 %v1534
  %v1537 = vcvt.s32.f32 %v1535
  %1538 = vmin.xlane.f32.xlu0 %v1537
  %v1539 = vpop.xlane.xlu0 %1538
  %vm1540 = vcmp.eq.f32.partialorder %v1537, %v1539
  %v1541 = vsel %vm1540, %v1536, inf
  %1542 = vmin.xlane.f32.xlu0 %v1541
  %v1543 = vpop.xlane.xlu0 %1542
  %v1544 = vcvt.f32.s32 %v1543
  %v1545 = vcvt.f32.s32 %v1539
  %v1546 = vshll.u32 %v1545, 16
  %v1547 = vadd.s32 %v1546, %v1544
  %v1548 = vand.u32 %v1042, 65535
  %v1549 = vshra.s32 %v1042, 16
  %v1550 = vcvt.s32.f32 %v1548
  %v1551 = vcvt.s32.f32 %v1549
  %1552 = vmin.xlane.f32.xlu0 %v1551
  %v1553 = vpop.xlane.xlu0 %1552
  %vm1554 = vcmp.eq.f32.partialorder %v1551, %v1553
  %v1555 = vsel %vm1554, %v1550, inf
  %1556 = vmin.xlane.f32.xlu0 %v1555
  %v1557 = vpop.xlane.xlu0 %1556
  %v1558 = vcvt.f32.s32 %v1557
  %v1559 = vcvt.f32.s32 %v1553
  %v1560 = vshll.u32 %v1559, 16
  %v1561 = vadd.s32 %v1560, %v1558
  %v1562 = vand.u32 %v1043, 65535
  %v1563 = vshra.s32 %v1043, 16
  %v1564 = vcvt.s32.f32 %v1562
  %v1565 = vcvt.s32.f32 %v1563
  %1566 = vmin.xlane.f32.xlu0 %v1565
  %v1567 = vpop.xlane.xlu0 %1566
  %vm1568 = vcmp.eq.f32.partialorder %v1565, %v1567
  %v1569 = vsel %vm1568, %v1564, inf
  %1570 = vmin.xlane.f32.xlu0 %v1569
  %v1571 = vpop.xlane.xlu0 %1570
  %v1572 = vcvt.f32.s32 %v1571
  %v1573 = vcvt.f32.s32 %v1567
  %v1574 = vshll.u32 %v1573, 16
  %v1575 = vadd.s32 %v1574, %v1572
  %v1576 = vand.u32 %v1044, 65535
  %v1577 = vshra.s32 %v1044, 16
  %v1578 = vcvt.s32.f32 %v1576
  %v1579 = vcvt.s32.f32 %v1577
  %1580 = vmin.xlane.f32.xlu0 %v1579
  %v1581 = vpop.xlane.xlu0 %1580
  %vm1582 = vcmp.eq.f32.partialorder %v1579, %v1581
  %v1583 = vsel %vm1582, %v1578, inf
  %1584 = vmin.xlane.f32.xlu0 %v1583
  %v1585 = vpop.xlane.xlu0 %1584
  %v1586 = vcvt.f32.s32 %v1585
  %v1587 = vcvt.f32.s32 %v1581
  %v1588 = vshll.u32 %v1587, 16
  %v1589 = vadd.s32 %v1588, %v1586
  %v1590 = vand.u32 %v1045, 65535
  %v1591 = vshra.s32 %v1045, 16
  %v1592 = vcvt.s32.f32 %v1590
  %v1593 = vcvt.s32.f32 %v1591
  %1594 = vmin.xlane.f32.xlu0 %v1593
  %v1595 = vpop.xlane.xlu0 %1594
  %vm1596 = vcmp.eq.f32.partialorder %v1593, %v1595
  %v1597 = vsel %vm1596, %v1592, inf
  %1598 = vmin.xlane.f32.xlu0 %v1597
  %v1599 = vpop.xlane.xlu0 %1598
  %v1600 = vcvt.f32.s32 %v1599
  %v1601 = vcvt.f32.s32 %v1595
  %v1602 = vshll.u32 %v1601, 16
  %v1603 = vadd.s32 %v1602, %v1600
  %v1604 = vand.u32 %v1046, 65535
  %v1605 = vshra.s32 %v1046, 16
  %v1606 = vcvt.s32.f32 %v1604
  %v1607 = vcvt.s32.f32 %v1605
  %1608 = vmin.xlane.f32.xlu0 %v1607
  %v1609 = vpop.xlane.xlu0 %1608
  %vm1610 = vcmp.eq.f32.partialorder %v1607, %v1609
  %v1611 = vsel %vm1610, %v1606, inf
  %1612 = vmin.xlane.f32.xlu0 %v1611
  %v1613 = vpop.xlane.xlu0 %1612
  %v1614 = vcvt.f32.s32 %v1613
  %v1615 = vcvt.f32.s32 %v1609
  %v1616 = vshll.u32 %v1615, 16
  %v1617 = vadd.s32 %v1616, %v1614
  %v1618 = vand.u32 %v1047, 65535
  %v1619 = vshra.s32 %v1047, 16
  %v1620 = vcvt.s32.f32 %v1618
  %v1621 = vcvt.s32.f32 %v1619
  %1622 = vmin.xlane.f32.xlu0 %v1621
  %v1623 = vpop.xlane.xlu0 %1622
  %vm1624 = vcmp.eq.f32.partialorder %v1621, %v1623
  %v1625 = vsel %vm1624, %v1620, inf
  %1626 = vmin.xlane.f32.xlu0 %v1625
  %v1627 = vpop.xlane.xlu0 %1626
  %v1628 = vcvt.f32.s32 %v1627
  %v1629 = vcvt.f32.s32 %v1623
  %v1630 = vshll.u32 %v1629, 16
  %v1631 = vadd.s32 %v1630, %v1628
  %v1632 = vand.u32 %v1048, 65535
  %v1633 = vshra.s32 %v1048, 16
  %v1634 = vcvt.s32.f32 %v1632
  %v1635 = vcvt.s32.f32 %v1633
  %1636 = vmin.xlane.f32.xlu0 %v1635
  %v1637 = vpop.xlane.xlu0 %1636
  %vm1638 = vcmp.eq.f32.partialorder %v1635, %v1637
  %v1639 = vsel %vm1638, %v1634, inf
  %1640 = vmin.xlane.f32.xlu0 %v1639
  %v1641 = vpop.xlane.xlu0 %1640
  %v1642 = vcvt.f32.s32 %v1641
  %v1643 = vcvt.f32.s32 %v1637
  %v1644 = vshll.u32 %v1643, 16
  %v1645 = vadd.s32 %v1644, %v1642
  %v1646 = vand.u32 %v1049, 65535
  %v1647 = vshra.s32 %v1049, 16
  %v1648 = vcvt.s32.f32 %v1646
  %v1649 = vcvt.s32.f32 %v1647
  %1650 = vmin.xlane.f32.xlu0 %v1649
  %v1651 = vpop.xlane.xlu0 %1650
  %vm1652 = vcmp.eq.f32.partialorder %v1649, %v1651
  %v1653 = vsel %vm1652, %v1648, inf
  %1654 = vmin.xlane.f32.xlu0 %v1653
  %v1655 = vpop.xlane.xlu0 %1654
  %v1656 = vcvt.f32.s32 %v1655
  %v1657 = vcvt.f32.s32 %v1651
  %v1658 = vshll.u32 %v1657, 16
  %v1659 = vadd.s32 %v1658, %v1656
  %v1660 = vand.u32 %v1050, 65535
  %v1661 = vshra.s32 %v1050, 16
  %v1662 = vcvt.s32.f32 %v1660
  %v1663 = vcvt.s32.f32 %v1661
  %1664 = vmin.xlane.f32.xlu0 %v1663
  %v1665 = vpop.xlane.xlu0 %1664
  %vm1666 = vcmp.eq.f32.partialorder %v1663, %v1665
  %v1667 = vsel %vm1666, %v1662, inf
  %1668 = vmin.xlane.f32.xlu0 %v1667
  %v1669 = vpop.xlane.xlu0 %1668
  %v1670 = vcvt.f32.s32 %v1669
  %v1671 = vcvt.f32.s32 %v1665
  %v1672 = vshll.u32 %v1671, 16
  %v1673 = vadd.s32 %v1672, %v1670
  %v1674 = vand.u32 %v1051, 65535
  %v1675 = vshra.s32 %v1051, 16
  %v1676 = vcvt.s32.f32 %v1674
  %v1677 = vcvt.s32.f32 %v1675
  %1678 = vmin.xlane.f32.xlu0 %v1677
  %v1679 = vpop.xlane.xlu0 %1678
  %vm1680 = vcmp.eq.f32.partialorder %v1677, %v1679
  %v1681 = vsel %vm1680, %v1676, inf
  %1682 = vmin.xlane.f32.xlu0 %v1681
  %v1683 = vpop.xlane.xlu0 %1682
  %v1684 = vcvt.f32.s32 %v1683
  %v1685 = vcvt.f32.s32 %v1679
  %v1686 = vshll.u32 %v1685, 16
  %v1687 = vadd.s32 %v1686, %v1684
  %v1688 = vand.u32 %v1052, 65535
  %v1689 = vshra.s32 %v1052, 16
  %v1690 = vcvt.s32.f32 %v1688
  %v1691 = vcvt.s32.f32 %v1689
  %1692 = vmin.xlane.f32.xlu0 %v1691
  %v1693 = vpop.xlane.xlu0 %1692
  %vm1694 = vcmp.eq.f32.partialorder %v1691, %v1693
  %v1695 = vsel %vm1694, %v1690, inf
  %1696 = vmin.xlane.f32.xlu0 %v1695
  %v1697 = vpop.xlane.xlu0 %1696
  %v1698 = vcvt.f32.s32 %v1697
  %v1699 = vcvt.f32.s32 %v1693
  %v1700 = vshll.u32 %v1699, 16
  %v1701 = vadd.s32 %v1700, %v1698
  %v1702 = vand.u32 %v1053, 65535
  %v1703 = vshra.s32 %v1053, 16
  %v1704 = vcvt.s32.f32 %v1702
  %v1705 = vcvt.s32.f32 %v1703
  %1706 = vmin.xlane.f32.xlu0 %v1705
  %v1707 = vpop.xlane.xlu0 %1706
  %vm1708 = vcmp.eq.f32.partialorder %v1705, %v1707
  %v1709 = vsel %vm1708, %v1704, inf
  %1710 = vmin.xlane.f32.xlu0 %v1709
  %v1711 = vpop.xlane.xlu0 %1710
  %v1712 = vcvt.f32.s32 %v1711
  %v1713 = vcvt.f32.s32 %v1707
  %v1714 = vshll.u32 %v1713, 16
  %v1715 = vadd.s32 %v1714, %v1712
  %v1716 = vand.u32 %v1054, 65535
  %v1717 = vshra.s32 %v1054, 16
  %v1718 = vcvt.s32.f32 %v1716
  %v1719 = vcvt.s32.f32 %v1717
  %1720 = vmin.xlane.f32.xlu0 %v1719
  %v1721 = vpop.xlane.xlu0 %1720
  %vm1722 = vcmp.eq.f32.partialorder %v1719, %v1721
  %v1723 = vsel %vm1722, %v1718, inf
  %1724 = vmin.xlane.f32.xlu0 %v1723
  %v1725 = vpop.xlane.xlu0 %1724
  %v1726 = vcvt.f32.s32 %v1725
  %v1727 = vcvt.f32.s32 %v1721
  %v1728 = vshll.u32 %v1727, 16
  %v1729 = vadd.s32 %v1728, %v1726
  %v1730 = vand.u32 %v1055, 65535
  %v1731 = vshra.s32 %v1055, 16
  %v1732 = vcvt.s32.f32 %v1730
  %v1733 = vcvt.s32.f32 %v1731
  %1734 = vmin.xlane.f32.xlu0 %v1733
  %v1735 = vpop.xlane.xlu0 %1734
  %vm1736 = vcmp.eq.f32.partialorder %v1733, %v1735
  %v1737 = vsel %vm1736, %v1732, inf
  %1738 = vmin.xlane.f32.xlu0 %v1737
  %v1739 = vpop.xlane.xlu0 %1738
  %v1740 = vcvt.f32.s32 %v1739
  %v1741 = vcvt.f32.s32 %v1735
  %v1742 = vshll.u32 %v1741, 16
  %v1743 = vadd.s32 %v1742, %v1740
  %v1744 = vand.u32 %v1056, 65535
  %v1745 = vshra.s32 %v1056, 16
  %v1746 = vcvt.s32.f32 %v1744
  %v1747 = vcvt.s32.f32 %v1745
  %1748 = vmin.xlane.f32.xlu0 %v1747
  %v1749 = vpop.xlane.xlu0 %1748
  %vm1750 = vcmp.eq.f32.partialorder %v1747, %v1749
  %v1751 = vsel %vm1750, %v1746, inf
  %1752 = vmin.xlane.f32.xlu0 %v1751
  %v1753 = vpop.xlane.xlu0 %1752
  %v1754 = vcvt.f32.s32 %v1753
  %v1755 = vcvt.f32.s32 %v1749
  %v1756 = vshll.u32 %v1755, 16
  %v1757 = vadd.s32 %v1756, %v1754
  %v1758 = vand.u32 %v1057, 65535
  %v1759 = vshra.s32 %v1057, 16
  %v1760 = vcvt.s32.f32 %v1758
  %v1761 = vcvt.s32.f32 %v1759
  %1762 = vmin.xlane.f32.xlu0 %v1761
  %v1763 = vpop.xlane.xlu0 %1762
  %vm1764 = vcmp.eq.f32.partialorder %v1761, %v1763
  %v1765 = vsel %vm1764, %v1760, inf
  %1766 = vmin.xlane.f32.xlu0 %v1765
  %v1767 = vpop.xlane.xlu0 %1766
  %v1768 = vcvt.f32.s32 %v1767
  %v1769 = vcvt.f32.s32 %v1763
  %v1770 = vshll.u32 %v1769, 16
  %v1771 = vadd.s32 %v1770, %v1768
  %v1772 = vand.u32 %v1058, 65535
  %v1773 = vshra.s32 %v1058, 16
  %v1774 = vcvt.s32.f32 %v1772
  %v1775 = vcvt.s32.f32 %v1773
  %1776 = vmin.xlane.f32.xlu0 %v1775
  %v1777 = vpop.xlane.xlu0 %1776
  %vm1778 = vcmp.eq.f32.partialorder %v1775, %v1777
  %v1779 = vsel %vm1778, %v1774, inf
  %1780 = vmin.xlane.f32.xlu0 %v1779
  %v1781 = vpop.xlane.xlu0 %1780
  %v1782 = vcvt.f32.s32 %v1781
  %v1783 = vcvt.f32.s32 %v1777
  %v1784 = vshll.u32 %v1783, 16
  %v1785 = vadd.s32 %v1784, %v1782
  %v1786 = vand.u32 %v1059, 65535
  %v1787 = vshra.s32 %v1059, 16
  %v1788 = vcvt.s32.f32 %v1786
  %v1789 = vcvt.s32.f32 %v1787
  %1790 = vmin.xlane.f32.xlu0 %v1789
  %v1791 = vpop.xlane.xlu0 %1790
  %vm1792 = vcmp.eq.f32.partialorder %v1789, %v1791
  %v1793 = vsel %vm1792, %v1788, inf
  %1794 = vmin.xlane.f32.xlu0 %v1793
  %v1795 = vpop.xlane.xlu0 %1794
  %v1796 = vcvt.f32.s32 %v1795
  %v1797 = vcvt.f32.s32 %v1791
  %v1798 = vshll.u32 %v1797, 16
  %v1799 = vadd.s32 %v1798, %v1796
  %v1800 = vand.u32 %v1060, 65535
  %v1801 = vshra.s32 %v1060, 16
  %v1802 = vcvt.s32.f32 %v1800
  %v1803 = vcvt.s32.f32 %v1801
  %1804 = vmin.xlane.f32.xlu0 %v1803
  %v1805 = vpop.xlane.xlu0 %1804
  %vm1806 = vcmp.eq.f32.partialorder %v1803, %v1805
  %v1807 = vsel %vm1806, %v1802, inf
  %1808 = vmin.xlane.f32.xlu0 %v1807
  %v1809 = vpop.xlane.xlu0 %1808
  %v1810 = vcvt.f32.s32 %v1809
  %v1811 = vcvt.f32.s32 %v1805
  %v1812 = vshll.u32 %v1811, 16
  %v1813 = vadd.s32 %v1812, %v1810
  %v1814 = vand.u32 %v1061, 65535
  %v1815 = vshra.s32 %v1061, 16
  %v1816 = vcvt.s32.f32 %v1814
  %v1817 = vcvt.s32.f32 %v1815
  %1818 = vmin.xlane.f32.xlu0 %v1817
  %v1819 = vpop.xlane.xlu0 %1818
  %vm1820 = vcmp.eq.f32.partialorder %v1817, %v1819
  %v1821 = vsel %vm1820, %v1816, inf
  %1822 = vmin.xlane.f32.xlu0 %v1821
  %v1823 = vpop.xlane.xlu0 %1822
  %v1824 = vcvt.f32.s32 %v1823
  %v1825 = vcvt.f32.s32 %v1819
  %v1826 = vshll.u32 %v1825, 16
  %v1827 = vadd.s32 %v1826, %v1824
  %v1828 = vand.u32 %v1062, 65535
  %v1829 = vshra.s32 %v1062, 16
  %v1830 = vcvt.s32.f32 %v1828
  %v1831 = vcvt.s32.f32 %v1829
  %1832 = vmin.xlane.f32.xlu0 %v1831
  %v1833 = vpop.xlane.xlu0 %1832
  %vm1834 = vcmp.eq.f32.partialorder %v1831, %v1833
  %v1835 = vsel %vm1834, %v1830, inf
  %1836 = vmin.xlane.f32.xlu0 %v1835
  %v1837 = vpop.xlane.xlu0 %1836
  %v1838 = vcvt.f32.s32 %v1837
  %v1839 = vcvt.f32.s32 %v1833
  %v1840 = vshll.u32 %v1839, 16
  %v1841 = vadd.s32 %v1840, %v1838
  %v1842 = vand.u32 %v1063, 65535
  %v1843 = vshra.s32 %v1063, 16
  %v1844 = vcvt.s32.f32 %v1842
  %v1845 = vcvt.s32.f32 %v1843
  %1846 = vmin.xlane.f32.xlu0 %v1845
  %v1847 = vpop.xlane.xlu0 %1846
  %vm1848 = vcmp.eq.f32.partialorder %v1845, %v1847
  %v1849 = vsel %vm1848, %v1844, inf
  %1850 = vmin.xlane.f32.xlu0 %v1849
  %v1851 = vpop.xlane.xlu0 %1850
  %v1852 = vcvt.f32.s32 %v1851
  %v1853 = vcvt.f32.s32 %v1847
  %v1854 = vshll.u32 %v1853, 16
  %v1855 = vadd.s32 %v1854, %v1852
  %v1856 = vand.u32 %v1064, 65535
  %v1857 = vshra.s32 %v1064, 16
  %v1858 = vcvt.s32.f32 %v1856
  %v1859 = vcvt.s32.f32 %v1857
  %1860 = vmin.xlane.f32.xlu0 %v1859
  %v1861 = vpop.xlane.xlu0 %1860
  %vm1862 = vcmp.eq.f32.partialorder %v1859, %v1861
  %v1863 = vsel %vm1862, %v1858, inf
  %1864 = vmin.xlane.f32.xlu0 %v1863
  %v1865 = vpop.xlane.xlu0 %1864
  %v1866 = vcvt.f32.s32 %v1865
  %v1867 = vcvt.f32.s32 %v1861
  %v1868 = vshll.u32 %v1867, 16
  %v1869 = vadd.s32 %v1868, %v1866
  %v1870 = vand.u32 %v1065, 65535
  %v1871 = vshra.s32 %v1065, 16
  %v1872 = vcvt.s32.f32 %v1870
  %v1873 = vcvt.s32.f32 %v1871
  %1874 = vmin.xlane.f32.xlu0 %v1873
  %v1875 = vpop.xlane.xlu0 %1874
  %vm1876 = vcmp.eq.f32.partialorder %v1873, %v1875
  %v1877 = vsel %vm1876, %v1872, inf
  %1878 = vmin.xlane.f32.xlu0 %v1877
  %v1879 = vpop.xlane.xlu0 %1878
  %v1880 = vcvt.f32.s32 %v1879
  %v1881 = vcvt.f32.s32 %v1875
  %v1882 = vshll.u32 %v1881, 16
  %v1883 = vadd.s32 %v1882, %v1880
  %v1884 = vand.u32 %v1066, 65535
  %v1885 = vshra.s32 %v1066, 16
  %v1886 = vcvt.s32.f32 %v1884
  %v1887 = vcvt.s32.f32 %v1885
  %1888 = vmin.xlane.f32.xlu0 %v1887
  %v1889 = vpop.xlane.xlu0 %1888
  %vm1890 = vcmp.eq.f32.partialorder %v1887, %v1889
  %v1891 = vsel %vm1890, %v1886, inf
  %1892 = vmin.xlane.f32.xlu0 %v1891
  %v1893 = vpop.xlane.xlu0 %1892
  %v1894 = vcvt.f32.s32 %v1893
  %v1895 = vcvt.f32.s32 %v1889
  %v1896 = vshll.u32 %v1895, 16
  %v1897 = vadd.s32 %v1896, %v1894
  %v1898 = vand.u32 %v1067, 65535
  %v1899 = vshra.s32 %v1067, 16
  %v1900 = vcvt.s32.f32 %v1898
  %v1901 = vcvt.s32.f32 %v1899
  %1902 = vmin.xlane.f32.xlu0 %v1901
  %v1903 = vpop.xlane.xlu0 %1902
  %vm1904 = vcmp.eq.f32.partialorder %v1901, %v1903
  %v1905 = vsel %vm1904, %v1900, inf
  %1906 = vmin.xlane.f32.xlu0 %v1905
  %v1907 = vpop.xlane.xlu0 %1906
  %v1908 = vcvt.f32.s32 %v1907
  %v1909 = vcvt.f32.s32 %v1903
  %v1910 = vshll.u32 %v1909, 16
  %v1911 = vadd.s32 %v1910, %v1908
  %v1912 = vand.u32 %v1068, 65535
  %v1913 = vshra.s32 %v1068, 16
  %v1914 = vcvt.s32.f32 %v1912
  %v1915 = vcvt.s32.f32 %v1913
  %1916 = vmin.xlane.f32.xlu0 %v1915
  %v1917 = vpop.xlane.xlu0 %1916
  %vm1918 = vcmp.eq.f32.partialorder %v1915, %v1917
  %v1919 = vsel %vm1918, %v1914, inf
  %1920 = vmin.xlane.f32.xlu0 %v1919
  %v1921 = vpop.xlane.xlu0 %1920
  %v1922 = vcvt.f32.s32 %v1921
  %v1923 = vcvt.f32.s32 %v1917
  %v1924 = vshll.u32 %v1923, 16
  %v1925 = vadd.s32 %v1924, %v1922
  %v1926 = vand.u32 %v1069, 65535
  %v1927 = vshra.s32 %v1069, 16
  %v1928 = vcvt.s32.f32 %v1926
  %v1929 = vcvt.s32.f32 %v1927
  %1930 = vmin.xlane.f32.xlu0 %v1929
  %v1931 = vpop.xlane.xlu0 %1930
  %vm1932 = vcmp.eq.f32.partialorder %v1929, %v1931
  %v1933 = vsel %vm1932, %v1928, inf
  %1934 = vmin.xlane.f32.xlu0 %v1933
  %v1935 = vpop.xlane.xlu0 %1934
  %v1936 = vcvt.f32.s32 %v1935
  %v1937 = vcvt.f32.s32 %v1931
  %v1938 = vshll.u32 %v1937, 16
  %v1939 = vadd.s32 %v1938, %v1936
  %v1940 = vand.u32 %v1070, 65535
  %v1941 = vshra.s32 %v1070, 16
  %v1942 = vcvt.s32.f32 %v1940
  %v1943 = vcvt.s32.f32 %v1941
  %1944 = vmin.xlane.f32.xlu0 %v1943
  %v1945 = vpop.xlane.xlu0 %1944
  %vm1946 = vcmp.eq.f32.partialorder %v1943, %v1945
  %v1947 = vsel %vm1946, %v1942, inf
  %1948 = vmin.xlane.f32.xlu0 %v1947
  %v1949 = vpop.xlane.xlu0 %1948
  %v1950 = vcvt.f32.s32 %v1949
  %v1951 = vcvt.f32.s32 %v1945
  %v1952 = vshll.u32 %v1951, 16
  %v1953 = vadd.s32 %v1952, %v1950
  %v1954 = vand.u32 %v1071, 65535
  %v1955 = vshra.s32 %v1071, 16
  %v1956 = vcvt.s32.f32 %v1954
  %v1957 = vcvt.s32.f32 %v1955
  %1958 = vmin.xlane.f32.xlu0 %v1957
  %v1959 = vpop.xlane.xlu0 %1958
  %vm1960 = vcmp.eq.f32.partialorder %v1957, %v1959
  %v1961 = vsel %vm1960, %v1956, inf
  %1962 = vmin.xlane.f32.xlu0 %v1961
  %v1963 = vpop.xlane.xlu0 %1962
  %v1964 = vcvt.f32.s32 %v1963
  %v1965 = vcvt.f32.s32 %v1959
  %v1966 = vshll.u32 %v1965, 16
  %v1967 = vadd.s32 %v1966, %v1964
  %vm1968 = vcmp.eq.s32.totalorder %v943, %v1085
  %vm1969 = vcmp.eq.s32.totalorder %v943, %v1099
  %vm1970 = vcmp.eq.s32.totalorder %v943, %v1113
  %vm1971 = vcmp.eq.s32.totalorder %v943, %v1127
  %vm1972 = vcmp.eq.s32.totalorder %v943, %v1141
  %vm1973 = vcmp.eq.s32.totalorder %v943, %v1155
  %vm1974 = vcmp.eq.s32.totalorder %v943, %v1169
  %vm1975 = vcmp.eq.s32.totalorder %v943, %v1183
  %vm1976 = vcmp.eq.s32.totalorder %v943, %v1197
  %vm1977 = vcmp.eq.s32.totalorder %v943, %v1211
  %vm1978 = vcmp.eq.s32.totalorder %v943, %v1225
  %vm1979 = vcmp.eq.s32.totalorder %v943, %v1239
  %vm1980 = vcmp.eq.s32.totalorder %v943, %v1253
  %vm1981 = vcmp.eq.s32.totalorder %v943, %v1267
  %vm1982 = vcmp.eq.s32.totalorder %v943, %v1281
  %vm1983 = vcmp.eq.s32.totalorder %v943, %v1295
  %vm1984 = vcmp.eq.s32.totalorder %v943, %v1309
  %vm1985 = vcmp.eq.s32.totalorder %v943, %v1323
  %vm1986 = vcmp.eq.s32.totalorder %v943, %v1337
  %vm1987 = vcmp.eq.s32.totalorder %v943, %v1351
  %vm1988 = vcmp.eq.s32.totalorder %v943, %v1365
  %vm1989 = vcmp.eq.s32.totalorder %v943, %v1379
  %vm1990 = vcmp.eq.s32.totalorder %v943, %v1393
  %vm1991 = vcmp.eq.s32.totalorder %v943, %v1407
  %vm1992 = vcmp.eq.s32.totalorder %v943, %v1421
  %vm1993 = vcmp.eq.s32.totalorder %v943, %v1435
  %vm1994 = vcmp.eq.s32.totalorder %v943, %v1449
  %vm1995 = vcmp.eq.s32.totalorder %v943, %v1463
  %vm1996 = vcmp.eq.s32.totalorder %v943, %v1477
  %vm1997 = vcmp.eq.s32.totalorder %v943, %v1491
  %vm1998 = vcmp.eq.s32.totalorder %v943, %v1505
  %vm1999 = vcmp.eq.s32.totalorder %v943, %v1519
  %vm2000 = vcmp.eq.s32.totalorder %v943, %v1533
  %vm2001 = vcmp.eq.s32.totalorder %v943, %v1547
  %vm2002 = vcmp.eq.s32.totalorder %v943, %v1561
  %vm2003 = vcmp.eq.s32.totalorder %v943, %v1575
  %vm2004 = vcmp.eq.s32.totalorder %v943, %v1589
  %vm2005 = vcmp.eq.s32.totalorder %v943, %v1603
  %vm2006 = vcmp.eq.s32.totalorder %v943, %v1617
  %vm2007 = vcmp.eq.s32.totalorder %v943, %v1631
  %vm2008 = vcmp.eq.s32.totalorder %v943, %v1645
  %vm2009 = vcmp.eq.s32.totalorder %v943, %v1659
  %vm2010 = vcmp.eq.s32.totalorder %v943, %v1673
  %vm2011 = vcmp.eq.s32.totalorder %v943, %v1687
  %vm2012 = vcmp.eq.s32.totalorder %v943, %v1701
  %vm2013 = vcmp.eq.s32.totalorder %v943, %v1715
  %vm2014 = vcmp.eq.s32.totalorder %v943, %v1729
  %vm2015 = vcmp.eq.s32.totalorder %v943, %v1743
  %vm2016 = vcmp.eq.s32.totalorder %v943, %v1757
  %vm2017 = vcmp.eq.s32.totalorder %v943, %v1771
  %vm2018 = vcmp.eq.s32.totalorder %v943, %v1785
  %vm2019 = vcmp.eq.s32.totalorder %v943, %v1799
  %vm2020 = vcmp.eq.s32.totalorder %v943, %v1813
  %vm2021 = vcmp.eq.s32.totalorder %v943, %v1827
  %vm2022 = vcmp.eq.s32.totalorder %v943, %v1841
  %vm2023 = vcmp.eq.s32.totalorder %v943, %v1855
  %vm2024 = vcmp.eq.s32.totalorder %v943, %v1869
  %vm2025 = vcmp.eq.s32.totalorder %v943, %v1883
  %vm2026 = vcmp.eq.s32.totalorder %v943, %v1897
  %vm2027 = vcmp.eq.s32.totalorder %v943, %v1911
  %vm2028 = vcmp.eq.s32.totalorder %v943, %v1925
  %vm2029 = vcmp.eq.s32.totalorder %v943, %v1939
  %vm2030 = vcmp.eq.s32.totalorder %v943, %v1953
  %vm2031 = vcmp.eq.s32.totalorder %v943, %v1967
  %v2032 = vsel %vm1968, 1, 0
  %v2033 = vsel %vm1969, 1, 0
  %v2034 = vsel %vm1970, 1, 0
  %v2035 = vsel %vm1971, 1, 0
  %v2036 = vsel %vm1972, 1, 0
  %v2037 = vsel %vm1973, 1, 0
  %v2038 = vsel %vm1974, 1, 0
  %v2039 = vsel %vm1975, 1, 0
  %v2040 = vsel %vm1976, 1, 0
  %v2041 = vsel %vm1977, 1, 0
  %v2042 = vsel %vm1978, 1, 0
  %v2043 = vsel %vm1979, 1, 0
  %v2044 = vsel %vm1980, 1, 0
  %v2045 = vsel %vm1981, 1, 0
  %v2046 = vsel %vm1982, 1, 0
  %v2047 = vsel %vm1983, 1, 0
  %v2048 = vsel %vm1984, 1, 0
  %v2049 = vsel %vm1985, 1, 0
  %v2050 = vsel %vm1986, 1, 0
  %v2051 = vsel %vm1987, 1, 0
  %v2052 = vsel %vm1988, 1, 0
  %v2053 = vsel %vm1989, 1, 0
  %v2054 = vsel %vm1990, 1, 0
  %v2055 = vsel %vm1991, 1, 0
  %v2056 = vsel %vm1992, 1, 0
  %v2057 = vsel %vm1993, 1, 0
  %v2058 = vsel %vm1994, 1, 0
  %v2059 = vsel %vm1995, 1, 0
  %v2060 = vsel %vm1996, 1, 0
  %v2061 = vsel %vm1997, 1, 0
  %v2062 = vsel %vm1998, 1, 0
  %v2063 = vsel %vm1999, 1, 0
  %v2064 = vsel %vm2000, 1, 0
  %v2065 = vsel %vm2001, 1, 0
  %v2066 = vsel %vm2002, 1, 0
  %v2067 = vsel %vm2003, 1, 0
  %v2068 = vsel %vm2004, 1, 0
  %v2069 = vsel %vm2005, 1, 0
  %v2070 = vsel %vm2006, 1, 0
  %v2071 = vsel %vm2007, 1, 0
  %v2072 = vsel %vm2008, 1, 0
  %v2073 = vsel %vm2009, 1, 0
  %v2074 = vsel %vm2010, 1, 0
  %v2075 = vsel %vm2011, 1, 0
  %v2076 = vsel %vm2012, 1, 0
  %v2077 = vsel %vm2013, 1, 0
  %v2078 = vsel %vm2014, 1, 0
  %v2079 = vsel %vm2015, 1, 0
  %v2080 = vsel %vm2016, 1, 0
  %v2081 = vsel %vm2017, 1, 0
  %v2082 = vsel %vm2018, 1, 0
  %v2083 = vsel %vm2019, 1, 0
  %v2084 = vsel %vm2020, 1, 0
  %v2085 = vsel %vm2021, 1, 0
  %v2086 = vsel %vm2022, 1, 0
  %v2087 = vsel %vm2023, 1, 0
  %v2088 = vsel %vm2024, 1, 0
  %v2089 = vsel %vm2025, 1, 0
  %v2090 = vsel %vm2026, 1, 0
  %v2091 = vsel %vm2027, 1, 0
  %v2092 = vsel %vm2028, 1, 0
  %v2093 = vsel %vm2029, 1, 0
  %v2094 = vsel %vm2030, 1, 0
  %v2095 = vsel %vm2031, 1, 0
  %v2096 = vcvt.s32.f32 %v2032
  %v2097 = vcvt.s32.f32 %v2033
  %v2098 = vcvt.s32.f32 %v2034
  %v2099 = vcvt.s32.f32 %v2035
  %v2100 = vcvt.s32.f32 %v2036
  %v2101 = vcvt.s32.f32 %v2037
  %v2102 = vcvt.s32.f32 %v2038
  %v2103 = vcvt.s32.f32 %v2039
  %v2104 = vcvt.s32.f32 %v2040
  %v2105 = vcvt.s32.f32 %v2041
  %v2106 = vcvt.s32.f32 %v2042
  %v2107 = vcvt.s32.f32 %v2043
  %v2108 = vcvt.s32.f32 %v2044
  %v2109 = vcvt.s32.f32 %v2045
  %v2110 = vcvt.s32.f32 %v2046
  %v2111 = vcvt.s32.f32 %v2047
  %v2112 = vcvt.s32.f32 %v2048
  %v2113 = vcvt.s32.f32 %v2049
  %v2114 = vcvt.s32.f32 %v2050
  %v2115 = vcvt.s32.f32 %v2051
  %v2116 = vcvt.s32.f32 %v2052
  %v2117 = vcvt.s32.f32 %v2053
  %v2118 = vcvt.s32.f32 %v2054
  %v2119 = vcvt.s32.f32 %v2055
  %v2120 = vcvt.s32.f32 %v2056
  %v2121 = vcvt.s32.f32 %v2057
  %v2122 = vcvt.s32.f32 %v2058
  %v2123 = vcvt.s32.f32 %v2059
  %v2124 = vcvt.s32.f32 %v2060
  %v2125 = vcvt.s32.f32 %v2061
  %v2126 = vcvt.s32.f32 %v2062
  %v2127 = vcvt.s32.f32 %v2063
  %v2128 = vcvt.s32.f32 %v2064
  %v2129 = vcvt.s32.f32 %v2065
  %v2130 = vcvt.s32.f32 %v2066
  %v2131 = vcvt.s32.f32 %v2067
  %v2132 = vcvt.s32.f32 %v2068
  %v2133 = vcvt.s32.f32 %v2069
  %v2134 = vcvt.s32.f32 %v2070
  %v2135 = vcvt.s32.f32 %v2071
  %v2136 = vcvt.s32.f32 %v2072
  %v2137 = vcvt.s32.f32 %v2073
  %v2138 = vcvt.s32.f32 %v2074
  %v2139 = vcvt.s32.f32 %v2075
  %v2140 = vcvt.s32.f32 %v2076
  %v2141 = vcvt.s32.f32 %v2077
  %v2142 = vcvt.s32.f32 %v2078
  %v2143 = vcvt.s32.f32 %v2079
  %v2144 = vcvt.s32.f32 %v2080
  %v2145 = vcvt.s32.f32 %v2081
  %v2146 = vcvt.s32.f32 %v2082
  %v2147 = vcvt.s32.f32 %v2083
  %v2148 = vcvt.s32.f32 %v2084
  %v2149 = vcvt.s32.f32 %v2085
  %v2150 = vcvt.s32.f32 %v2086
  %v2151 = vcvt.s32.f32 %v2087
  %v2152 = vcvt.s32.f32 %v2088
  %v2153 = vcvt.s32.f32 %v2089
  %v2154 = vcvt.s32.f32 %v2090
  %v2155 = vcvt.s32.f32 %v2091
  %v2156 = vcvt.s32.f32 %v2092
  %v2157 = vcvt.s32.f32 %v2093
  %v2158 = vcvt.s32.f32 %v2094
  %v2159 = vcvt.s32.f32 %v2095
  %2160 = vmatprep.subr.mxu0 0.0
  %2161 = vmatpush1.msra.mxu0 %v86
  %2162 = vmatprep.subr.mxu0 0.0
  %2163 = vmatpush1.msra.mxu0 %v87
  %2164 = vmatprep.subr.mxu0 0.0
  %2165 = vmatpush1.msra.mxu0 %v88
  %2166 = vmatprep.subr.mxu0 0.0
  %2167 = vmatpush1.msra.mxu0 %v89
  %2168 = vmatprep.subr.mxu0 0.0
  %2169 = vmatpush1.msra.mxu0 %v90
  %2170 = vmatprep.subr.mxu0 0.0
  %2171 = vmatpush1.msra.mxu0 %v91
  %2172 = vmatprep.subr.mxu0 0.0
  %2173 = vmatpush1.msra.mxu0 %v92
  %2174 = vmatprep.subr.mxu0 0.0
  %2175 = vmatpush1.msra.mxu0 %v93
  %2176 = vmatprep.subr.mxu0 0.0
  %2177 = vmatpush1.msra.mxu0 %v94
  %2178 = vmatprep.subr.mxu0 0.0
  %2179 = vmatpush1.msra.mxu0 %v95
  %2180 = vmatprep.subr.mxu0 0.0
  %2181 = vmatpush1.msra.mxu0 %v96
  %2182 = vmatprep.subr.mxu0 0.0
  %2183 = vmatpush1.msra.mxu0 %v97
  %2184 = vmatprep.subr.mxu0 0.0
  %2185 = vmatpush1.msra.mxu0 %v98
  %2186 = vmatprep.subr.mxu0 0.0
  %2187 = vmatpush1.msra.mxu0 %v99
  %2188 = vmatprep.subr.mxu0 0.0
  %2189 = vmatpush1.msra.mxu0 %v100
  %2190 = vmatprep.subr.mxu0 0.0
  %2191 = vmatpush1.msra.mxu0 %v101
  %2192 = vmatprep.subr.mxu0 0.0
  %2193 = vmatpush1.msra.mxu0 0.0
  %2194 = vmatprep.subr.mxu0 0.0
  %2195 = vmatpush1.msra.mxu0 0.0
  %2196 = vmatprep.subr.mxu0 0.0
  %2197 = vmatpush1.msra.mxu0 0.0
  %2198 = vmatprep.subr.mxu0 0.0
  %2199 = vmatpush1.msra.mxu0 0.0
  %2200 = vmatprep.subr.mxu0 0.0
  %2201 = vmatpush1.msra.mxu0 0.0
  %2202 = vmatprep.subr.mxu0 0.0
  %2203 = vmatpush1.msra.mxu0 0.0
  %2204 = vmatprep.subr.mxu0 0.0
  %2205 = vmatpush1.msra.mxu0 0.0
  %2206 = vmatprep.subr.mxu0 0.0
  %2207 = vmatpush1.msra.mxu0 0.0
  %2208 = vmatprep.subr.mxu0 0.0
  %2209 = vmatpush1.msra.mxu0 0.0
  %2210 = vmatprep.subr.mxu0 0.0
  %2211 = vmatpush1.msra.mxu0 0.0
  %2212 = vmatprep.subr.mxu0 0.0
  %2213 = vmatpush1.msra.mxu0 0.0
  %2214 = vmatprep.subr.mxu0 0.0
  %2215 = vmatpush1.msra.mxu0 0.0
  %2216 = vmatprep.subr.mxu0 0.0
  %2217 = vmatpush1.msra.mxu0 0.0
  %2218 = vmatprep.subr.mxu0 0.0
  %2219 = vmatpush1.msra.mxu0 0.0
  %2220 = vmatprep.subr.mxu0 0.0
  %2221 = vmatpush1.msra.mxu0 0.0
  %2222 = vmatprep.subr.mxu0 0.0
  %2223 = vmatpush1.msra.mxu0 0.0
  %2224 = vmatprep.mubr.f32.mxu0 0.0
  %2225 = vmatmul.mubr.f32.gmra.mrb[0].mxu0 %v2096
  %v2226 = vpop.f32.mrb[0].mxu0
  %v2227 = vadd.f32 0.0, %v2226
  %v2228 = vpop.f32.mrb[0].mxu0
  %2229 = vmatprep.mubr.f32.mxu0 0.0
  %2230 = vmatmul.mubr.f32.gmra.mrb[0].mxu0 %v2097
  %v2231 = vpop.f32.mrb[0].mxu0
  %v2232 = vadd.f32 0.0, %v2231
  %v2233 = vpop.f32.mrb[0].mxu0
  %2234 = vmatprep.mubr.f32.mxu0 0.0
  %2235 = vmatmul.mubr.f32.gmra.mrb[0].mxu0 %v2098
  %v2236 = vpop.f32.mrb[0].mxu0
  %v2237 = vadd.f32 0.0, %v2236
  %v2238 = vpop.f32.mrb[0].mxu0
  %2239 = vmatprep.mubr.f32.mxu0 0.0
  %2240 = vmatmul.mubr.f32.gmra.mrb[0].mxu0 %v2099
  %v2241 = vpop.f32.mrb[0].mxu0
  %v2242 = vadd.f32 0.0, %v2241
  %v2243 = vpop.f32.mrb[0].mxu0
  %2244 = vmatprep.mubr.f32.mxu0 0.0
  %2245 = vmatmul.mubr.f32.gmra.mrb[0].mxu0 %v2100
  %v2246 = vpop.f32.mrb[0].mxu0
  %v2247 = vadd.f32 0.0, %v2246
  %v2248 = vpop.f32.mrb[0].mxu0
  %2249 = vmatprep.mubr.f32.mxu0 0.0
  %2250 = vmatmul.mubr.f32.gmra.mrb[0].mxu0 %v2101
  %v2251 = vpop.f32.mrb[0].mxu0
  %v2252 = vadd.f32 0.0, %v2251
  %v2253 = vpop.f32.mrb[0].mxu0
  %2254 = vmatprep.mubr.f32.mxu0 0.0
  %2255 = vmatmul.mubr.f32.gmra.mrb[0].mxu0 %v2102
  %v2256 = vpop.f32.mrb[0].mxu0
  %v2257 = vadd.f32 0.0, %v2256
  %v2258 = vpop.f32.mrb[0].mxu0
  %2259 = vmatprep.mubr.f32.mxu0 0.0
  %2260 = vmatmul.mubr.f32.gmra.mrb[0].mxu0 %v2103
  %v2261 = vpop.f32.mrb[0].mxu0
  %v2262 = vadd.f32 0.0, %v2261
  %v2263 = vpop.f32.mrb[0].mxu0
  %2264 = vmatprep.mubr.f32.mxu0 0.0
  %2265 = vmatmul.mubr.f32.gmra.mrb[0].mxu0 %v2104
  %v2266 = vpop.f32.mrb[0].mxu0
  %v2267 = vadd.f32 0.0, %v2266
  %v2268 = vpop.f32.mrb[0].mxu0
  %2269 = vmatprep.mubr.f32.mxu0 0.0
  %2270 = vmatmul.mubr.f32.gmra.mrb[0].mxu0 %v2105
  %v2271 = vpop.f32.mrb[0].mxu0
  %v2272 = vadd.f32 0.0, %v2271
  %v2273 = vpop.f32.mrb[0].mxu0
  %2274 = vmatprep.mubr.f32.mxu0 0.0
  %2275 = vmatmul.mubr.f32.gmra.mrb[0].mxu0 %v2106
  %v2276 = vpop.f32.mrb[0].mxu0
  %v2277 = vadd.f32 0.0, %v2276
  %v2278 = vpop.f32.mrb[0].mxu0
  %2279 = vmatprep.mubr.f32.mxu0 0.0
  %2280 = vmatmul.mubr.f32.gmra.mrb[0].mxu0 %v2107
  %v2281 = vpop.f32.mrb[0].mxu0
  %v2282 = vadd.f32 0.0, %v2281
  %v2283 = vpop.f32.mrb[0].mxu0
  %2284 = vmatprep.mubr.f32.mxu0 0.0
  %2285 = vmatmul.mubr.f32.gmra.mrb[0].mxu0 %v2108
  %v2286 = vpop.f32.mrb[0].mxu0
  %v2287 = vadd.f32 0.0, %v2286
  %v2288 = vpop.f32.mrb[0].mxu0
  %2289 = vmatprep.mubr.f32.mxu0 0.0
  %2290 = vmatmul.mubr.f32.gmra.mrb[0].mxu0 %v2109
  %v2291 = vpop.f32.mrb[0].mxu0
  %v2292 = vadd.f32 0.0, %v2291
  %v2293 = vpop.f32.mrb[0].mxu0
  %2294 = vmatprep.mubr.f32.mxu0 0.0
  %2295 = vmatmul.mubr.f32.gmra.mrb[0].mxu0 %v2110
  %v2296 = vpop.f32.mrb[0].mxu0
  %v2297 = vadd.f32 0.0, %v2296
  %v2298 = vpop.f32.mrb[0].mxu0
  %2299 = vmatprep.mubr.f32.mxu0 0.0
  %2300 = vmatmul.mubr.f32.gmra.mrb[0].mxu0 %v2111
  %v2301 = vpop.f32.mrb[0].mxu0
  %v2302 = vadd.f32 0.0, %v2301
  %v2303 = vpop.f32.mrb[0].mxu0
  %2304 = vmatprep.mubr.f32.mxu0 0.0
  %2305 = vmatmul.mubr.f32.gmra.mrb[0].mxu0 %v2112
  %v2306 = vpop.f32.mrb[0].mxu0
  %v2307 = vadd.f32 0.0, %v2306
  %v2308 = vpop.f32.mrb[0].mxu0
  %2309 = vmatprep.mubr.f32.mxu0 0.0
  %2310 = vmatmul.mubr.f32.gmra.mrb[0].mxu0 %v2113
  %v2311 = vpop.f32.mrb[0].mxu0
  %v2312 = vadd.f32 0.0, %v2311
  %v2313 = vpop.f32.mrb[0].mxu0
  %2314 = vmatprep.mubr.f32.mxu0 0.0
  %2315 = vmatmul.mubr.f32.gmra.mrb[0].mxu0 %v2114
  %v2316 = vpop.f32.mrb[0].mxu0
  %v2317 = vadd.f32 0.0, %v2316
  %v2318 = vpop.f32.mrb[0].mxu0
  %2319 = vmatprep.mubr.f32.mxu0 0.0
  %2320 = vmatmul.mubr.f32.gmra.mrb[0].mxu0 %v2115
  %v2321 = vpop.f32.mrb[0].mxu0
  %v2322 = vadd.f32 0.0, %v2321
  %v2323 = vpop.f32.mrb[0].mxu0
  %2324 = vmatprep.mubr.f32.mxu0 0.0
  %2325 = vmatmul.mubr.f32.gmra.mrb[0].mxu0 %v2116
  %v2326 = vpop.f32.mrb[0].mxu0
  %v2327 = vadd.f32 0.0, %v2326
  %v2328 = vpop.f32.mrb[0].mxu0
  %2329 = vmatprep.mubr.f32.mxu0 0.0
  %2330 = vmatmul.mubr.f32.gmra.mrb[0].mxu0 %v2117
  %v2331 = vpop.f32.mrb[0].mxu0
  %v2332 = vadd.f32 0.0, %v2331
  %v2333 = vpop.f32.mrb[0].mxu0
  %2334 = vmatprep.mubr.f32.mxu0 0.0
  %2335 = vmatmul.mubr.f32.gmra.mrb[0].mxu0 %v2118
  %v2336 = vpop.f32.mrb[0].mxu0
  %v2337 = vadd.f32 0.0, %v2336
  %v2338 = vpop.f32.mrb[0].mxu0
  %2339 = vmatprep.mubr.f32.mxu0 0.0
  %2340 = vmatmul.mubr.f32.gmra.mrb[0].mxu0 %v2119
  %v2341 = vpop.f32.mrb[0].mxu0
  %v2342 = vadd.f32 0.0, %v2341
  %v2343 = vpop.f32.mrb[0].mxu0
  %2344 = vmatprep.mubr.f32.mxu0 0.0
  %2345 = vmatmul.mubr.f32.gmra.mrb[0].mxu0 %v2120
  %v2346 = vpop.f32.mrb[0].mxu0
  %v2347 = vadd.f32 0.0, %v2346
  %v2348 = vpop.f32.mrb[0].mxu0
  %2349 = vmatprep.mubr.f32.mxu0 0.0
  %2350 = vmatmul.mubr.f32.gmra.mrb[0].mxu0 %v2121
  %v2351 = vpop.f32.mrb[0].mxu0
  %v2352 = vadd.f32 0.0, %v2351
  %v2353 = vpop.f32.mrb[0].mxu0
  %2354 = vmatprep.mubr.f32.mxu0 0.0
  %2355 = vmatmul.mubr.f32.gmra.mrb[0].mxu0 %v2122
  %v2356 = vpop.f32.mrb[0].mxu0
  %v2357 = vadd.f32 0.0, %v2356
  %v2358 = vpop.f32.mrb[0].mxu0
  %2359 = vmatprep.mubr.f32.mxu0 0.0
  %2360 = vmatmul.mubr.f32.gmra.mrb[0].mxu0 %v2123
  %v2361 = vpop.f32.mrb[0].mxu0
  %v2362 = vadd.f32 0.0, %v2361
  %v2363 = vpop.f32.mrb[0].mxu0
  %2364 = vmatprep.mubr.f32.mxu0 0.0
  %2365 = vmatmul.mubr.f32.gmra.mrb[0].mxu0 %v2124
  %v2366 = vpop.f32.mrb[0].mxu0
  %v2367 = vadd.f32 0.0, %v2366
  %v2368 = vpop.f32.mrb[0].mxu0
  %2369 = vmatprep.mubr.f32.mxu0 0.0
  %2370 = vmatmul.mubr.f32.gmra.mrb[0].mxu0 %v2125
  %v2371 = vpop.f32.mrb[0].mxu0
  %v2372 = vadd.f32 0.0, %v2371
  %v2373 = vpop.f32.mrb[0].mxu0
  %2374 = vmatprep.mubr.f32.mxu0 0.0
  %2375 = vmatmul.mubr.f32.gmra.mrb[0].mxu0 %v2126
  %v2376 = vpop.f32.mrb[0].mxu0
  %v2377 = vadd.f32 0.0, %v2376
  %v2378 = vpop.f32.mrb[0].mxu0
  %2379 = vmatprep.mubr.f32.mxu0 0.0
  %2380 = vmatmul.mubr.f32.gmra.mrb[0].mxu0 %v2127
  %v2381 = vpop.f32.mrb[0].mxu0
  %v2382 = vadd.f32 0.0, %v2381
  %v2383 = vpop.f32.mrb[0].mxu0
  %2384 = vmatprep.mubr.f32.mxu0 0.0
  %2385 = vmatmul.mubr.f32.gmra.mrb[0].mxu0 %v2128
  %v2386 = vpop.f32.mrb[0].mxu0
  %v2387 = vadd.f32 0.0, %v2386
  %v2388 = vpop.f32.mrb[0].mxu0
  %2389 = vmatprep.mubr.f32.mxu0 0.0
  %2390 = vmatmul.mubr.f32.gmra.mrb[0].mxu0 %v2129
  %v2391 = vpop.f32.mrb[0].mxu0
  %v2392 = vadd.f32 0.0, %v2391
  %v2393 = vpop.f32.mrb[0].mxu0
  %2394 = vmatprep.mubr.f32.mxu0 0.0
  %2395 = vmatmul.mubr.f32.gmra.mrb[0].mxu0 %v2130
  %v2396 = vpop.f32.mrb[0].mxu0
  %v2397 = vadd.f32 0.0, %v2396
  %v2398 = vpop.f32.mrb[0].mxu0
  %2399 = vmatprep.mubr.f32.mxu0 0.0
  %2400 = vmatmul.mubr.f32.gmra.mrb[0].mxu0 %v2131
  %v2401 = vpop.f32.mrb[0].mxu0
  %v2402 = vadd.f32 0.0, %v2401
  %v2403 = vpop.f32.mrb[0].mxu0
  %2404 = vmatprep.mubr.f32.mxu0 0.0
  %2405 = vmatmul.mubr.f32.gmra.mrb[0].mxu0 %v2132
  %v2406 = vpop.f32.mrb[0].mxu0
  %v2407 = vadd.f32 0.0, %v2406
  %v2408 = vpop.f32.mrb[0].mxu0
  %2409 = vmatprep.mubr.f32.mxu0 0.0
  %2410 = vmatmul.mubr.f32.gmra.mrb[0].mxu0 %v2133
  %v2411 = vpop.f32.mrb[0].mxu0
  %v2412 = vadd.f32 0.0, %v2411
  %v2413 = vpop.f32.mrb[0].mxu0
  %2414 = vmatprep.mubr.f32.mxu0 0.0
  %2415 = vmatmul.mubr.f32.gmra.mrb[0].mxu0 %v2134
  %v2416 = vpop.f32.mrb[0].mxu0
  %v2417 = vadd.f32 0.0, %v2416
  %v2418 = vpop.f32.mrb[0].mxu0
  %2419 = vmatprep.mubr.f32.mxu0 0.0
  %2420 = vmatmul.mubr.f32.gmra.mrb[0].mxu0 %v2135
  %v2421 = vpop.f32.mrb[0].mxu0
  %v2422 = vadd.f32 0.0, %v2421
  %v2423 = vpop.f32.mrb[0].mxu0
  %2424 = vmatprep.mubr.f32.mxu0 0.0
  %2425 = vmatmul.mubr.f32.gmra.mrb[0].mxu0 %v2136
  %v2426 = vpop.f32.mrb[0].mxu0
  %v2427 = vadd.f32 0.0, %v2426
  %v2428 = vpop.f32.mrb[0].mxu0
  %2429 = vmatprep.mubr.f32.mxu0 0.0
  %2430 = vmatmul.mubr.f32.gmra.mrb[0].mxu0 %v2137
  %v2431 = vpop.f32.mrb[0].mxu0
  %v2432 = vadd.f32 0.0, %v2431
  %v2433 = vpop.f32.mrb[0].mxu0
  %2434 = vmatprep.mubr.f32.mxu0 0.0
  %2435 = vmatmul.mubr.f32.gmra.mrb[0].mxu0 %v2138
  %v2436 = vpop.f32.mrb[0].mxu0
  %v2437 = vadd.f32 0.0, %v2436
  %v2438 = vpop.f32.mrb[0].mxu0
  %2439 = vmatprep.mubr.f32.mxu0 0.0
  %2440 = vmatmul.mubr.f32.gmra.mrb[0].mxu0 %v2139
  %v2441 = vpop.f32.mrb[0].mxu0
  %v2442 = vadd.f32 0.0, %v2441
  %v2443 = vpop.f32.mrb[0].mxu0
  %2444 = vmatprep.mubr.f32.mxu0 0.0
  %2445 = vmatmul.mubr.f32.gmra.mrb[0].mxu0 %v2140
  %v2446 = vpop.f32.mrb[0].mxu0
  %v2447 = vadd.f32 0.0, %v2446
  %v2448 = vpop.f32.mrb[0].mxu0
  %2449 = vmatprep.mubr.f32.mxu0 0.0
  %2450 = vmatmul.mubr.f32.gmra.mrb[0].mxu0 %v2141
  %v2451 = vpop.f32.mrb[0].mxu0
  %v2452 = vadd.f32 0.0, %v2451
  %v2453 = vpop.f32.mrb[0].mxu0
  %2454 = vmatprep.mubr.f32.mxu0 0.0
  %2455 = vmatmul.mubr.f32.gmra.mrb[0].mxu0 %v2142
  %v2456 = vpop.f32.mrb[0].mxu0
  %v2457 = vadd.f32 0.0, %v2456
  %v2458 = vpop.f32.mrb[0].mxu0
  %2459 = vmatprep.mubr.f32.mxu0 0.0
  %2460 = vmatmul.mubr.f32.gmra.mrb[0].mxu0 %v2143
  %v2461 = vpop.f32.mrb[0].mxu0
  %v2462 = vadd.f32 0.0, %v2461
  %v2463 = vpop.f32.mrb[0].mxu0
  %2464 = vmatprep.mubr.f32.mxu0 0.0
  %2465 = vmatmul.mubr.f32.gmra.mrb[0].mxu0 %v2144
  %v2466 = vpop.f32.mrb[0].mxu0
  %v2467 = vadd.f32 0.0, %v2466
  %v2468 = vpop.f32.mrb[0].mxu0
  %2469 = vmatprep.mubr.f32.mxu0 0.0
  %2470 = vmatmul.mubr.f32.gmra.mrb[0].mxu0 %v2145
  %v2471 = vpop.f32.mrb[0].mxu0
  %v2472 = vadd.f32 0.0, %v2471
  %v2473 = vpop.f32.mrb[0].mxu0
  %2474 = vmatprep.mubr.f32.mxu0 0.0
  %2475 = vmatmul.mubr.f32.gmra.mrb[0].mxu0 %v2146
  %v2476 = vpop.f32.mrb[0].mxu0
  %v2477 = vadd.f32 0.0, %v2476
  %v2478 = vpop.f32.mrb[0].mxu0
  %2479 = vmatprep.mubr.f32.mxu0 0.0
  %2480 = vmatmul.mubr.f32.gmra.mrb[0].mxu0 %v2147
  %v2481 = vpop.f32.mrb[0].mxu0
  %v2482 = vadd.f32 0.0, %v2481
  %v2483 = vpop.f32.mrb[0].mxu0
  %2484 = vmatprep.mubr.f32.mxu0 0.0
  %2485 = vmatmul.mubr.f32.gmra.mrb[0].mxu0 %v2148
  %v2486 = vpop.f32.mrb[0].mxu0
  %v2487 = vadd.f32 0.0, %v2486
  %v2488 = vpop.f32.mrb[0].mxu0
  %2489 = vmatprep.mubr.f32.mxu0 0.0
  %2490 = vmatmul.mubr.f32.gmra.mrb[0].mxu0 %v2149
  %v2491 = vpop.f32.mrb[0].mxu0
  %v2492 = vadd.f32 0.0, %v2491
  %v2493 = vpop.f32.mrb[0].mxu0
  %2494 = vmatprep.mubr.f32.mxu0 0.0
  %2495 = vmatmul.mubr.f32.gmra.mrb[0].mxu0 %v2150
  %v2496 = vpop.f32.mrb[0].mxu0
  %v2497 = vadd.f32 0.0, %v2496
  %v2498 = vpop.f32.mrb[0].mxu0
  %2499 = vmatprep.mubr.f32.mxu0 0.0
  %2500 = vmatmul.mubr.f32.gmra.mrb[0].mxu0 %v2151
  %v2501 = vpop.f32.mrb[0].mxu0
  %v2502 = vadd.f32 0.0, %v2501
  %v2503 = vpop.f32.mrb[0].mxu0
  %2504 = vmatprep.mubr.f32.mxu0 0.0
  %2505 = vmatmul.mubr.f32.gmra.mrb[0].mxu0 %v2152
  %v2506 = vpop.f32.mrb[0].mxu0
  %v2507 = vadd.f32 0.0, %v2506
  %v2508 = vpop.f32.mrb[0].mxu0
  %2509 = vmatprep.mubr.f32.mxu0 0.0
  %2510 = vmatmul.mubr.f32.gmra.mrb[0].mxu0 %v2153
  %v2511 = vpop.f32.mrb[0].mxu0
  %v2512 = vadd.f32 0.0, %v2511
  %v2513 = vpop.f32.mrb[0].mxu0
  %2514 = vmatprep.mubr.f32.mxu0 0.0
  %2515 = vmatmul.mubr.f32.gmra.mrb[0].mxu0 %v2154
  %v2516 = vpop.f32.mrb[0].mxu0
  %v2517 = vadd.f32 0.0, %v2516
  %v2518 = vpop.f32.mrb[0].mxu0
  %2519 = vmatprep.mubr.f32.mxu0 0.0
  %2520 = vmatmul.mubr.f32.gmra.mrb[0].mxu0 %v2155
  %v2521 = vpop.f32.mrb[0].mxu0
  %v2522 = vadd.f32 0.0, %v2521
  %v2523 = vpop.f32.mrb[0].mxu0
  %2524 = vmatprep.mubr.f32.mxu0 0.0
  %2525 = vmatmul.mubr.f32.gmra.mrb[0].mxu0 %v2156
  %v2526 = vpop.f32.mrb[0].mxu0
  %v2527 = vadd.f32 0.0, %v2526
  %v2528 = vpop.f32.mrb[0].mxu0
  %2529 = vmatprep.mubr.f32.mxu0 0.0
  %2530 = vmatmul.mubr.f32.gmra.mrb[0].mxu0 %v2157
  %v2531 = vpop.f32.mrb[0].mxu0
  %v2532 = vadd.f32 0.0, %v2531
  %v2533 = vpop.f32.mrb[0].mxu0
  %2534 = vmatprep.mubr.f32.mxu0 0.0
  %2535 = vmatmul.mubr.f32.gmra.mrb[0].mxu0 %v2158
  %v2536 = vpop.f32.mrb[0].mxu0
  %v2537 = vadd.f32 0.0, %v2536
  %v2538 = vpop.f32.mrb[0].mxu0
  %2539 = vmatprep.mubr.f32.mxu0 0.0
  %2540 = vmatmul.mubr.f32.gmra.mrb[0].mxu0 %v2159
  %v2541 = vpop.f32.mrb[0].mxu0
  %v2542 = vadd.f32 0.0, %v2541
  %v2543 = vpop.f32.mrb[0].mxu0
  %2544 = vdwg.mxu0
  %2545 = vst.msk [vmem:[%s4] sm:$0xff] %vm102, %v2227
  %2546 = vst.msk [vmem:[%s4 + $0x8] sm:$0xff] %vm102, %v2232
  %2547 = vst.msk [vmem:[%s4 + $0x10] sm:$0xff] %vm102, %v2237
  %2548 = vst.msk [vmem:[%s4 + $0x18] sm:$0xff] %vm102, %v2242
  %2549 = vst.msk [vmem:[%s4 + $0x20] sm:$0xff] %vm102, %v2247
  %2550 = vst.msk [vmem:[%s4 + $0x28] sm:$0xff] %vm102, %v2252
  %2551 = vst.msk [vmem:[%s4 + $0x30] sm:$0xff] %vm102, %v2257
  %2552 = vst.msk [vmem:[%s4 + $0x38] sm:$0xff] %vm102, %v2262
  %2553 = vst.msk [vmem:[%s4 + $0x40] sm:$0xff] %vm102, %v2267
  %2554 = vst.msk [vmem:[%s4 + $0x48] sm:$0xff] %vm102, %v2272
  %2555 = vst.msk [vmem:[%s4 + $0x50] sm:$0xff] %vm102, %v2277
  %2556 = vst.msk [vmem:[%s4 + $0x58] sm:$0xff] %vm102, %v2282
  %2557 = vst.msk [vmem:[%s4 + $0x60] sm:$0xff] %vm102, %v2287
  %2558 = vst.msk [vmem:[%s4 + $0x68] sm:$0xff] %vm102, %v2292
  %2559 = vst.msk [vmem:[%s4 + $0x70] sm:$0xff] %vm102, %v2297
  %2560 = vst.msk [vmem:[%s4 + $0x78] sm:$0xff] %vm102, %v2302
  %2561 = vst.msk [vmem:[%s4 + $0x80] sm:$0xff] %vm102, %v2307
  %2562 = vst.msk [vmem:[%s4 + $0x88] sm:$0xff] %vm102, %v2312
  %2563 = vst.msk [vmem:[%s4 + $0x90] sm:$0xff] %vm102, %v2317
  %2564 = vst.msk [vmem:[%s4 + $0x98] sm:$0xff] %vm102, %v2322
  %2565 = vst.msk [vmem:[%s4 + $0xa0] sm:$0xff] %vm102, %v2327
  %2566 = vst.msk [vmem:[%s4 + $0xa8] sm:$0xff] %vm102, %v2332
  %2567 = vst.msk [vmem:[%s4 + $0xb0] sm:$0xff] %vm102, %v2337
  %2568 = vst.msk [vmem:[%s4 + $0xb8] sm:$0xff] %vm102, %v2342
  %2569 = vst.msk [vmem:[%s4 + $0xc0] sm:$0xff] %vm102, %v2347
  %2570 = vst.msk [vmem:[%s4 + $0xc8] sm:$0xff] %vm102, %v2352
  %2571 = vst.msk [vmem:[%s4 + $0xd0] sm:$0xff] %vm102, %v2357
  %2572 = vst.msk [vmem:[%s4 + $0xd8] sm:$0xff] %vm102, %v2362
  %2573 = vst.msk [vmem:[%s4 + $0xe0] sm:$0xff] %vm102, %v2367
  %2574 = vst.msk [vmem:[%s4 + $0xe8] sm:$0xff] %vm102, %v2372
  %2575 = vst.msk [vmem:[%s4 + $0xf0] sm:$0xff] %vm102, %v2377
  %2576 = vst.msk [vmem:[%s4 + $0xf8] sm:$0xff] %vm102, %v2382
  %2577 = vst.msk [vmem:[%s4 + $0x100] sm:$0xff] %vm102, %v2387
  %2578 = vst.msk [vmem:[%s4 + $0x108] sm:$0xff] %vm102, %v2392
  %2579 = vst.msk [vmem:[%s4 + $0x110] sm:$0xff] %vm102, %v2397
  %2580 = vst.msk [vmem:[%s4 + $0x118] sm:$0xff] %vm102, %v2402
  %2581 = vst.msk [vmem:[%s4 + $0x120] sm:$0xff] %vm102, %v2407
  %2582 = vst.msk [vmem:[%s4 + $0x128] sm:$0xff] %vm102, %v2412
  %2583 = vst.msk [vmem:[%s4 + $0x130] sm:$0xff] %vm102, %v2417
  %2584 = vst.msk [vmem:[%s4 + $0x138] sm:$0xff] %vm102, %v2422
  %2585 = vst.msk [vmem:[%s4 + $0x140] sm:$0xff] %vm102, %v2427
  %2586 = vst.msk [vmem:[%s4 + $0x148] sm:$0xff] %vm102, %v2432
  %2587 = vst.msk [vmem:[%s4 + $0x150] sm:$0xff] %vm102, %v2437
  %2588 = vst.msk [vmem:[%s4 + $0x158] sm:$0xff] %vm102, %v2442
  %2589 = vst.msk [vmem:[%s4 + $0x160] sm:$0xff] %vm102, %v2447
  %2590 = vst.msk [vmem:[%s4 + $0x168] sm:$0xff] %vm102, %v2452
  %2591 = vst.msk [vmem:[%s4 + $0x170] sm:$0xff] %vm102, %v2457
  %2592 = vst.msk [vmem:[%s4 + $0x178] sm:$0xff] %vm102, %v2462
  %2593 = vst.msk [vmem:[%s4 + $0x180] sm:$0xff] %vm102, %v2467
  %2594 = vst.msk [vmem:[%s4 + $0x188] sm:$0xff] %vm102, %v2472
  %2595 = vst.msk [vmem:[%s4 + $0x190] sm:$0xff] %vm102, %v2477
  %2596 = vst.msk [vmem:[%s4 + $0x198] sm:$0xff] %vm102, %v2482
  %2597 = vst.msk [vmem:[%s4 + $0x1a0] sm:$0xff] %vm102, %v2487
  %2598 = vst.msk [vmem:[%s4 + $0x1a8] sm:$0xff] %vm102, %v2492
  %2599 = vst.msk [vmem:[%s4 + $0x1b0] sm:$0xff] %vm102, %v2497
  %2600 = vst.msk [vmem:[%s4 + $0x1b8] sm:$0xff] %vm102, %v2502
  %2601 = vst.msk [vmem:[%s4 + $0x1c0] sm:$0xff] %vm102, %v2507
  %2602 = vst.msk [vmem:[%s4 + $0x1c8] sm:$0xff] %vm102, %v2512
  %2603 = vst.msk [vmem:[%s4 + $0x1d0] sm:$0xff] %vm102, %v2517
  %2604 = vst.msk [vmem:[%s4 + $0x1d8] sm:$0xff] %vm102, %v2522
  %2605 = vst.msk [vmem:[%s4 + $0x1e0] sm:$0xff] %vm102, %v2527
  %2606 = vst.msk [vmem:[%s4 + $0x1e8] sm:$0xff] %vm102, %v2532
  %2607 = vst.msk [vmem:[%s4 + $0x1f0] sm:$0xff] %vm102, %v2537
  %2608 = vst.msk [vmem:[%s4 + $0x1f8] sm:$0xff] %vm102, %v2542
  %v2609 = vcvt.s32.f32 %v943
  %2610 = vmatprep.subr.mxu0 0.0
  %2611 = vmatpush1.xpose.msra.mxu0 %v2096
  %2612 = vmatprep.subr.mxu0 0.0
  %2613 = vmatpush1.xpose.msra.mxu0 %v2097
  %2614 = vmatprep.subr.mxu0 0.0
  %2615 = vmatpush1.xpose.msra.mxu0 %v2098
  %2616 = vmatprep.subr.mxu0 0.0
  %2617 = vmatpush1.xpose.msra.mxu0 %v2099
  %2618 = vmatprep.subr.mxu0 0.0
  %2619 = vmatpush1.xpose.msra.mxu0 %v2100
  %2620 = vmatprep.subr.mxu0 0.0
  %2621 = vmatpush1.xpose.msra.mxu0 %v2101
  %2622 = vmatprep.subr.mxu0 0.0
  %2623 = vmatpush1.xpose.msra.mxu0 %v2102
  %2624 = vmatprep.subr.mxu0 0.0
  %2625 = vmatpush1.xpose.msra.mxu0 %v2103
  %2626 = vmatprep.subr.mxu0 0.0
  %2627 = vmatpush1.xpose.msra.mxu0 %v2104
  %2628 = vmatprep.subr.mxu0 0.0
  %2629 = vmatpush1.xpose.msra.mxu0 %v2105
  %2630 = vmatprep.subr.mxu0 0.0
  %2631 = vmatpush1.xpose.msra.mxu0 %v2106
  %2632 = vmatprep.subr.mxu0 0.0
  %2633 = vmatpush1.xpose.msra.mxu0 %v2107
  %2634 = vmatprep.subr.mxu0 0.0
  %2635 = vmatpush1.xpose.msra.mxu0 %v2108
  %2636 = vmatprep.subr.mxu0 0.0
  %2637 = vmatpush1.xpose.msra.mxu0 %v2109
  %2638 = vmatprep.subr.mxu0 0.0
  %2639 = vmatpush1.xpose.msra.mxu0 %v2110
  %2640 = vmatprep.subr.mxu0 0.0
  %2641 = vmatpush1.xpose.msra.mxu0 %v2111
  %2642 = vmatprep.subr.mxu0 0.0
  %2643 = vmatpush1.xpose.msra.mxu0 %v2112
  %2644 = vmatprep.subr.mxu0 0.0
  %2645 = vmatpush1.xpose.msra.mxu0 %v2113
  %2646 = vmatprep.subr.mxu0 0.0
  %2647 = vmatpush1.xpose.msra.mxu0 %v2114
  %2648 = vmatprep.subr.mxu0 0.0
  %2649 = vmatpush1.xpose.msra.mxu0 %v2115
  %2650 = vmatprep.subr.mxu0 0.0
  %2651 = vmatpush1.xpose.msra.mxu0 %v2116
  %2652 = vmatprep.subr.mxu0 0.0
  %2653 = vmatpush1.xpose.msra.mxu0 %v2117
  %2654 = vmatprep.subr.mxu0 0.0
  %2655 = vmatpush1.xpose.msra.mxu0 %v2118
  %2656 = vmatprep.subr.mxu0 0.0
  %2657 = vmatpush1.xpose.msra.mxu0 %v2119
  %2658 = vmatprep.subr.mxu0 0.0
  %2659 = vmatpush1.xpose.msra.mxu0 %v2120
  %2660 = vmatprep.subr.mxu0 0.0
  %2661 = vmatpush1.xpose.msra.mxu0 %v2121
  %2662 = vmatprep.subr.mxu0 0.0
  %2663 = vmatpush1.xpose.msra.mxu0 %v2122
  %2664 = vmatprep.subr.mxu0 0.0
  %2665 = vmatpush1.xpose.msra.mxu0 %v2123
  %2666 = vmatprep.subr.mxu0 0.0
  %2667 = vmatpush1.xpose.msra.mxu0 %v2124
  %2668 = vmatprep.subr.mxu0 0.0
  %2669 = vmatpush1.xpose.msra.mxu0 %v2125
  %2670 = vmatprep.subr.mxu0 0.0
  %2671 = vmatpush1.xpose.msra.mxu0 %v2126
  %2672 = vmatprep.subr.mxu0 0.0
  %2673 = vmatpush1.xpose.msra.mxu0 %v2127
  %2674 = vmatprep.mubr.f32.mxu0 0.0
  %2675 = vmatmul.mubr.f32.gmra.mrb[0].mxu0 %v2609
  %v2676 = vpop.f32.mrb[0].mxu0
  %v2677 = vadd.f32 0.5, %v2676
  %v2678 = vpop.f32.mrb[0].mxu0
  %v2679 = vadd.f32 0.5, %v2678
  %2680 = vdwg.mxu0
  %2681 = vmatprep.subr.mxu0 0.0
  %2682 = vmatpush1.xpose.msra.mxu0 %v2128
  %2683 = vmatprep.subr.mxu0 0.0
  %2684 = vmatpush1.xpose.msra.mxu0 %v2129
  %2685 = vmatprep.subr.mxu0 0.0
  %2686 = vmatpush1.xpose.msra.mxu0 %v2130
  %2687 = vmatprep.subr.mxu0 0.0
  %2688 = vmatpush1.xpose.msra.mxu0 %v2131
  %2689 = vmatprep.subr.mxu0 0.0
  %2690 = vmatpush1.xpose.msra.mxu0 %v2132
  %2691 = vmatprep.subr.mxu0 0.0
  %2692 = vmatpush1.xpose.msra.mxu0 %v2133
  %2693 = vmatprep.subr.mxu0 0.0
  %2694 = vmatpush1.xpose.msra.mxu0 %v2134
  %2695 = vmatprep.subr.mxu0 0.0
  %2696 = vmatpush1.xpose.msra.mxu0 %v2135
  %2697 = vmatprep.subr.mxu0 0.0
  %2698 = vmatpush1.xpose.msra.mxu0 %v2136
  %2699 = vmatprep.subr.mxu0 0.0
  %2700 = vmatpush1.xpose.msra.mxu0 %v2137
  %2701 = vmatprep.subr.mxu0 0.0
  %2702 = vmatpush1.xpose.msra.mxu0 %v2138
  %2703 = vmatprep.subr.mxu0 0.0
  %2704 = vmatpush1.xpose.msra.mxu0 %v2139
  %2705 = vmatprep.subr.mxu0 0.0
  %2706 = vmatpush1.xpose.msra.mxu0 %v2140
  %2707 = vmatprep.subr.mxu0 0.0
  %2708 = vmatpush1.xpose.msra.mxu0 %v2141
  %2709 = vmatprep.subr.mxu0 0.0
  %2710 = vmatpush1.xpose.msra.mxu0 %v2142
  %2711 = vmatprep.subr.mxu0 0.0
  %2712 = vmatpush1.xpose.msra.mxu0 %v2143
  %2713 = vmatprep.subr.mxu0 0.0
  %2714 = vmatpush1.xpose.msra.mxu0 %v2144
  %2715 = vmatprep.subr.mxu0 0.0
  %2716 = vmatpush1.xpose.msra.mxu0 %v2145
  %2717 = vmatprep.subr.mxu0 0.0
  %2718 = vmatpush1.xpose.msra.mxu0 %v2146
  %2719 = vmatprep.subr.mxu0 0.0
  %2720 = vmatpush1.xpose.msra.mxu0 %v2147
  %2721 = vmatprep.subr.mxu0 0.0
  %2722 = vmatpush1.xpose.msra.mxu0 %v2148
  %2723 = vmatprep.subr.mxu0 0.0
  %2724 = vmatpush1.xpose.msra.mxu0 %v2149
  %2725 = vmatprep.subr.mxu0 0.0
  %2726 = vmatpush1.xpose.msra.mxu0 %v2150
  %2727 = vmatprep.subr.mxu0 0.0
  %2728 = vmatpush1.xpose.msra.mxu0 %v2151
  %2729 = vmatprep.subr.mxu0 0.0
  %2730 = vmatpush1.xpose.msra.mxu0 %v2152
  %2731 = vmatprep.subr.mxu0 0.0
  %2732 = vmatpush1.xpose.msra.mxu0 %v2153
  %2733 = vmatprep.subr.mxu0 0.0
  %2734 = vmatpush1.xpose.msra.mxu0 %v2154
  %2735 = vmatprep.subr.mxu0 0.0
  %2736 = vmatpush1.xpose.msra.mxu0 %v2155
  %2737 = vmatprep.subr.mxu0 0.0
  %2738 = vmatpush1.xpose.msra.mxu0 %v2156
  %2739 = vmatprep.subr.mxu0 0.0
  %2740 = vmatpush1.xpose.msra.mxu0 %v2157
  %2741 = vmatprep.subr.mxu0 0.0
  %2742 = vmatpush1.xpose.msra.mxu0 %v2158
  %2743 = vmatprep.subr.mxu0 0.0
  %2744 = vmatpush1.xpose.msra.mxu0 %v2159
  %2745 = vmatprep.mubr.f32.mxu0 0.0
  %2746 = vmatmul.mubr.f32.gmra.mrb[0].mxu0 %v2609
  %v2747 = vpop.f32.mrb[0].mxu0
  %v2748 = vadd.f32 0.5, %v2747
  %v2749 = vpop.f32.mrb[0].mxu0
  %v2750 = vadd.f32 0.5, %v2749
  %2751 = vdwg.mxu0
  %v2752 = vcvt.f32.s32.to.zero.pseudo %v2677
  %v2753 = vcvt.f32.s32.to.zero.pseudo %v2679
  %v2754 = vcvt.f32.s32.to.zero.pseudo %v2748
  %v2755 = vcvt.f32.s32.to.zero.pseudo %v2750
  %v2756 = vcombine.low %v2752, %v2753
  %v2757 = vcombine.low %v2754, %v2755
  %v2759 = vunpack.c.l.s4 1966171168
  %v2760 = vunpack.c.0.s8 %v2759
  %v2761 = vlaneseq
  %v2762 = vshrl.u32 %v2761, 7
  %v2763 = vsub.s32 %v2760, %v2762
  %v2764 = vrot.slane %v2756, %v2763
  %v2766 = vunpack.c.l.s4 1966171168
  %v2767 = vunpack.c.0.s8 %v2766
  %v2768 = vlaneseq
  %v2769 = vshrl.u32 %v2768, 7
  %v2770 = vsub.s32 %v2767, %v2769
  %v2771 = vrot.slane %v2757, %v2770
  %v2772 = vcombine.low %v2764, %v2771
  %v2774 = vunpack.c.l.s4 1966171168
  %v2775 = vunpack.c.0.s8 %v2774
  %v2776 = vlaneseq
  %v2777 = vshrl.u32 %v2776, 7
  %v2778 = vsub.s32 %v2775, %v2777
  %v2779 = vrot.slane %v2772, %v2778
  %v2780 = vlaneseq
  %vm2781 = vcmp.ge.s32.totalorder %v2780, 0
  %vm2782 = vcmp.lt.s32.totalorder %v2780, 512
  %vm2783 = vmand %vm2781, %vm2782
  %2784 = vst.msk [vmem:[%s5] sm:$0xf] %vm2783, %v2779
  %v2785 = vlaneseq
  %v2786 = vshrl.u32 %v2785, 7
  %v2787 = vadd.s32 %v2786, 8
  %v2788 = vadd.s32 %v2786, 16
  %v2789 = vadd.s32 %v2786, 24
  %v2790 = vadd.s32 %v2786, 32
  %v2791 = vadd.s32 %v2786, 40
  %v2792 = vadd.s32 %v2786, 48
  %v2793 = vadd.s32 %v2786, 56
  %v2794 = vadd.s32 %v2786, 64
  %v2795 = vadd.s32 %v2786, 72
  %v2796 = vadd.s32 %v2786, 80
  %v2797 = vadd.s32 %v2786, 88
  %v2798 = vadd.s32 %v2786, 96
  %v2799 = vadd.s32 %v2786, 104
  %v2800 = vadd.s32 %v2786, 112
  %v2801 = vadd.s32 %v2786, 120
  %v2802 = vadd.s32 %v2786, 128
  %v2803 = vadd.s32 %v2786, 136
  %v2804 = vadd.s32 %v2786, 144
  %v2805 = vadd.s32 %v2786, 152
  %v2806 = vadd.s32 %v2786, 160
  %v2807 = vadd.s32 %v2786, 168
  %v2808 = vadd.s32 %v2786, 176
  %v2809 = vadd.s32 %v2786, 184
  %v2810 = vadd.s32 %v2786, 192
  %v2811 = vadd.s32 %v2786, 200
  %v2812 = vadd.s32 %v2786, 208
  %v2813 = vadd.s32 %v2786, 216
  %v2814 = vadd.s32 %v2786, 224
  %v2815 = vadd.s32 %v2786, 232
  %v2816 = vadd.s32 %v2786, 240
  %v2817 = vadd.s32 %v2786, 248
  %v2818 = vadd.s32 %v2786, 256
  %v2819 = vadd.s32 %v2786, 264
  %v2820 = vadd.s32 %v2786, 272
  %v2821 = vadd.s32 %v2786, 280
  %v2822 = vadd.s32 %v2786, 288
  %v2823 = vadd.s32 %v2786, 296
  %v2824 = vadd.s32 %v2786, 304
  %v2825 = vadd.s32 %v2786, 312
  %v2826 = vadd.s32 %v2786, 320
  %v2827 = vadd.s32 %v2786, 328
  %v2828 = vadd.s32 %v2786, 336
  %v2829 = vadd.s32 %v2786, 344
  %v2830 = vadd.s32 %v2786, 352
  %v2831 = vadd.s32 %v2786, 360
  %v2832 = vadd.s32 %v2786, 368
  %v2833 = vadd.s32 %v2786, 376
  %v2834 = vadd.s32 %v2786, 384
  %v2835 = vadd.s32 %v2786, 392
  %v2836 = vadd.s32 %v2786, 400
  %v2837 = vadd.s32 %v2786, 408
  %v2838 = vadd.s32 %v2786, 416
  %v2839 = vadd.s32 %v2786, 424
  %v2840 = vadd.s32 %v2786, 432
  %v2841 = vadd.s32 %v2786, 440
  %v2842 = vadd.s32 %v2786, 448
  %v2843 = vadd.s32 %v2786, 456
  %v2844 = vadd.s32 %v2786, 464
  %v2845 = vadd.s32 %v2786, 472
  %v2846 = vadd.s32 %v2786, 480
  %v2847 = vadd.s32 %v2786, 488
  %v2848 = vadd.s32 %v2786, 496
  %v2849 = vadd.s32 %v2786, 504
  %s2850 = smul.u32 0, 512
  %v2851 = vstv %s2850
  %v2852 = vadd.s32 %v2786, %v2851
  %v2853 = vadd.s32 %v2787, %v2851
  %v2854 = vadd.s32 %v2788, %v2851
  %v2855 = vadd.s32 %v2789, %v2851
  %v2856 = vadd.s32 %v2790, %v2851
  %v2857 = vadd.s32 %v2791, %v2851
  %v2858 = vadd.s32 %v2792, %v2851
  %v2859 = vadd.s32 %v2793, %v2851
  %v2860 = vadd.s32 %v2794, %v2851
  %v2861 = vadd.s32 %v2795, %v2851
  %v2862 = vadd.s32 %v2796, %v2851
  %v2863 = vadd.s32 %v2797, %v2851
  %v2864 = vadd.s32 %v2798, %v2851
  %v2865 = vadd.s32 %v2799, %v2851
  %v2866 = vadd.s32 %v2800, %v2851
  %v2867 = vadd.s32 %v2801, %v2851
  %v2868 = vadd.s32 %v2802, %v2851
  %v2869 = vadd.s32 %v2803, %v2851
  %v2870 = vadd.s32 %v2804, %v2851
  %v2871 = vadd.s32 %v2805, %v2851
  %v2872 = vadd.s32 %v2806, %v2851
  %v2873 = vadd.s32 %v2807, %v2851
  %v2874 = vadd.s32 %v2808, %v2851
  %v2875 = vadd.s32 %v2809, %v2851
  %v2876 = vadd.s32 %v2810, %v2851
  %v2877 = vadd.s32 %v2811, %v2851
  %v2878 = vadd.s32 %v2812, %v2851
  %v2879 = vadd.s32 %v2813, %v2851
  %v2880 = vadd.s32 %v2814, %v2851
  %v2881 = vadd.s32 %v2815, %v2851
  %v2882 = vadd.s32 %v2816, %v2851
  %v2883 = vadd.s32 %v2817, %v2851
  %v2884 = vadd.s32 %v2818, %v2851
  %v2885 = vadd.s32 %v2819, %v2851
  %v2886 = vadd.s32 %v2820, %v2851
  %v2887 = vadd.s32 %v2821, %v2851
  %v2888 = vadd.s32 %v2822, %v2851
  %v2889 = vadd.s32 %v2823, %v2851
  %v2890 = vadd.s32 %v2824, %v2851
  %v2891 = vadd.s32 %v2825, %v2851
  %v2892 = vadd.s32 %v2826, %v2851
  %v2893 = vadd.s32 %v2827, %v2851
  %v2894 = vadd.s32 %v2828, %v2851
  %v2895 = vadd.s32 %v2829, %v2851
  %v2896 = vadd.s32 %v2830, %v2851
  %v2897 = vadd.s32 %v2831, %v2851
  %v2898 = vadd.s32 %v2832, %v2851
  %v2899 = vadd.s32 %v2833, %v2851
  %v2900 = vadd.s32 %v2834, %v2851
  %v2901 = vadd.s32 %v2835, %v2851
  %v2902 = vadd.s32 %v2836, %v2851
  %v2903 = vadd.s32 %v2837, %v2851
  %v2904 = vadd.s32 %v2838, %v2851
  %v2905 = vadd.s32 %v2839, %v2851
  %v2906 = vadd.s32 %v2840, %v2851
  %v2907 = vadd.s32 %v2841, %v2851
  %v2908 = vadd.s32 %v2842, %v2851
  %v2909 = vadd.s32 %v2843, %v2851
  %v2910 = vadd.s32 %v2844, %v2851
  %v2911 = vadd.s32 %v2845, %v2851
  %v2912 = vadd.s32 %v2846, %v2851
  %v2913 = vadd.s32 %v2847, %v2851
  %v2914 = vadd.s32 %v2848, %v2851
  %v2915 = vadd.s32 %v2849, %v2851
  %vm2916 = vcmp.lt.s32.totalorder %v2852, 512
  %vm2917 = vcmp.lt.s32.totalorder %v2853, 512
  %vm2918 = vcmp.lt.s32.totalorder %v2854, 512
  %vm2919 = vcmp.lt.s32.totalorder %v2855, 512
  %vm2920 = vcmp.lt.s32.totalorder %v2856, 512
  %vm2921 = vcmp.lt.s32.totalorder %v2857, 512
  %vm2922 = vcmp.lt.s32.totalorder %v2858, 512
  %vm2923 = vcmp.lt.s32.totalorder %v2859, 512
  %vm2924 = vcmp.lt.s32.totalorder %v2860, 512
  %vm2925 = vcmp.lt.s32.totalorder %v2861, 512
  %vm2926 = vcmp.lt.s32.totalorder %v2862, 512
  %vm2927 = vcmp.lt.s32.totalorder %v2863, 512
  %vm2928 = vcmp.lt.s32.totalorder %v2864, 512
  %vm2929 = vcmp.lt.s32.totalorder %v2865, 512
  %vm2930 = vcmp.lt.s32.totalorder %v2866, 512
  %vm2931 = vcmp.lt.s32.totalorder %v2867, 512
  %vm2932 = vcmp.lt.s32.totalorder %v2868, 512
  %vm2933 = vcmp.lt.s32.totalorder %v2869, 512
  %vm2934 = vcmp.lt.s32.totalorder %v2870, 512
  %vm2935 = vcmp.lt.s32.totalorder %v2871, 512
  %vm2936 = vcmp.lt.s32.totalorder %v2872, 512
  %vm2937 = vcmp.lt.s32.totalorder %v2873, 512
  %vm2938 = vcmp.lt.s32.totalorder %v2874, 512
  %vm2939 = vcmp.lt.s32.totalorder %v2875, 512
  %vm2940 = vcmp.lt.s32.totalorder %v2876, 512
  %vm2941 = vcmp.lt.s32.totalorder %v2877, 512
  %vm2942 = vcmp.lt.s32.totalorder %v2878, 512
  %vm2943 = vcmp.lt.s32.totalorder %v2879, 512
  %vm2944 = vcmp.lt.s32.totalorder %v2880, 512
  %vm2945 = vcmp.lt.s32.totalorder %v2881, 512
  %vm2946 = vcmp.lt.s32.totalorder %v2882, 512
  %vm2947 = vcmp.lt.s32.totalorder %v2883, 512
  %vm2948 = vcmp.lt.s32.totalorder %v2884, 512
  %vm2949 = vcmp.lt.s32.totalorder %v2885, 512
  %vm2950 = vcmp.lt.s32.totalorder %v2886, 512
  %vm2951 = vcmp.lt.s32.totalorder %v2887, 512
  %vm2952 = vcmp.lt.s32.totalorder %v2888, 512
  %vm2953 = vcmp.lt.s32.totalorder %v2889, 512
  %vm2954 = vcmp.lt.s32.totalorder %v2890, 512
  %vm2955 = vcmp.lt.s32.totalorder %v2891, 512
  %vm2956 = vcmp.lt.s32.totalorder %v2892, 512
  %vm2957 = vcmp.lt.s32.totalorder %v2893, 512
  %vm2958 = vcmp.lt.s32.totalorder %v2894, 512
  %vm2959 = vcmp.lt.s32.totalorder %v2895, 512
  %vm2960 = vcmp.lt.s32.totalorder %v2896, 512
  %vm2961 = vcmp.lt.s32.totalorder %v2897, 512
  %vm2962 = vcmp.lt.s32.totalorder %v2898, 512
  %vm2963 = vcmp.lt.s32.totalorder %v2899, 512
  %vm2964 = vcmp.lt.s32.totalorder %v2900, 512
  %vm2965 = vcmp.lt.s32.totalorder %v2901, 512
  %vm2966 = vcmp.lt.s32.totalorder %v2902, 512
  %vm2967 = vcmp.lt.s32.totalorder %v2903, 512
  %vm2968 = vcmp.lt.s32.totalorder %v2904, 512
  %vm2969 = vcmp.lt.s32.totalorder %v2905, 512
  %vm2970 = vcmp.lt.s32.totalorder %v2906, 512
  %vm2971 = vcmp.lt.s32.totalorder %v2907, 512
  %vm2972 = vcmp.lt.s32.totalorder %v2908, 512
  %vm2973 = vcmp.lt.s32.totalorder %v2909, 512
  %vm2974 = vcmp.lt.s32.totalorder %v2910, 512
  %vm2975 = vcmp.lt.s32.totalorder %v2911, 512
  %vm2976 = vcmp.lt.s32.totalorder %v2912, 512
  %vm2977 = vcmp.lt.s32.totalorder %v2913, 512
  %vm2978 = vcmp.lt.s32.totalorder %v2914, 512
  %vm2979 = vcmp.lt.s32.totalorder %v2915, 512
  %v2980 = vsub.f32 %v2227, %v20
  %v2981 = vsub.f32 %v2232, %v21
  %v2982 = vsub.f32 %v2237, %v22
  %v2983 = vsub.f32 %v2242, %v23
  %v2984 = vsub.f32 %v2247, %v24
  %v2985 = vsub.f32 %v2252, %v25
  %v2986 = vsub.f32 %v2257, %v26
  %v2987 = vsub.f32 %v2262, %v27
  %v2988 = vsub.f32 %v2267, %v28
  %v2989 = vsub.f32 %v2272, %v29
  %v2990 = vsub.f32 %v2277, %v30
  %v2991 = vsub.f32 %v2282, %v31
  %v2992 = vsub.f32 %v2287, %v32
  %v2993 = vsub.f32 %v2292, %v33
  %v2994 = vsub.f32 %v2297, %v34
  %v2995 = vsub.f32 %v2302, %v35
  %v2996 = vsub.f32 %v2307, %v36
  %v2997 = vsub.f32 %v2312, %v37
  %v2998 = vsub.f32 %v2317, %v38
  %v2999 = vsub.f32 %v2322, %v39
  %v3000 = vsub.f32 %v2327, %v40
  %v3001 = vsub.f32 %v2332, %v41
  %v3002 = vsub.f32 %v2337, %v42
  %v3003 = vsub.f32 %v2342, %v43
  %v3004 = vsub.f32 %v2347, %v44
  %v3005 = vsub.f32 %v2352, %v45
  %v3006 = vsub.f32 %v2357, %v46
  %v3007 = vsub.f32 %v2362, %v47
  %v3008 = vsub.f32 %v2367, %v48
  %v3009 = vsub.f32 %v2372, %v49
  %v3010 = vsub.f32 %v2377, %v50
  %v3011 = vsub.f32 %v2382, %v51
  %v3012 = vsub.f32 %v2387, %v52
  %v3013 = vsub.f32 %v2392, %v53
  %v3014 = vsub.f32 %v2397, %v54
  %v3015 = vsub.f32 %v2402, %v55
  %v3016 = vsub.f32 %v2407, %v56
  %v3017 = vsub.f32 %v2412, %v57
  %v3018 = vsub.f32 %v2417, %v58
  %v3019 = vsub.f32 %v2422, %v59
  %v3020 = vsub.f32 %v2427, %v60
  %v3021 = vsub.f32 %v2432, %v61
  %v3022 = vsub.f32 %v2437, %v62
  %v3023 = vsub.f32 %v2442, %v63
  %v3024 = vsub.f32 %v2447, %v64
  %v3025 = vsub.f32 %v2452, %v65
  %v3026 = vsub.f32 %v2457, %v66
  %v3027 = vsub.f32 %v2462, %v67
  %v3028 = vsub.f32 %v2467, %v68
  %v3029 = vsub.f32 %v2472, %v69
  %v3030 = vsub.f32 %v2477, %v70
  %v3031 = vsub.f32 %v2482, %v71
  %v3032 = vsub.f32 %v2487, %v72
  %v3033 = vsub.f32 %v2492, %v73
  %v3034 = vsub.f32 %v2497, %v74
  %v3035 = vsub.f32 %v2502, %v75
  %v3036 = vsub.f32 %v2507, %v76
  %v3037 = vsub.f32 %v2512, %v77
  %v3038 = vsub.f32 %v2517, %v78
  %v3039 = vsub.f32 %v2522, %v79
  %v3040 = vsub.f32 %v2527, %v80
  %v3041 = vsub.f32 %v2532, %v81
  %v3042 = vsub.f32 %v2537, %v82
  %v3043 = vsub.f32 %v2542, %v83
  %v3044 = vsel %vm2916, %v2980, 0.0
  %v3045 = vsel %vm2917, %v2981, 0.0
  %v3046 = vsel %vm2918, %v2982, 0.0
  %v3047 = vsel %vm2919, %v2983, 0.0
  %v3048 = vsel %vm2920, %v2984, 0.0
  %v3049 = vsel %vm2921, %v2985, 0.0
  %v3050 = vsel %vm2922, %v2986, 0.0
  %v3051 = vsel %vm2923, %v2987, 0.0
  %v3052 = vsel %vm2924, %v2988, 0.0
  %v3053 = vsel %vm2925, %v2989, 0.0
  %v3054 = vsel %vm2926, %v2990, 0.0
  %v3055 = vsel %vm2927, %v2991, 0.0
  %v3056 = vsel %vm2928, %v2992, 0.0
  %v3057 = vsel %vm2929, %v2993, 0.0
  %v3058 = vsel %vm2930, %v2994, 0.0
  %v3059 = vsel %vm2931, %v2995, 0.0
  %v3060 = vsel %vm2932, %v2996, 0.0
  %v3061 = vsel %vm2933, %v2997, 0.0
  %v3062 = vsel %vm2934, %v2998, 0.0
  %v3063 = vsel %vm2935, %v2999, 0.0
  %v3064 = vsel %vm2936, %v3000, 0.0
  %v3065 = vsel %vm2937, %v3001, 0.0
  %v3066 = vsel %vm2938, %v3002, 0.0
  %v3067 = vsel %vm2939, %v3003, 0.0
  %v3068 = vsel %vm2940, %v3004, 0.0
  %v3069 = vsel %vm2941, %v3005, 0.0
  %v3070 = vsel %vm2942, %v3006, 0.0
  %v3071 = vsel %vm2943, %v3007, 0.0
  %v3072 = vsel %vm2944, %v3008, 0.0
  %v3073 = vsel %vm2945, %v3009, 0.0
  %v3074 = vsel %vm2946, %v3010, 0.0
  %v3075 = vsel %vm2947, %v3011, 0.0
  %v3076 = vsel %vm2948, %v3012, 0.0
  %v3077 = vsel %vm2949, %v3013, 0.0
  %v3078 = vsel %vm2950, %v3014, 0.0
  %v3079 = vsel %vm2951, %v3015, 0.0
  %v3080 = vsel %vm2952, %v3016, 0.0
  %v3081 = vsel %vm2953, %v3017, 0.0
  %v3082 = vsel %vm2954, %v3018, 0.0
  %v3083 = vsel %vm2955, %v3019, 0.0
  %v3084 = vsel %vm2956, %v3020, 0.0
  %v3085 = vsel %vm2957, %v3021, 0.0
  %v3086 = vsel %vm2958, %v3022, 0.0
  %v3087 = vsel %vm2959, %v3023, 0.0
  %v3088 = vsel %vm2960, %v3024, 0.0
  %v3089 = vsel %vm2961, %v3025, 0.0
  %v3090 = vsel %vm2962, %v3026, 0.0
  %v3091 = vsel %vm2963, %v3027, 0.0
  %v3092 = vsel %vm2964, %v3028, 0.0
  %v3093 = vsel %vm2965, %v3029, 0.0
  %v3094 = vsel %vm2966, %v3030, 0.0
  %v3095 = vsel %vm2967, %v3031, 0.0
  %v3096 = vsel %vm2968, %v3032, 0.0
  %v3097 = vsel %vm2969, %v3033, 0.0
  %v3098 = vsel %vm2970, %v3034, 0.0
  %v3099 = vsel %vm2971, %v3035, 0.0
  %v3100 = vsel %vm2972, %v3036, 0.0
  %v3101 = vsel %vm2973, %v3037, 0.0
  %v3102 = vsel %vm2974, %v3038, 0.0
  %v3103 = vsel %vm2975, %v3039, 0.0
  %v3104 = vsel %vm2976, %v3040, 0.0
  %v3105 = vsel %vm2977, %v3041, 0.0
  %v3106 = vsel %vm2978, %v3042, 0.0
  %v3107 = vsel %vm2979, %v3043, 0.0
  %v3108 = vmul.f32 %v3044, %v3044
  %v3109 = vmul.f32 %v3045, %v3045
  %v3110 = vmul.f32 %v3046, %v3046
  %v3111 = vmul.f32 %v3047, %v3047
  %v3112 = vmul.f32 %v3048, %v3048
  %v3113 = vmul.f32 %v3049, %v3049
  %v3114 = vmul.f32 %v3050, %v3050
  %v3115 = vmul.f32 %v3051, %v3051
  %v3116 = vmul.f32 %v3052, %v3052
  %v3117 = vmul.f32 %v3053, %v3053
  %v3118 = vmul.f32 %v3054, %v3054
  %v3119 = vmul.f32 %v3055, %v3055
  %v3120 = vmul.f32 %v3056, %v3056
  %v3121 = vmul.f32 %v3057, %v3057
  %v3122 = vmul.f32 %v3058, %v3058
  %v3123 = vmul.f32 %v3059, %v3059
  %v3124 = vmul.f32 %v3060, %v3060
  %v3125 = vmul.f32 %v3061, %v3061
  %v3126 = vmul.f32 %v3062, %v3062
  %v3127 = vmul.f32 %v3063, %v3063
  %v3128 = vmul.f32 %v3064, %v3064
  %v3129 = vmul.f32 %v3065, %v3065
  %v3130 = vmul.f32 %v3066, %v3066
  %v3131 = vmul.f32 %v3067, %v3067
  %v3132 = vmul.f32 %v3068, %v3068
  %v3133 = vmul.f32 %v3069, %v3069
  %v3134 = vmul.f32 %v3070, %v3070
  %v3135 = vmul.f32 %v3071, %v3071
  %v3136 = vmul.f32 %v3072, %v3072
  %v3137 = vmul.f32 %v3073, %v3073
  %v3138 = vmul.f32 %v3074, %v3074
  %v3139 = vmul.f32 %v3075, %v3075
  %v3140 = vmul.f32 %v3076, %v3076
  %v3141 = vmul.f32 %v3077, %v3077
  %v3142 = vmul.f32 %v3078, %v3078
  %v3143 = vmul.f32 %v3079, %v3079
  %v3144 = vmul.f32 %v3080, %v3080
  %v3145 = vmul.f32 %v3081, %v3081
  %v3146 = vmul.f32 %v3082, %v3082
  %v3147 = vmul.f32 %v3083, %v3083
  %v3148 = vmul.f32 %v3084, %v3084
  %v3149 = vmul.f32 %v3085, %v3085
  %v3150 = vmul.f32 %v3086, %v3086
  %v3151 = vmul.f32 %v3087, %v3087
  %v3152 = vmul.f32 %v3088, %v3088
  %v3153 = vmul.f32 %v3089, %v3089
  %v3154 = vmul.f32 %v3090, %v3090
  %v3155 = vmul.f32 %v3091, %v3091
  %v3156 = vmul.f32 %v3092, %v3092
  %v3157 = vmul.f32 %v3093, %v3093
  %v3158 = vmul.f32 %v3094, %v3094
  %v3159 = vmul.f32 %v3095, %v3095
  %v3160 = vmul.f32 %v3096, %v3096
  %v3161 = vmul.f32 %v3097, %v3097
  %v3162 = vmul.f32 %v3098, %v3098
  %v3163 = vmul.f32 %v3099, %v3099
  %v3164 = vmul.f32 %v3100, %v3100
  %v3165 = vmul.f32 %v3101, %v3101
  %v3166 = vmul.f32 %v3102, %v3102
  %v3167 = vmul.f32 %v3103, %v3103
  %v3168 = vmul.f32 %v3104, %v3104
  %v3169 = vmul.f32 %v3105, %v3105
  %v3170 = vmul.f32 %v3106, %v3106
  %v3171 = vmul.f32 %v3107, %v3107
  %v3172 = vsel %vm102, %v3108, 0.0
  %v3173 = vsel %vm102, %v3109, 0.0
  %v3174 = vadd.f32 %v3172, %v3173
  %v3175 = vsel %vm102, %v3110, 0.0
  %v3176 = vadd.f32 %v3174, %v3175
  %v3177 = vsel %vm102, %v3111, 0.0
  %v3178 = vadd.f32 %v3176, %v3177
  %v3179 = vsel %vm102, %v3112, 0.0
  %v3180 = vadd.f32 %v3178, %v3179
  %v3181 = vsel %vm102, %v3113, 0.0
  %v3182 = vadd.f32 %v3180, %v3181
  %v3183 = vsel %vm102, %v3114, 0.0
  %v3184 = vadd.f32 %v3182, %v3183
  %v3185 = vsel %vm102, %v3115, 0.0
  %v3186 = vadd.f32 %v3184, %v3185
  %v3187 = vsel %vm102, %v3116, 0.0
  %v3188 = vadd.f32 %v3186, %v3187
  %v3189 = vsel %vm102, %v3117, 0.0
  %v3190 = vadd.f32 %v3188, %v3189
  %v3191 = vsel %vm102, %v3118, 0.0
  %v3192 = vadd.f32 %v3190, %v3191
  %v3193 = vsel %vm102, %v3119, 0.0
  %v3194 = vadd.f32 %v3192, %v3193
  %v3195 = vsel %vm102, %v3120, 0.0
  %v3196 = vadd.f32 %v3194, %v3195
  %v3197 = vsel %vm102, %v3121, 0.0
  %v3198 = vadd.f32 %v3196, %v3197
  %v3199 = vsel %vm102, %v3122, 0.0
  %v3200 = vadd.f32 %v3198, %v3199
  %v3201 = vsel %vm102, %v3123, 0.0
  %v3202 = vadd.f32 %v3200, %v3201
  %v3203 = vsel %vm102, %v3124, 0.0
  %v3204 = vadd.f32 %v3202, %v3203
  %v3205 = vsel %vm102, %v3125, 0.0
  %v3206 = vadd.f32 %v3204, %v3205
  %v3207 = vsel %vm102, %v3126, 0.0
  %v3208 = vadd.f32 %v3206, %v3207
  %v3209 = vsel %vm102, %v3127, 0.0
  %v3210 = vadd.f32 %v3208, %v3209
  %v3211 = vsel %vm102, %v3128, 0.0
  %v3212 = vadd.f32 %v3210, %v3211
  %v3213 = vsel %vm102, %v3129, 0.0
  %v3214 = vadd.f32 %v3212, %v3213
  %v3215 = vsel %vm102, %v3130, 0.0
  %v3216 = vadd.f32 %v3214, %v3215
  %v3217 = vsel %vm102, %v3131, 0.0
  %v3218 = vadd.f32 %v3216, %v3217
  %v3219 = vsel %vm102, %v3132, 0.0
  %v3220 = vadd.f32 %v3218, %v3219
  %v3221 = vsel %vm102, %v3133, 0.0
  %v3222 = vadd.f32 %v3220, %v3221
  %v3223 = vsel %vm102, %v3134, 0.0
  %v3224 = vadd.f32 %v3222, %v3223
  %v3225 = vsel %vm102, %v3135, 0.0
  %v3226 = vadd.f32 %v3224, %v3225
  %v3227 = vsel %vm102, %v3136, 0.0
  %v3228 = vadd.f32 %v3226, %v3227
  %v3229 = vsel %vm102, %v3137, 0.0
  %v3230 = vadd.f32 %v3228, %v3229
  %v3231 = vsel %vm102, %v3138, 0.0
  %v3232 = vadd.f32 %v3230, %v3231
  %v3233 = vsel %vm102, %v3139, 0.0
  %v3234 = vadd.f32 %v3232, %v3233
  %v3235 = vsel %vm102, %v3140, 0.0
  %v3236 = vadd.f32 %v3234, %v3235
  %v3237 = vsel %vm102, %v3141, 0.0
  %v3238 = vadd.f32 %v3236, %v3237
  %v3239 = vsel %vm102, %v3142, 0.0
  %v3240 = vadd.f32 %v3238, %v3239
  %v3241 = vsel %vm102, %v3143, 0.0
  %v3242 = vadd.f32 %v3240, %v3241
  %v3243 = vsel %vm102, %v3144, 0.0
  %v3244 = vadd.f32 %v3242, %v3243
  %v3245 = vsel %vm102, %v3145, 0.0
  %v3246 = vadd.f32 %v3244, %v3245
  %v3247 = vsel %vm102, %v3146, 0.0
  %v3248 = vadd.f32 %v3246, %v3247
  %v3249 = vsel %vm102, %v3147, 0.0
  %v3250 = vadd.f32 %v3248, %v3249
  %v3251 = vsel %vm102, %v3148, 0.0
  %v3252 = vadd.f32 %v3250, %v3251
  %v3253 = vsel %vm102, %v3149, 0.0
  %v3254 = vadd.f32 %v3252, %v3253
  %v3255 = vsel %vm102, %v3150, 0.0
  %v3256 = vadd.f32 %v3254, %v3255
  %v3257 = vsel %vm102, %v3151, 0.0
  %v3258 = vadd.f32 %v3256, %v3257
  %v3259 = vsel %vm102, %v3152, 0.0
  %v3260 = vadd.f32 %v3258, %v3259
  %v3261 = vsel %vm102, %v3153, 0.0
  %v3262 = vadd.f32 %v3260, %v3261
  %v3263 = vsel %vm102, %v3154, 0.0
  %v3264 = vadd.f32 %v3262, %v3263
  %v3265 = vsel %vm102, %v3155, 0.0
  %v3266 = vadd.f32 %v3264, %v3265
  %v3267 = vsel %vm102, %v3156, 0.0
  %v3268 = vadd.f32 %v3266, %v3267
  %v3269 = vsel %vm102, %v3157, 0.0
  %v3270 = vadd.f32 %v3268, %v3269
  %v3271 = vsel %vm102, %v3158, 0.0
  %v3272 = vadd.f32 %v3270, %v3271
  %v3273 = vsel %vm102, %v3159, 0.0
  %v3274 = vadd.f32 %v3272, %v3273
  %v3275 = vsel %vm102, %v3160, 0.0
  %v3276 = vadd.f32 %v3274, %v3275
  %v3277 = vsel %vm102, %v3161, 0.0
  %v3278 = vadd.f32 %v3276, %v3277
  %v3279 = vsel %vm102, %v3162, 0.0
  %v3280 = vadd.f32 %v3278, %v3279
  %v3281 = vsel %vm102, %v3163, 0.0
  %v3282 = vadd.f32 %v3280, %v3281
  %v3283 = vsel %vm102, %v3164, 0.0
  %v3284 = vadd.f32 %v3282, %v3283
  %v3285 = vsel %vm102, %v3165, 0.0
  %v3286 = vadd.f32 %v3284, %v3285
  %v3287 = vsel %vm102, %v3166, 0.0
  %v3288 = vadd.f32 %v3286, %v3287
  %v3289 = vsel %vm102, %v3167, 0.0
  %v3290 = vadd.f32 %v3288, %v3289
  %v3291 = vsel %vm102, %v3168, 0.0
  %v3292 = vadd.f32 %v3290, %v3291
  %v3293 = vsel %vm102, %v3169, 0.0
  %v3294 = vadd.f32 %v3292, %v3293
  %v3295 = vsel %vm102, %v3170, 0.0
  %v3296 = vadd.f32 %v3294, %v3295
  %v3297 = vsel %vm102, %v3171, 0.0
  %v3298 = vadd.f32 %v3296, %v3297
  %3299 = vadd.xlane.f32.xlu0 %v3298
  %v3300 = vpop.xlane.xlu0 %3299
  %v3301 = vrot.slane %v3300, 4
  %v3302 = vadd.f32 %v3300, %v3301
  %v3303 = vrot.slane %v3302, 2
  %v3304 = vadd.f32 %v3302, %v3303
  %v3305 = vrot.slane %v3304, 1
  %v3306 = vadd.f32 %v3304, %v3305
  %s3307 = vtos %v3306
  %v3308 = vstv %s3307
  %3309 = vst [vmem:[%s6] sm:$0x1] %v3308
  // Predicated region
  $region18: #{vq_ema_forward.1} parent=0 // pred_check
    _
  $region19: #{vq_ema_forward.1} parent=0 // pred_check_branch
    %3311 = sbr.rel (0) target = $region21
  $region20: #{vq_ema_forward.1} parent=0 // pred_region
    _
  $region21: #{vq_ema_forward.1} parent=0 // pred_fallthru
    _
  // Predicated region
  $region22: #{vq_ema_forward.1} parent=0 // pred_check
    _
  $region23: #{vq_ema_forward.1} parent=0 // pred_check_branch
    %3313 = sbr.rel (0) target = $region25
  $region24: #{vq_ema_forward.1} parent=0 // pred_region
    _
  $region25: #{vq_ema_forward.1} parent=0 // pred_fallthru
    _
  // Predicated region
  $region26: #{vq_ema_forward.1} parent=0 // pred_check
    _
  $region27: #{vq_ema_forward.1} parent=0 // pred_check_branch
    %3315 = sbr.rel (0) target = $region29
  $region28: #{vq_ema_forward.1} parent=0 // pred_region
    _
  $region29: #{vq_ema_forward.1} parent=0 // pred_fallthru
    _
  // Predicated region
  $region30: #{vq_ema_forward.1} parent=0 // pred_check
    _
  $region31: #{vq_ema_forward.1} parent=0 // pred_check_branch
    %3317 = sbr.rel (0) target = $region33
  $region32: #{vq_ema_forward.1} parent=0 // pred_region
    _
  $region33: #{vq_ema_forward.1} parent=0 // pred_fallthru
    _
  // Predicated region
  $region34: #{vq_ema_forward.1} parent=0 // pred_check
    _
  $region35: #{vq_ema_forward.1} parent=0 // pred_check_branch
    %3319 = sbr.rel (0) target = $region37
  $region36: #{vq_ema_forward.1} parent=0 // pred_region
    _
  $region37: #{vq_ema_forward.1} parent=0 // pred_fallthru
    _
  // Predicated region
  $region38: #{vq_ema_forward.1} parent=0 // pred_check
    _
  $region39: #{vq_ema_forward.1} parent=0 // pred_check_branch
    %3321 = sbr.rel (0) target = $region41
  $region40: #{vq_ema_forward.1} parent=0 // pred_region
    _
  $region41: #{vq_ema_forward.1} parent=0 // pred_fallthru
    _

</llo_original>
